<compile_context>
chip_gen: v6e
topology: v6e:2x2x1
jax: 0.10.0
libtpu: 0.0.40
codegen_flags: <defaults>
</compile_context>

<pallas_src>
import functools

import jax
import jax.numpy as jnp
from jax import lax
from jax.experimental import pallas as pl
from jax.experimental.pallas import tpu as pltpu
import numpy as np


def _round_up(x: int, m: int) -> int:
    return ((x + m - 1) // m) * m


def _sigmoid_fast(x):
    # sigmoid(x) == 0.5 * (1 + tanh(0.5 x)) : one EUP op per gate (vs exp + f32 divide)
    return 0.5 * jnp.tanh(0.5 * x) + 0.5


def _pad_gates_cols(w, H, Hp):
    """Pad the 4 gate blocks of the last dim (4H) independently to 4*Hp (zeros)."""
    if Hp == H:
        return w
    parts = [w[..., k * H:(k + 1) * H] for k in range(4)]
    pads = [(0, 0)] * (w.ndim - 1) + [(0, Hp - H)]
    parts = [jnp.pad(p, pads) for p in parts]
    return jnp.concatenate(parts, axis=-1)


def _tpu_info():
    """(num_tensorcores_per_chip, vmem_capacity_bytes) with conservative fallbacks."""
    num_tc = 1
    vmem_cap = 64 << 20          # conservative (v7x per-TC size) if query fails
    try:
        vmem_cap = int(pltpu.get_tpu_info().vmem_capacity_bytes)
    except Exception:
        pass
    try:
        kind = jax.devices()[0].device_kind.lower()
        if "v7" in kind or "tpu7" in kind:
            num_tc = 2           # v7x: 2 TensorCores per chip
    except Exception:
        pass
    return num_tc, vmem_cap


def make_lstm_kernel(n_layers: int, Hp: int, Tc: int, Bb: int,
                     carry_in_regs: bool, gin_bf16: bool):
    """Kernel over grid (batch_block, time_chunk). State is carried in output refs."""
    unroll = True if Tc <= 8 else 4
    f32 = jnp.float32
    bf16 = jnp.bfloat16

    def kernel(maxlen_ref, *refs):
        # inputs
        x_ref, lens_ref, h0_ref, c0_ref = refs[:4]
        w_refs = refs[4:4 + 3 * n_layers]                       # (wih, whh, b) * L
        fcw_ref, fcb_ref = refs[4 + 3 * n_layers: 6 + 3 * n_layers]
        # outputs (hN/cN double as the resident recurrent state)
        hN_ref, cN_ref, out_ref = refs[6 + 3 * n_layers: 9 + 3 * n_layers]
        # scratch
        gin_scr, hseq_scr = refs[9 + 3 * n_layers:]

        t_blk = pl.program_id(1)
        n_tblk = pl.num_programs(1)
        t_base = t_blk * Tc

        @pl.when(t_blk == 0)
        def _():
            hN_ref[...] = h0_ref[...]
            cN_ref[...] = c0_ref[...]

        # Skip chunks entirely past every sequence's length (pure padding).
        @pl.when(t_base < maxlen_ref[0])
        def _process_chunk():
            lens = lens_ref[...]                                # (Bb, 1) int32
            # layer-0 input for this chunk, flattened to one big matmul operand (bf16)
            layer_in = x_ref[...].reshape(Tc * Bb, -1)

            for l in range(n_layers):
                wih = w_refs[3 * l][...]                        # (in_p, 4Hp) bf16
                whh = w_refs[3 * l + 1][...]                    # (Hp, 4Hp) bf16
                bias = w_refs[3 * l + 2][...]                   # (1, 4Hp) f32

                # Hoisted input projection: one large MXU matmul for the whole chunk.
                if gin_bf16:
                    gin_scr[...] = jnp.dot(
                        layer_in, wih, preferred_element_type=f32).astype(bf16)
                else:
                    gin_scr[...] = (jnp.dot(layer_in, wih,
                                            preferred_element_type=f32) + bias)

                is_top = (l == n_layers - 1)

                def step(i, carry, l=l, whh=whh, bias=bias, is_top=is_top):
                    t = t_base + i
                    # shared lane-broadcast of the validity mask (used by h AND c)
                    mask = jnp.broadcast_to(lens > t, (Bb, Hp))

                    if carry_in_regs:
                        h_prev, c_prev, h_prev_bf = carry
                    else:
                        h_prev = hN_ref[l]                      # (Bb, Hp) f32
                        c_prev = cN_ref[l]
                        h_prev_bf = h_prev.astype(bf16)

                    row = pl.multiple_of(i * Bb, Bb)
                    gin = gin_scr[pl.ds(row, Bb), :]
                    if gin_bf16:
                        g = gin.astype(f32) + bias
                    else:
                        g = gin
                    g = g + jnp.dot(h_prev_bf, whh,
                                    preferred_element_type=f32)  # (Bb, 4Hp)

                    i_g = _sigmoid_fast(g[:, 0 * Hp:1 * Hp])
                    f_g = _sigmoid_fast(g[:, 1 * Hp:2 * Hp])
                    g_g = jnp.tanh(g[:, 2 * Hp:3 * Hp])
                    o_g = _sigmoid_fast(g[:, 3 * Hp:4 * Hp])

                    c_new = f_g * c_prev + i_g * g_g
                    h_new = o_g * jnp.tanh(c_new)

                    # packed-sequence semantics: freeze state past each seq's length
                    h_new = jnp.where(mask, h_new, h_prev)
                    c_new = jnp.where(mask, c_new, c_prev)
                    h_new_bf = h_new.astype(bf16)
                    if not is_top:
                        hseq_scr[pl.ds(row, Bb), :] = h_new_bf

                    if carry_in_regs:
                        return (h_new, c_new, h_new_bf)
                    hN_ref[l] = h_new
                    cN_ref[l] = c_new
                    return carry

                if carry_in_regs:
                    h0l = hN_ref[l]
                    c0l = cN_ref[l]
                    hF, cF, _ = lax.fori_loop(
                        0, Tc, step, (h0l, c0l, h0l.astype(bf16)), unroll=unroll)
                    hN_ref[l] = hF            # write state back ONCE per layer/chunk
                    cN_ref[l] = cF
                else:
                    lax.fori_loop(0, Tc, step, 0, unroll=unroll)

                if not is_top:
                    layer_in = hseq_scr[...]                    # (Tc*Bb, Hp) bf16

        @pl.when(t_blk == n_tblk - 1)
        def _finalize():
            h_top = hN_ref[n_layers - 1].astype(bf16)           # (Bb, Hp)
            logits = (jnp.dot(h_top, fcw_ref[...],
                              preferred_element_type=f32) + fcb_ref[...])
            out_ref[...] = _sigmoid_fast(logits)

    return kernel


@functools.partial(jax.jit, static_argnames=("n_layers", "time_block"))
def lstm_forward(x_tokens, x_lens, h0, c0, params, *, n_layers, time_block=16):
    """Pallas-backed forward pass. Returns (outb, (h_n, c_n)) like the torch module."""
    emb_tbl = params["embedding"]
    _, E = emb_tbl.shape
    _, B, H = h0.shape
    O = params["fc_w"].shape[1]
    T = x_tokens.shape[1]

    num_tc, vmem_cap = _tpu_info()

    # padded, MXU/vreg-friendly sizes
    Hp = max(_round_up(H, 128), 128)          # lane-aligned gate slices
    Ep = max(_round_up(E, 128), 128)

    # batch blocking: split across TensorCores only on multi-TC chips (v7x) and only
    # when each block keeps >= 32 rows; splitting on 1-TC chips just doubles the
    # serial recurrence step count.  When split, keep Bb a multiple of 16 (bf16 tiling).
    n_bblk = 2 if (num_tc >= 2 and B >= 64) else 1
    Bp = max(_round_up(B, 16 * n_bblk), 16 * n_bblk)
    Bb = Bp // n_bblk

    Tc = max(1, min(int(time_block), _round_up(T, 8)))
    Tp = _round_up(T, Tc)
    n_tblk = Tp // Tc

    # ---- glue: time-major embedding gather (transpose the small int token matrix,
    #            NOT the (B,T,E) activation), padded & cast to bf16 ----
    tok_tm = jnp.transpose(x_tokens.astype(jnp.int32))          # (T, B)
    tok_tm = jnp.pad(tok_tm, ((0, Tp - T), (0, Bp - B)))
    emb_bf = jnp.pad(emb_tbl.astype(jnp.bfloat16), ((0, 0), (0, Ep - E)))
    x_tm = emb_bf[tok_tm]                                       # (Tp, Bp, Ep) bf16

    lens_i32 = x_lens.astype(jnp.int32)
    maxlen = jnp.max(lens_i32).reshape(1)                       # scalar prefetch (SMEM)
    lens = jnp.pad(lens_i32, (0, Bp - B)).reshape(Bp, 1)
    h0p = jnp.pad(h0.astype(jnp.float32), ((0, 0), (0, Bp - B), (0, Hp - H)))
    c0p = jnp.pad(c0.astype(jnp.float32), ((0, 0), (0, Bp - B), (0, Hp - H)))

    inputs = [x_tm, lens, h0p, c0p]
    weight_bytes = 0
    for l in range(n_layers):
        in_dim = E if l == 0 else H
        in_p = Ep if l == 0 else Hp
        wih = _pad_gates_cols(params[f"w_ih_{l}"], H, Hp)
        wih = jnp.pad(wih, ((0, in_p - in_dim), (0, 0))).astype(jnp.bfloat16)
        whh = _pad_gates_cols(params[f"w_hh_{l}"], H, Hp)
        whh = jnp.pad(whh, ((0, Hp - H), (0, 0))).astype(jnp.bfloat16)
        b = _pad_gates_cols(params[f"b_{l}"], H, Hp).astype(jnp.float32)
        inputs += [wih, whh, b]
        weight_bytes += (in_p + Hp) * 4 * Hp * 2 + 4 * Hp * 4
    fcw = jnp.pad(params["fc_w"], ((0, Hp - H), (0, 0))).astype(jnp.bfloat16)
    fcb = params["fc_b"].astype(jnp.float32)
    inputs += [fcw, fcb]
    weight_bytes += Hp * O * 2 + O * 4

    # Single-buffer the constant-index weights only when double-buffering them would
    # waste meaningful VMEM (large H); the small-shape path keeps the validated default.
    single_buffer_consts = weight_bytes > (4 << 20)
    # bf16 gate-input scratch only where VMEM is tight (v7x) and H is large.
    gin_bf16 = (Hp >= 512) and (vmem_cap <= (80 << 20))
    # carry (h, c) in vregs when the per-layer state is a handful of vregs
    carry_in_regs = (Bb * Hp * 4) <= (64 << 10)

    grid = (n_bblk, n_tblk)

    def _const_spec(shape):
        if single_buffer_consts:
            return pl.BlockSpec(shape, lambda b, t, ml: (0, 0),
                                pipeline_mode=pl.Buffered(1))
        return pl.BlockSpec(shape, lambda b, t, ml: (0, 0))

    in_specs = [
        pl.BlockSpec((Tc, Bb, Ep), lambda b, t, ml: (t, b, 0)),        # x (streamed)
        pl.BlockSpec((Bb, 1), lambda b, t, ml: (b, 0)),                # lens
        pl.BlockSpec((n_layers, Bb, Hp), lambda b, t, ml: (0, b, 0)),  # h0
        pl.BlockSpec((n_layers, Bb, Hp), lambda b, t, ml: (0, b, 0)),  # c0
    ]
    for l in range(n_layers):
        in_p = Ep if l == 0 else Hp
        in_specs += [
            _const_spec((in_p, 4 * Hp)),                               # W_ih (resident)
            _const_spec((Hp, 4 * Hp)),                                 # W_hh (resident)
            _const_spec((1, 4 * Hp)),                                  # bias
        ]
    in_specs += [_const_spec((Hp, O)),                                 # fc_w
                 _const_spec((1, O))]                                  # fc_b

    out_specs = (
        pl.BlockSpec((n_layers, Bb, Hp), lambda b, t, ml: (0, b, 0)),  # h_n (state)
        pl.BlockSpec((n_layers, Bb, Hp), lambda b, t, ml: (0, b, 0)),  # c_n (state)
        pl.BlockSpec((Bb, O), lambda b, t, ml: (b, 0)),                # sigmoid(fc(.))
    )

    # VMEM budget: actual usage (incl. weight buffering), 2x headroom, generation-aware
    # cap: ~96 MiB on 128-MiB v5e/v6e, 48 MiB on 64-MiB v7x.
    wbuf = 1 if single_buffer_consts else 2
    est = 0
    est += 2 * Tc * Bb * Ep * 2                          # x chunk, double-buffered bf16
    est += 2 * (Bb * 128 * 4)                            # lens (lane-padded)
    est += 2 * 2 * (n_layers * Bb * Hp * 4)              # h0, c0
    est += 2 * 2 * (n_layers * Bb * Hp * 4)              # h_n, c_n
    est += 2 * (Bb * 128 * 4)                            # out (lane-padded)
    est += wbuf * weight_bytes                           # weights (+bias, fc)
    est += Tc * Bb * 4 * Hp * (2 if gin_bf16 else 4)     # gin scratch
    est += Tc * Bb * Hp * 2                              # h-seq scratch (bf16)
    cap = min(100 << 20, (vmem_cap * 3) // 4)
    vmem_limit = int(min(cap, max(16 << 20, 2 * est)))

    h_n, c_n, out = pl.pallas_call(
        make_lstm_kernel(n_layers, Hp, Tc, Bb, carry_in_regs, gin_bf16),
        out_shape=(
            jax.ShapeDtypeStruct((n_layers, Bp, Hp), jnp.float32),     # h_n
            jax.ShapeDtypeStruct((n_layers, Bp, Hp), jnp.float32),     # c_n
            jax.ShapeDtypeStruct((Bp, O), jnp.float32),                # sigmoid(fc(.))
        ),
        grid_spec=pltpu.PrefetchScalarGridSpec(
            num_scalar_prefetch=1,                       # max(lens) -> dead-chunk skip
            grid=grid,
            in_specs=in_specs,
            out_specs=out_specs,
            scratch_shapes=[
                pltpu.VMEM((Tc * Bb, 4 * Hp),
                           jnp.bfloat16 if gin_bf16 else jnp.float32),  # hoisted x@W_ih
                pltpu.VMEM((Tc * Bb, Hp), jnp.bfloat16),  # layer h sequence (chunk)
            ],
        ),
        compiler_params=pltpu.CompilerParams(
            dimension_semantics=("parallel", "arbitrary"),
            vmem_limit_bytes=vmem_limit,
        ),
    )(maxlen, *inputs)

    outb = out[:B, 0]                       # output_size == 1 -> (B,)  (torch .squeeze())
    return outb, (h_n[:, :B, :H], c_n[:, :B, :H])


def init_params(key, alphabet_size, embedding_dim, hidden_dim, n_layers, output_size):
    """Deterministic synthetic init matching PyTorch module shapes (pre-transposed)."""
    params = {}
    k = key
    k, sub = jax.random.split(k)
    params["embedding"] = jax.random.normal(sub, (alphabet_size, embedding_dim),
                                            jnp.float32)
    bound = 1.0 / np.sqrt(hidden_dim)
    for l in range(n_layers):
        in_dim = embedding_dim if l == 0 else hidden_dim
        k, k1, k2, k3, k4 = jax.random.split(k, 5)
        params[f"w_ih_{l}"] = jax.random.uniform(k1, (in_dim, 4 * hidden_dim),
                                                 jnp.float32, -bound, bound)
        params[f"w_hh_{l}"] = jax.random.uniform(k2, (hidden_dim, 4 * hidden_dim),
                                                 jnp.float32, -bound, bound)
        b_ih = jax.random.uniform(k3, (1, 4 * hidden_dim), jnp.float32, -bound, bound)
        b_hh = jax.random.uniform(k4, (1, 4 * hidden_dim), jnp.float32, -bound, bound)
        params[f"b_{l}"] = b_ih + b_hh
    k, k1, k2 = jax.random.split(k, 3)
    fc_bound = 1.0 / np.sqrt(hidden_dim)
    params["fc_w"] = jax.random.uniform(k1, (hidden_dim, output_size),
                                        jnp.float32, -fc_bound, fc_bound)
    params["fc_b"] = jax.random.uniform(k2, (1, output_size),
                                        jnp.float32, -fc_bound, fc_bound)
    return params


def lstm_forward_ref(x_tokens, x_lens, h0, c0, params, n_layers):
    """Pure-JAX reference mirroring the kernel numerics (bf16 MXU operands, f32 acc)."""
    bf = jnp.bfloat16
    f32 = jnp.float32
    emb = params["embedding"].astype(bf)[x_tokens]               # (B, T, E) bf16
    B, T, _ = emb.shape
    H = h0.shape[-1]
    h = [h0[l].astype(f32) for l in range(n_layers)]
    c = [c0[l].astype(f32) for l in range(n_layers)]
    for t in range(T):
        mask = (x_lens > t).reshape(B, 1)
        layer_in = emb[:, t, :]
        for l in range(n_layers):
            gates = (jnp.dot(layer_in, params[f"w_ih_{l}"].astype(bf),
                             preferred_element_type=f32)
                     + params[f"b_{l}"]
                     + jnp.dot(h[l].astype(bf), params[f"w_hh_{l}"].astype(bf),
                               preferred_element_type=f32))
            i_g = 1.0 / (1.0 + jnp.exp(-gates[:, 0 * H:1 * H]))
            f_g = 1.0 / (1.0 + jnp.exp(-gates[:, 1 * H:2 * H]))
            g_g = jnp.tanh(gates[:, 2 * H:3 * H])
            o_g = 1.0 / (1.0 + jnp.exp(-gates[:, 3 * H:4 * H]))
            c_new = f_g * c[l] + i_g * g_g
            h_new = o_g * jnp.tanh(c_new)
            h[l] = jnp.where(mask, h_new, h[l])
            c[l] = jnp.where(mask, c_new, c[l])
            layer_in = h[l].astype(bf)
    logits = (jnp.dot(h[-1].astype(bf), params["fc_w"].astype(bf),
                      preferred_element_type=f32) + params["fc_b"])
    out = (1.0 / (1.0 + jnp.exp(-logits)))[:, 0]
    return out, (jnp.stack(h), jnp.stack(c))


if __name__ == "__main__":
    # small shapes consistent with the module's forward
    alphabet_size = 12
    output_size = 1          # required for the .gather(...).squeeze() path to make sense
    embedding_dim = 16
    hidden_dim = 32
    n_layers = 2
    batch = 2
    seq = 8

    key = jax.random.PRNGKey(0)
    params = init_params(key, alphabet_size, embedding_dim, hidden_dim,
                         n_layers, output_size)

    k1, _ = jax.random.split(jax.random.PRNGKey(0), 2)
    x = jax.random.randint(k1, (batch, seq), 0, alphabet_size, jnp.int32)
    # init_hidden(batch)
    h0 = jnp.zeros((n_layers, batch, hidden_dim), jnp.float32)
    c0 = jnp.zeros((n_layers, batch, hidden_dim), jnp.float32)

    # time_block=4 -> two time chunks; the second lengths set ([4, 3]) makes the last
    # chunk a pure-padding chunk, exercising the max-len dead-chunk skip path.
    for lens_np in ([seq, 5], [4, 3]):
        x_lens = jnp.array(lens_np, dtype=jnp.int32)
        outb, (h_n, c_n) = lstm_forward(x, x_lens, h0, c0, params,
                                        n_layers=n_layers, time_block=4)
        jax.block_until_ready((outb, h_n, c_n))

        # correctness check vs pure-JAX reference (same bf16-operand numerics)
        outb_ref, (h_ref, c_ref) = lstm_forward_ref(x, x_lens, h0, c0, params, n_layers)
        np.testing.assert_allclose(np.asarray(outb), np.asarray(outb_ref),
                                   rtol=2e-3, atol=2e-3)
        np.testing.assert_allclose(np.asarray(h_n), np.asarray(h_ref),
                                   rtol=2e-3, atol=2e-3)
        np.testing.assert_allclose(np.asarray(c_n), np.asarray(c_ref),
                                   rtol=2e-3, atol=2e-3)

    print("KERNEL_OK")
</pallas_src>

<mosaic_0001>
module attributes {stable_mosaic.version = 11 : i64} {
  func.func @kernel(%arg0: i32, %arg1: i32, %arg2: memref<1xi32, #tpu.memory_space<smem>>, %arg3: memref<4x16x128xbf16, #tpu.memory_space<vmem>>, %arg4: memref<16x1xi32, #tpu.memory_space<vmem>>, %arg5: memref<2x16x128xf32, #tpu.memory_space<vmem>>, %arg6: memref<2x16x128xf32, #tpu.memory_space<vmem>>, %arg7: memref<128x512xbf16, #tpu.memory_space<vmem>>, %arg8: memref<128x512xbf16, #tpu.memory_space<vmem>>, %arg9: memref<1x512xf32, #tpu.memory_space<vmem>>, %arg10: memref<128x512xbf16, #tpu.memory_space<vmem>>, %arg11: memref<128x512xbf16, #tpu.memory_space<vmem>>, %arg12: memref<1x512xf32, #tpu.memory_space<vmem>>, %arg13: memref<128x1xbf16, #tpu.memory_space<vmem>>, %arg14: memref<1x1xf32, #tpu.memory_space<vmem>>, %arg15: memref<2x16x128xf32, #tpu.memory_space<vmem>>, %arg16: memref<2x16x128xf32, #tpu.memory_space<vmem>>, %arg17: memref<16x1xf32, #tpu.memory_space<vmem>>, %arg18: memref<64x512xf32, #tpu.memory_space<vmem>>, %arg19: memref<64x128xbf16, #tpu.memory_space<vmem>>) attributes {dimension_semantics = [#tpu.dimension_semantics<parallel>, #tpu.dimension_semantics<arbitrary>], iteration_bounds = array<i64: 1, 2>, scalar_prefetch = 1 : i64, scratch_operands = 2 : i64, tpu.core_type = #tpu.core_type<tc>, window_params = [{transform_indices = @transform_0, window_bounds = array<i64: 4, 16, 128>}, {transform_indices = @transform_1, window_bounds = array<i64: 16, 1>}, {transform_indices = @transform_2, window_bounds = array<i64: 2, 16, 128>}, {transform_indices = @transform_3, window_bounds = array<i64: 2, 16, 128>}, {pipeline_mode = #tpu.pipeline_mode<synchronous>, transform_indices = @transform_4, window_bounds = array<i64: 128, 512>}, {pipeline_mode = #tpu.pipeline_mode<synchronous>, transform_indices = @transform_5, window_bounds = array<i64: 128, 512>}, {pipeline_mode = #tpu.pipeline_mode<synchronous>, transform_indices = @transform_6, window_bounds = array<i64: 1, 512>}, {pipeline_mode = #tpu.pipeline_mode<synchronous>, transform_indices = @transform_7, window_bounds = array<i64: 128, 512>}, {pipeline_mode = #tpu.pipeline_mode<synchronous>, transform_indices = @transform_8, window_bounds = array<i64: 128, 512>}, {pipeline_mode = #tpu.pipeline_mode<synchronous>, transform_indices = @transform_9, window_bounds = array<i64: 1, 512>}, {pipeline_mode = #tpu.pipeline_mode<synchronous>, transform_indices = @transform_10, window_bounds = array<i64: 128, 1>}, {pipeline_mode = #tpu.pipeline_mode<synchronous>, transform_indices = @transform_11, window_bounds = array<i64: 1, 1>}, {transform_indices = @transform_12, window_bounds = array<i64: 2, 16, 128>}, {transform_indices = @transform_13, window_bounds = array<i64: 2, 16, 128>}, {transform_indices = @transform_14, window_bounds = array<i64: 16, 1>}]} {
    %c4_i32 = arith.constant 4 : i32
    %0 = arith.muli %arg1, %c4_i32 : i32
    %c0_i32 = arith.constant 0 : i32
    %1 = arith.cmpi eq, %arg1, %c0_i32 : i32
    %2 = arith.extui %1 : i1 to i32
    %c0_i32_0 = arith.constant 0 : i32
    %3 = arith.cmpi ne, %2, %c0_i32_0 : i32
    scf.if %3 {
      %c0_3 = arith.constant 0 : index
      %c0_4 = arith.constant 0 : index
      %c0_5 = arith.constant 0 : index
      %11 = vector.load %arg5[%c0_3, %c0_4, %c0_5] : memref<2x16x128xf32, #tpu.memory_space<vmem>>, vector<2x16x128xf32>
      %c0_6 = arith.constant 0 : index
      %c0_7 = arith.constant 0 : index
      %c0_8 = arith.constant 0 : index
      %12 = vector.load %arg15[%c0_6, %c0_7, %c0_8] : memref<2x16x128xf32, #tpu.memory_space<vmem>>, vector<2x16x128xf32>
      tpu.vector_store %arg15[%c0_6, %c0_7, %c0_8], %11 {strides = array<i32>} : memref<2x16x128xf32, #tpu.memory_space<vmem>>, vector<2x16x128xf32>,
      %c0_9 = arith.constant 0 : index
      %c0_10 = arith.constant 0 : index
      %c0_11 = arith.constant 0 : index
      %13 = vector.load %arg6[%c0_9, %c0_10, %c0_11] : memref<2x16x128xf32, #tpu.memory_space<vmem>>, vector<2x16x128xf32>
      %c0_12 = arith.constant 0 : index
      %c0_13 = arith.constant 0 : index
      %c0_14 = arith.constant 0 : index
      %14 = vector.load %arg16[%c0_12, %c0_13, %c0_14] : memref<2x16x128xf32, #tpu.memory_space<vmem>>, vector<2x16x128xf32>
      tpu.vector_store %arg16[%c0_12, %c0_13, %c0_14], %13 {strides = array<i32>} : memref<2x16x128xf32, #tpu.memory_space<vmem>>, vector<2x16x128xf32>,
    } else {
    }
    %c0 = arith.constant 0 : index
    %4 = memref.load %arg2[%c0] : memref<1xi32, #tpu.memory_space<smem>>
    %5 = arith.cmpi slt, %0, %4 : i32
    %6 = arith.extui %5 : i1 to i32
    %c0_i32_1 = arith.constant 0 : i32
    %7 = arith.cmpi ne, %6, %c0_i32_1 : i32
    scf.if %7 {
      %c0_3 = arith.constant 0 : index
      %c0_4 = arith.constant 0 : index
      %11 = vector.load %arg4[%c0_3, %c0_4] : memref<16x1xi32, #tpu.memory_space<vmem>>, vector<16x1xi32>
      %c0_5 = arith.constant 0 : index
      %c0_6 = arith.constant 0 : index
      %c0_7 = arith.constant 0 : index
      %12 = vector.load %arg3[%c0_5, %c0_6, %c0_7] : memref<4x16x128xbf16, #tpu.memory_space<vmem>>, vector<4x16x128xbf16>
      %13 = vector.shape_cast %12 : vector<4x16x128xbf16> to vector<64x128xbf16>
      %c0_8 = arith.constant 0 : index
      %c0_9 = arith.constant 0 : index
      %14 = vector.load %arg7[%c0_8, %c0_9] : memref<128x512xbf16, #tpu.memory_space<vmem>>, vector<128x512xbf16>
      %c0_10 = arith.constant 0 : index
      %c0_11 = arith.constant 0 : index
      %15 = vector.load %arg8[%c0_10, %c0_11] : memref<128x512xbf16, #tpu.memory_space<vmem>>, vector<128x512xbf16>
      %c0_12 = arith.constant 0 : index
      %c0_13 = arith.constant 0 : index
      %16 = vector.load %arg9[%c0_12, %c0_13] : memref<1x512xf32, #tpu.memory_space<vmem>>, vector<1x512xf32>
      %cst = arith.constant dense<0.000000e+00> : vector<64x512xf32>
      %17 = tpu.matmul %13, %14, %cst {dimension_numbers = #tpu.dot_dimension_numbers<[1], [0], [0], [1], [0, 0, 1, 1], [], []>} : vector<64x128xbf16>, vector<128x512xbf16>, vector<64x512xf32> -> vector<64x512xf32>
      %18 = vector.broadcast %16 : vector<1x512xf32> to vector<64x512xf32>
      %19 = arith.addf %17, %18 : vector<64x512xf32>
      %c0_14 = arith.constant 0 : index
      %c0_15 = arith.constant 0 : index
      %20 = vector.load %arg18[%c0_14, %c0_15] : memref<64x512xf32, #tpu.memory_space<vmem>>, vector<64x512xf32>
      tpu.vector_store %arg18[%c0_14, %c0_15], %19 {strides = array<i32>} : memref<64x512xf32, #tpu.memory_space<vmem>>, vector<64x512xf32>,
      %c0_16 = arith.constant 0 : index
      %c0_17 = arith.constant 0 : index
      %c0_18 = arith.constant 0 : index
      %21 = vector.load %arg15[%c0_16, %c0_17, %c0_18] : memref<2x16x128xf32, #tpu.memory_space<vmem>>, vector<1x16x128xf32>
      %22 = vector.shape_cast %21 : vector<1x16x128xf32> to vector<16x128xf32>
      %c0_19 = arith.constant 0 : index
      %c0_20 = arith.constant 0 : index
      %c0_21 = arith.constant 0 : index
      %23 = vector.load %arg16[%c0_19, %c0_20, %c0_21] : memref<2x16x128xf32, #tpu.memory_space<vmem>>, vector<1x16x128xf32>
      %24 = vector.shape_cast %23 : vector<1x16x128xf32> to vector<16x128xf32>
      %25 = arith.truncf %22 : vector<16x128xf32> to vector<16x128xbf16>
      %c0_i32_22 = arith.constant 0 : i32
      %26 = arith.addi %0, %c0_i32_22 : i32
      %27 = vector.broadcast %26 : i32 to vector<16x1xi32>
      %28 = arith.cmpi sgt, %11, %27 : vector<16x1xi32>
      %29 = vector.shape_cast %28 : vector<16x1xi1> to vector<16x1xi1>
      %30 = vector.broadcast %29 : vector<16x1xi1> to vector<16x128xi1>
      %c16_i32 = arith.constant 16 : i32
      %31 = arith.muli %c0_i32_22, %c16_i32 : i32
      %32 = tpu.assume_multiple %31, 16 : i32
      %33 = arith.index_cast %32 : i32 to index
      %c0_23 = arith.constant 0 : index
      %34 = vector.load %arg18[%33, %c0_23] : memref<64x512xf32, #tpu.memory_space<vmem>>, vector<16x512xf32>
      %cst_24 = arith.constant dense<0.000000e+00> : vector<16x512xf32>
      %35 = tpu.matmul %25, %15, %cst_24 {dimension_numbers = #tpu.dot_dimension_numbers<[1], [0], [0], [1], [0, 0, 1, 1], [], []>} : vector<16x128xbf16>, vector<128x512xbf16>, vector<16x512xf32> -> vector<16x512xf32>
      %36 = arith.addf %34, %35 : vector<16x512xf32>
      %37 = vector.extract_strided_slice %36 {offsets = [0, 0], sizes = [16, 128], strides = [1, 1]} : vector<16x512xf32> to vector<16x128xf32>
      %cst_25 = arith.constant 5.000000e-01 : f32
      %38 = vector.broadcast %cst_25 : f32 to vector<16x128xf32>
      %39 = arith.mulf %38, %37 : vector<16x128xf32>
      %40 = math.tanh %39 : vector<16x128xf32>
      %cst_26 = arith.constant 5.000000e-01 : f32
      %41 = vector.broadcast %cst_26 : f32 to vector<16x128xf32>
      %42 = arith.mulf %41, %40 : vector<16x128xf32>
      %cst_27 = arith.constant 5.000000e-01 : f32
      %43 = vector.broadcast %cst_27 : f32 to vector<16x128xf32>
      %44 = arith.addf %42, %43 : vector<16x128xf32>
      %45 = vector.extract_strided_slice %36 {offsets = [0, 128], sizes = [16, 128], strides = [1, 1]} : vector<16x512xf32> to vector<16x128xf32>
      %cst_28 = arith.constant 5.000000e-01 : f32
      %46 = vector.broadcast %cst_28 : f32 to vector<16x128xf32>
      %47 = arith.mulf %46, %45 : vector<16x128xf32>
      %48 = math.tanh %47 : vector<16x128xf32>
      %cst_29 = arith.constant 5.000000e-01 : f32
      %49 = vector.broadcast %cst_29 : f32 to vector<16x128xf32>
      %50 = arith.mulf %49, %48 : vector<16x128xf32>
      %cst_30 = arith.constant 5.000000e-01 : f32
      %51 = vector.broadcast %cst_30 : f32 to vector<16x128xf32>
      %52 = arith.addf %50, %51 : vector<16x128xf32>
      %53 = vector.extract_strided_slice %36 {offsets = [0, 256], sizes = [16, 128], strides = [1, 1]} : vector<16x512xf32> to vector<16x128xf32>
      %54 = math.tanh %53 : vector<16x128xf32>
      %55 = vector.extract_strided_slice %36 {offsets = [0, 384], sizes = [16, 128], strides = [1, 1]} : vector<16x512xf32> to vector<16x128xf32>
      %cst_31 = arith.constant 5.000000e-01 : f32
      %56 = vector.broadcast %cst_31 : f32 to vector<16x128xf32>
      %57 = arith.mulf %56, %55 : vector<16x128xf32>
      %58 = math.tanh %57 : vector<16x128xf32>
      %cst_32 = arith.constant 5.000000e-01 : f32
      %59 = vector.broadcast %cst_32 : f32 to vector<16x128xf32>
      %60 = arith.mulf %59, %58 : vector<16x128xf32>
      %cst_33 = arith.constant 5.000000e-01 : f32
      %61 = vector.broadcast %cst_33 : f32 to vector<16x128xf32>
      %62 = arith.addf %60, %61 : vector<16x128xf32>
      %63 = arith.mulf %52, %24 : vector<16x128xf32>
      %64 = arith.mulf %44, %54 : vector<16x128xf32>
      %65 = arith.addf %63, %64 : vector<16x128xf32>
      %66 = math.tanh %65 : vector<16x128xf32>
      %67 = arith.mulf %62, %66 : vector<16x128xf32>
      %68 = arith.select %30, %67, %22 : vector<16x128xi1>, vector<16x128xf32>
      %69 = arith.select %30, %65, %24 : vector<16x128xi1>, vector<16x128xf32>
      %70 = arith.truncf %68 : vector<16x128xf32> to vector<16x128xbf16>
      %71 = arith.index_cast %32 : i32 to index
      %c0_34 = arith.constant 0 : index
      %72 = vector.load %arg19[%71, %c0_34] : memref<64x128xbf16, #tpu.memory_space<vmem>>, vector<16x128xbf16>
      tpu.vector_store %arg19[%71, %c0_34], %70 {strides = array<i32>} : memref<64x128xbf16, #tpu.memory_space<vmem>>, vector<16x128xbf16>,
      %c1_i32_35 = arith.constant 1 : i32
      %73 = arith.addi %0, %c1_i32_35 : i32
      %74 = vector.broadcast %73 : i32 to vector<16x1xi32>
      %75 = arith.cmpi sgt, %11, %74 : vector<16x1xi32>
      %76 = vector.shape_cast %75 : vector<16x1xi1> to vector<16x1xi1>
      %77 = vector.broadcast %76 : vector<16x1xi1> to vector<16x128xi1>
      %c16_i32_36 = arith.constant 16 : i32
      %78 = arith.muli %c1_i32_35, %c16_i32_36 : i32
      %79 = tpu.assume_multiple %78, 16 : i32
      %80 = arith.index_cast %79 : i32 to index
      %c0_37 = arith.constant 0 : index
      %81 = vector.load %arg18[%80, %c0_37] : memref<64x512xf32, #tpu.memory_space<vmem>>, vector<16x512xf32>
      %cst_38 = arith.constant dense<0.000000e+00> : vector<16x512xf32>
      %82 = tpu.matmul %70, %15, %cst_38 {dimension_numbers = #tpu.dot_dimension_numbers<[1], [0], [0], [1], [0, 0, 1, 1], [], []>} : vector<16x128xbf16>, vector<128x512xbf16>, vector<16x512xf32> -> vector<16x512xf32>
      %83 = arith.addf %81, %82 : vector<16x512xf32>
      %84 = vector.extract_strided_slice %83 {offsets = [0, 0], sizes = [16, 128], strides = [1, 1]} : vector<16x512xf32> to vector<16x128xf32>
      %cst_39 = arith.constant 5.000000e-01 : f32
      %85 = vector.broadcast %cst_39 : f32 to vector<16x128xf32>
      %86 = arith.mulf %85, %84 : vector<16x128xf32>
      %87 = math.tanh %86 : vector<16x128xf32>
      %cst_40 = arith.constant 5.000000e-01 : f32
      %88 = vector.broadcast %cst_40 : f32 to vector<16x128xf32>
      %89 = arith.mulf %88, %87 : vector<16x128xf32>
      %cst_41 = arith.constant 5.000000e-01 : f32
      %90 = vector.broadcast %cst_41 : f32 to vector<16x128xf32>
      %91 = arith.addf %89, %90 : vector<16x128xf32>
      %92 = vector.extract_strided_slice %83 {offsets = [0, 128], sizes = [16, 128], strides = [1, 1]} : vector<16x512xf32> to vector<16x128xf32>
      %cst_42 = arith.constant 5.000000e-01 : f32
      %93 = vector.broadcast %cst_42 : f32 to vector<16x128xf32>
      %94 = arith.mulf %93, %92 : vector<16x128xf32>
      %95 = math.tanh %94 : vector<16x128xf32>
      %cst_43 = arith.constant 5.000000e-01 : f32
      %96 = vector.broadcast %cst_43 : f32 to vector<16x128xf32>
      %97 = arith.mulf %96, %95 : vector<16x128xf32>
      %cst_44 = arith.constant 5.000000e-01 : f32
      %98 = vector.broadcast %cst_44 : f32 to vector<16x128xf32>
      %99 = arith.addf %97, %98 : vector<16x128xf32>
      %100 = vector.extract_strided_slice %83 {offsets = [0, 256], sizes = [16, 128], strides = [1, 1]} : vector<16x512xf32> to vector<16x128xf32>
      %101 = math.tanh %100 : vector<16x128xf32>
      %102 = vector.extract_strided_slice %83 {offsets = [0, 384], sizes = [16, 128], strides = [1, 1]} : vector<16x512xf32> to vector<16x128xf32>
      %cst_45 = arith.constant 5.000000e-01 : f32
      %103 = vector.broadcast %cst_45 : f32 to vector<16x128xf32>
      %104 = arith.mulf %103, %102 : vector<16x128xf32>
      %105 = math.tanh %104 : vector<16x128xf32>
      %cst_46 = arith.constant 5.000000e-01 : f32
      %106 = vector.broadcast %cst_46 : f32 to vector<16x128xf32>
      %107 = arith.mulf %106, %105 : vector<16x128xf32>
      %cst_47 = arith.constant 5.000000e-01 : f32
      %108 = vector.broadcast %cst_47 : f32 to vector<16x128xf32>
      %109 = arith.addf %107, %108 : vector<16x128xf32>
      %110 = arith.mulf %99, %69 : vector<16x128xf32>
      %111 = arith.mulf %91, %101 : vector<16x128xf32>
      %112 = arith.addf %110, %111 : vector<16x128xf32>
      %113 = math.tanh %112 : vector<16x128xf32>
      %114 = arith.mulf %109, %113 : vector<16x128xf32>
      %115 = arith.select %77, %114, %68 : vector<16x128xi1>, vector<16x128xf32>
      %116 = arith.select %77, %112, %69 : vector<16x128xi1>, vector<16x128xf32>
      %117 = arith.truncf %115 : vector<16x128xf32> to vector<16x128xbf16>
      %118 = arith.index_cast %79 : i32 to index
      %c0_48 = arith.constant 0 : index
      %119 = vector.load %arg19[%118, %c0_48] : memref<64x128xbf16, #tpu.memory_space<vmem>>, vector<16x128xbf16>
      tpu.vector_store %arg19[%118, %c0_48], %117 {strides = array<i32>} : memref<64x128xbf16, #tpu.memory_space<vmem>>, vector<16x128xbf16>,
      %c2_i32 = arith.constant 2 : i32
      %120 = arith.addi %0, %c2_i32 : i32
      %121 = vector.broadcast %120 : i32 to vector<16x1xi32>
      %122 = arith.cmpi sgt, %11, %121 : vector<16x1xi32>
      %123 = vector.shape_cast %122 : vector<16x1xi1> to vector<16x1xi1>
      %124 = vector.broadcast %123 : vector<16x1xi1> to vector<16x128xi1>
      %c16_i32_49 = arith.constant 16 : i32
      %125 = arith.muli %c2_i32, %c16_i32_49 : i32
      %126 = tpu.assume_multiple %125, 16 : i32
      %127 = arith.index_cast %126 : i32 to index
      %c0_50 = arith.constant 0 : index
      %128 = vector.load %arg18[%127, %c0_50] : memref<64x512xf32, #tpu.memory_space<vmem>>, vector<16x512xf32>
      %cst_51 = arith.constant dense<0.000000e+00> : vector<16x512xf32>
      %129 = tpu.matmul %117, %15, %cst_51 {dimension_numbers = #tpu.dot_dimension_numbers<[1], [0], [0], [1], [0, 0, 1, 1], [], []>} : vector<16x128xbf16>, vector<128x512xbf16>, vector<16x512xf32> -> vector<16x512xf32>
      %130 = arith.addf %128, %129 : vector<16x512xf32>
      %131 = vector.extract_strided_slice %130 {offsets = [0, 0], sizes = [16, 128], strides = [1, 1]} : vector<16x512xf32> to vector<16x128xf32>
      %cst_52 = arith.constant 5.000000e-01 : f32
      %132 = vector.broadcast %cst_52 : f32 to vector<16x128xf32>
      %133 = arith.mulf %132, %131 : vector<16x128xf32>
      %134 = math.tanh %133 : vector<16x128xf32>
      %cst_53 = arith.constant 5.000000e-01 : f32
      %135 = vector.broadcast %cst_53 : f32 to vector<16x128xf32>
      %136 = arith.mulf %135, %134 : vector<16x128xf32>
      %cst_54 = arith.constant 5.000000e-01 : f32
      %137 = vector.broadcast %cst_54 : f32 to vector<16x128xf32>
      %138 = arith.addf %136, %137 : vector<16x128xf32>
      %139 = vector.extract_strided_slice %130 {offsets = [0, 128], sizes = [16, 128], strides = [1, 1]} : vector<16x512xf32> to vector<16x128xf32>
      %cst_55 = arith.constant 5.000000e-01 : f32
      %140 = vector.broadcast %cst_55 : f32 to vector<16x128xf32>
      %141 = arith.mulf %140, %139 : vector<16x128xf32>
      %142 = math.tanh %141 : vector<16x128xf32>
      %cst_56 = arith.constant 5.000000e-01 : f32
      %143 = vector.broadcast %cst_56 : f32 to vector<16x128xf32>
      %144 = arith.mulf %143, %142 : vector<16x128xf32>
      %cst_57 = arith.constant 5.000000e-01 : f32
      %145 = vector.broadcast %cst_57 : f32 to vector<16x128xf32>
      %146 = arith.addf %144, %145 : vector<16x128xf32>
      %147 = vector.extract_strided_slice %130 {offsets = [0, 256], sizes = [16, 128], strides = [1, 1]} : vector<16x512xf32> to vector<16x128xf32>
      %148 = math.tanh %147 : vector<16x128xf32>
      %149 = vector.extract_strided_slice %130 {offsets = [0, 384], sizes = [16, 128], strides = [1, 1]} : vector<16x512xf32> to vector<16x128xf32>
      %cst_58 = arith.constant 5.000000e-01 : f32
      %150 = vector.broadcast %cst_58 : f32 to vector<16x128xf32>
      %151 = arith.mulf %150, %149 : vector<16x128xf32>
      %152 = math.tanh %151 : vector<16x128xf32>
      %cst_59 = arith.constant 5.000000e-01 : f32
      %153 = vector.broadcast %cst_59 : f32 to vector<16x128xf32>
      %154 = arith.mulf %153, %152 : vector<16x128xf32>
      %cst_60 = arith.constant 5.000000e-01 : f32
      %155 = vector.broadcast %cst_60 : f32 to vector<16x128xf32>
      %156 = arith.addf %154, %155 : vector<16x128xf32>
      %157 = arith.mulf %146, %116 : vector<16x128xf32>
      %158 = arith.mulf %138, %148 : vector<16x128xf32>
      %159 = arith.addf %157, %158 : vector<16x128xf32>
      %160 = math.tanh %159 : vector<16x128xf32>
      %161 = arith.mulf %156, %160 : vector<16x128xf32>
      %162 = arith.select %124, %161, %115 : vector<16x128xi1>, vector<16x128xf32>
      %163 = arith.select %124, %159, %116 : vector<16x128xi1>, vector<16x128xf32>
      %164 = arith.truncf %162 : vector<16x128xf32> to vector<16x128xbf16>
      %165 = arith.index_cast %126 : i32 to index
      %c0_61 = arith.constant 0 : index
      %166 = vector.load %arg19[%165, %c0_61] : memref<64x128xbf16, #tpu.memory_space<vmem>>, vector<16x128xbf16>
      tpu.vector_store %arg19[%165, %c0_61], %164 {strides = array<i32>} : memref<64x128xbf16, #tpu.memory_space<vmem>>, vector<16x128xbf16>,
      %c3_i32 = arith.constant 3 : i32
      %167 = arith.addi %0, %c3_i32 : i32
      %168 = vector.broadcast %167 : i32 to vector<16x1xi32>
      %169 = arith.cmpi sgt, %11, %168 : vector<16x1xi32>
      %170 = vector.shape_cast %169 : vector<16x1xi1> to vector<16x1xi1>
      %171 = vector.broadcast %170 : vector<16x1xi1> to vector<16x128xi1>
      %c16_i32_62 = arith.constant 16 : i32
      %172 = arith.muli %c3_i32, %c16_i32_62 : i32
      %173 = tpu.assume_multiple %172, 16 : i32
      %174 = arith.index_cast %173 : i32 to index
      %c0_63 = arith.constant 0 : index
      %175 = vector.load %arg18[%174, %c0_63] : memref<64x512xf32, #tpu.memory_space<vmem>>, vector<16x512xf32>
      %cst_64 = arith.constant dense<0.000000e+00> : vector<16x512xf32>
      %176 = tpu.matmul %164, %15, %cst_64 {dimension_numbers = #tpu.dot_dimension_numbers<[1], [0], [0], [1], [0, 0, 1, 1], [], []>} : vector<16x128xbf16>, vector<128x512xbf16>, vector<16x512xf32> -> vector<16x512xf32>
      %177 = arith.addf %175, %176 : vector<16x512xf32>
      %178 = vector.extract_strided_slice %177 {offsets = [0, 0], sizes = [16, 128], strides = [1, 1]} : vector<16x512xf32> to vector<16x128xf32>
      %cst_65 = arith.constant 5.000000e-01 : f32
      %179 = vector.broadcast %cst_65 : f32 to vector<16x128xf32>
      %180 = arith.mulf %179, %178 : vector<16x128xf32>
      %181 = math.tanh %180 : vector<16x128xf32>
      %cst_66 = arith.constant 5.000000e-01 : f32
      %182 = vector.broadcast %cst_66 : f32 to vector<16x128xf32>
      %183 = arith.mulf %182, %181 : vector<16x128xf32>
      %cst_67 = arith.constant 5.000000e-01 : f32
      %184 = vector.broadcast %cst_67 : f32 to vector<16x128xf32>
      %185 = arith.addf %183, %184 : vector<16x128xf32>
      %186 = vector.extract_strided_slice %177 {offsets = [0, 128], sizes = [16, 128], strides = [1, 1]} : vector<16x512xf32> to vector<16x128xf32>
      %cst_68 = arith.constant 5.000000e-01 : f32
      %187 = vector.broadcast %cst_68 : f32 to vector<16x128xf32>
      %188 = arith.mulf %187, %186 : vector<16x128xf32>
      %189 = math.tanh %188 : vector<16x128xf32>
      %cst_69 = arith.constant 5.000000e-01 : f32
      %190 = vector.broadcast %cst_69 : f32 to vector<16x128xf32>
      %191 = arith.mulf %190, %189 : vector<16x128xf32>
      %cst_70 = arith.constant 5.000000e-01 : f32
      %192 = vector.broadcast %cst_70 : f32 to vector<16x128xf32>
      %193 = arith.addf %191, %192 : vector<16x128xf32>
      %194 = vector.extract_strided_slice %177 {offsets = [0, 256], sizes = [16, 128], strides = [1, 1]} : vector<16x512xf32> to vector<16x128xf32>
      %195 = math.tanh %194 : vector<16x128xf32>
      %196 = vector.extract_strided_slice %177 {offsets = [0, 384], sizes = [16, 128], strides = [1, 1]} : vector<16x512xf32> to vector<16x128xf32>
      %cst_71 = arith.constant 5.000000e-01 : f32
      %197 = vector.broadcast %cst_71 : f32 to vector<16x128xf32>
      %198 = arith.mulf %197, %196 : vector<16x128xf32>
      %199 = math.tanh %198 : vector<16x128xf32>
      %cst_72 = arith.constant 5.000000e-01 : f32
      %200 = vector.broadcast %cst_72 : f32 to vector<16x128xf32>
      %201 = arith.mulf %200, %199 : vector<16x128xf32>
      %cst_73 = arith.constant 5.000000e-01 : f32
      %202 = vector.broadcast %cst_73 : f32 to vector<16x128xf32>
      %203 = arith.addf %201, %202 : vector<16x128xf32>
      %204 = arith.mulf %193, %163 : vector<16x128xf32>
      %205 = arith.mulf %185, %195 : vector<16x128xf32>
      %206 = arith.addf %204, %205 : vector<16x128xf32>
      %207 = math.tanh %206 : vector<16x128xf32>
      %208 = arith.mulf %203, %207 : vector<16x128xf32>
      %209 = arith.select %171, %208, %162 : vector<16x128xi1>, vector<16x128xf32>
      %210 = arith.select %171, %206, %163 : vector<16x128xi1>, vector<16x128xf32>
      %211 = arith.truncf %209 : vector<16x128xf32> to vector<16x128xbf16>
      %212 = arith.index_cast %173 : i32 to index
      %c0_74 = arith.constant 0 : index
      %213 = vector.load %arg19[%212, %c0_74] : memref<64x128xbf16, #tpu.memory_space<vmem>>, vector<16x128xbf16>
      tpu.vector_store %arg19[%212, %c0_74], %211 {strides = array<i32>} : memref<64x128xbf16, #tpu.memory_space<vmem>>, vector<16x128xbf16>,
      %c4_i32_75 = arith.constant 4 : i32
      %c0_76 = arith.constant 0 : index
      %c0_77 = arith.constant 0 : index
      %c0_78 = arith.constant 0 : index
      %214 = vector.load %arg15[%c0_76, %c0_77, %c0_78] : memref<2x16x128xf32, #tpu.memory_space<vmem>>, vector<1x16x128xf32>
      %215 = vector.shape_cast %214 : vector<1x16x128xf32> to vector<16x128xf32>
      %216 = vector.shape_cast %209 : vector<16x128xf32> to vector<1x16x128xf32>
      tpu.vector_store %arg15[%c0_76, %c0_77, %c0_78], %216 {strides = array<i32>} : memref<2x16x128xf32, #tpu.memory_space<vmem>>, vector<1x16x128xf32>,
      %c0_79 = arith.constant 0 : index
      %c0_80 = arith.constant 0 : index
      %c0_81 = arith.constant 0 : index
      %217 = vector.load %arg16[%c0_79, %c0_80, %c0_81] : memref<2x16x128xf32, #tpu.memory_space<vmem>>, vector<1x16x128xf32>
      %218 = vector.shape_cast %217 : vector<1x16x128xf32> to vector<16x128xf32>
      %219 = vector.shape_cast %210 : vector<16x128xf32> to vector<1x16x128xf32>
      tpu.vector_store %arg16[%c0_79, %c0_80, %c0_81], %219 {strides = array<i32>} : memref<2x16x128xf32, #tpu.memory_space<vmem>>, vector<1x16x128xf32>,
      %c0_82 = arith.constant 0 : index
      %c0_83 = arith.constant 0 : index
      %220 = vector.load %arg19[%c0_82, %c0_83] : memref<64x128xbf16, #tpu.memory_space<vmem>>, vector<64x128xbf16>
      %c0_84 = arith.constant 0 : index
      %c0_85 = arith.constant 0 : index
      %221 = vector.load %arg10[%c0_84, %c0_85] : memref<128x512xbf16, #tpu.memory_space<vmem>>, vector<128x512xbf16>
      %c0_86 = arith.constant 0 : index
      %c0_87 = arith.constant 0 : index
      %222 = vector.load %arg11[%c0_86, %c0_87] : memref<128x512xbf16, #tpu.memory_space<vmem>>, vector<128x512xbf16>
      %c0_88 = arith.constant 0 : index
      %c0_89 = arith.constant 0 : index
      %223 = vector.load %arg12[%c0_88, %c0_89] : memref<1x512xf32, #tpu.memory_space<vmem>>, vector<1x512xf32>
      %cst_90 = arith.constant dense<0.000000e+00> : vector<64x512xf32>
      %224 = tpu.matmul %220, %221, %cst_90 {dimension_numbers = #tpu.dot_dimension_numbers<[1], [0], [0], [1], [0, 0, 1, 1], [], []>} : vector<64x128xbf16>, vector<128x512xbf16>, vector<64x512xf32> -> vector<64x512xf32>
      %225 = vector.broadcast %223 : vector<1x512xf32> to vector<64x512xf32>
      %226 = arith.addf %224, %225 : vector<64x512xf32>
      %c0_91 = arith.constant 0 : index
      %c0_92 = arith.constant 0 : index
      %227 = vector.load %arg18[%c0_91, %c0_92] : memref<64x512xf32, #tpu.memory_space<vmem>>, vector<64x512xf32>
      tpu.vector_store %arg18[%c0_91, %c0_92], %226 {strides = array<i32>} : memref<64x512xf32, #tpu.memory_space<vmem>>, vector<64x512xf32>,
      %c1 = arith.constant 1 : index
      %c0_93 = arith.constant 0 : index
      %c0_94 = arith.constant 0 : index
      %228 = vector.load %arg15[%c1, %c0_93, %c0_94] : memref<2x16x128xf32, #tpu.memory_space<vmem>>, vector<1x16x128xf32>
      %229 = vector.shape_cast %228 : vector<1x16x128xf32> to vector<16x128xf32>
      %c1_95 = arith.constant 1 : index
      %c0_96 = arith.constant 0 : index
      %c0_97 = arith.constant 0 : index
      %230 = vector.load %arg16[%c1_95, %c0_96, %c0_97] : memref<2x16x128xf32, #tpu.memory_space<vmem>>, vector<1x16x128xf32>
      %231 = vector.shape_cast %230 : vector<1x16x128xf32> to vector<16x128xf32>
      %232 = arith.truncf %229 : vector<16x128xf32> to vector<16x128xbf16>
      %c0_i32_98 = arith.constant 0 : i32
      %233 = arith.addi %0, %c0_i32_98 : i32
      %234 = vector.broadcast %233 : i32 to vector<16x1xi32>
      %235 = arith.cmpi sgt, %11, %234 : vector<16x1xi32>
      %236 = vector.shape_cast %235 : vector<16x1xi1> to vector<16x1xi1>
      %237 = vector.broadcast %236 : vector<16x1xi1> to vector<16x128xi1>
      %c16_i32_99 = arith.constant 16 : i32
      %238 = arith.muli %c0_i32_98, %c16_i32_99 : i32
      %239 = tpu.assume_multiple %238, 16 : i32
      %240 = arith.index_cast %239 : i32 to index
      %c0_100 = arith.constant 0 : index
      %241 = vector.load %arg18[%240, %c0_100] : memref<64x512xf32, #tpu.memory_space<vmem>>, vector<16x512xf32>
      %cst_101 = arith.constant dense<0.000000e+00> : vector<16x512xf32>
      %242 = tpu.matmul %232, %222, %cst_101 {dimension_numbers = #tpu.dot_dimension_numbers<[1], [0], [0], [1], [0, 0, 1, 1], [], []>} : vector<16x128xbf16>, vector<128x512xbf16>, vector<16x512xf32> -> vector<16x512xf32>
      %243 = arith.addf %241, %242 : vector<16x512xf32>
      %244 = vector.extract_strided_slice %243 {offsets = [0, 0], sizes = [16, 128], strides = [1, 1]} : vector<16x512xf32> to vector<16x128xf32>
      %cst_102 = arith.constant 5.000000e-01 : f32
      %245 = vector.broadcast %cst_102 : f32 to vector<16x128xf32>
      %246 = arith.mulf %245, %244 : vector<16x128xf32>
      %247 = math.tanh %246 : vector<16x128xf32>
      %cst_103 = arith.constant 5.000000e-01 : f32
      %248 = vector.broadcast %cst_103 : f32 to vector<16x128xf32>
      %249 = arith.mulf %248, %247 : vector<16x128xf32>
      %cst_104 = arith.constant 5.000000e-01 : f32
      %250 = vector.broadcast %cst_104 : f32 to vector<16x128xf32>
      %251 = arith.addf %249, %250 : vector<16x128xf32>
      %252 = vector.extract_strided_slice %243 {offsets = [0, 128], sizes = [16, 128], strides = [1, 1]} : vector<16x512xf32> to vector<16x128xf32>
      %cst_105 = arith.constant 5.000000e-01 : f32
      %253 = vector.broadcast %cst_105 : f32 to vector<16x128xf32>
      %254 = arith.mulf %253, %252 : vector<16x128xf32>
      %255 = math.tanh %254 : vector<16x128xf32>
      %cst_106 = arith.constant 5.000000e-01 : f32
      %256 = vector.broadcast %cst_106 : f32 to vector<16x128xf32>
      %257 = arith.mulf %256, %255 : vector<16x128xf32>
      %cst_107 = arith.constant 5.000000e-01 : f32
      %258 = vector.broadcast %cst_107 : f32 to vector<16x128xf32>
      %259 = arith.addf %257, %258 : vector<16x128xf32>
      %260 = vector.extract_strided_slice %243 {offsets = [0, 256], sizes = [16, 128], strides = [1, 1]} : vector<16x512xf32> to vector<16x128xf32>
      %261 = math.tanh %260 : vector<16x128xf32>
      %262 = vector.extract_strided_slice %243 {offsets = [0, 384], sizes = [16, 128], strides = [1, 1]} : vector<16x512xf32> to vector<16x128xf32>
      %cst_108 = arith.constant 5.000000e-01 : f32
      %263 = vector.broadcast %cst_108 : f32 to vector<16x128xf32>
      %264 = arith.mulf %263, %262 : vector<16x128xf32>
      %265 = math.tanh %264 : vector<16x128xf32>
      %cst_109 = arith.constant 5.000000e-01 : f32
      %266 = vector.broadcast %cst_109 : f32 to vector<16x128xf32>
      %267 = arith.mulf %266, %265 : vector<16x128xf32>
      %cst_110 = arith.constant 5.000000e-01 : f32
      %268 = vector.broadcast %cst_110 : f32 to vector<16x128xf32>
      %269 = arith.addf %267, %268 : vector<16x128xf32>
      %270 = arith.mulf %259, %231 : vector<16x128xf32>
      %271 = arith.mulf %251, %261 : vector<16x128xf32>
      %272 = arith.addf %270, %271 : vector<16x128xf32>
      %273 = math.tanh %272 : vector<16x128xf32>
      %274 = arith.mulf %269, %273 : vector<16x128xf32>
      %275 = arith.select %237, %274, %229 : vector<16x128xi1>, vector<16x128xf32>
      %276 = arith.select %237, %272, %231 : vector<16x128xi1>, vector<16x128xf32>
      %277 = arith.truncf %275 : vector<16x128xf32> to vector<16x128xbf16>
      %c1_i32_111 = arith.constant 1 : i32
      %278 = arith.addi %0, %c1_i32_111 : i32
      %279 = vector.broadcast %278 : i32 to vector<16x1xi32>
      %280 = arith.cmpi sgt, %11, %279 : vector<16x1xi32>
      %281 = vector.shape_cast %280 : vector<16x1xi1> to vector<16x1xi1>
      %282 = vector.broadcast %281 : vector<16x1xi1> to vector<16x128xi1>
      %c16_i32_112 = arith.constant 16 : i32
      %283 = arith.muli %c1_i32_111, %c16_i32_112 : i32
      %284 = tpu.assume_multiple %283, 16 : i32
      %285 = arith.index_cast %284 : i32 to index
      %c0_113 = arith.constant 0 : index
      %286 = vector.load %arg18[%285, %c0_113] : memref<64x512xf32, #tpu.memory_space<vmem>>, vector<16x512xf32>
      %cst_114 = arith.constant dense<0.000000e+00> : vector<16x512xf32>
      %287 = tpu.matmul %277, %222, %cst_114 {dimension_numbers = #tpu.dot_dimension_numbers<[1], [0], [0], [1], [0, 0, 1, 1], [], []>} : vector<16x128xbf16>, vector<128x512xbf16>, vector<16x512xf32> -> vector<16x512xf32>
      %288 = arith.addf %286, %287 : vector<16x512xf32>
      %289 = vector.extract_strided_slice %288 {offsets = [0, 0], sizes = [16, 128], strides = [1, 1]} : vector<16x512xf32> to vector<16x128xf32>
      %cst_115 = arith.constant 5.000000e-01 : f32
      %290 = vector.broadcast %cst_115 : f32 to vector<16x128xf32>
      %291 = arith.mulf %290, %289 : vector<16x128xf32>
      %292 = math.tanh %291 : vector<16x128xf32>
      %cst_116 = arith.constant 5.000000e-01 : f32
      %293 = vector.broadcast %cst_116 : f32 to vector<16x128xf32>
      %294 = arith.mulf %293, %292 : vector<16x128xf32>
      %cst_117 = arith.constant 5.000000e-01 : f32
      %295 = vector.broadcast %cst_117 : f32 to vector<16x128xf32>
      %296 = arith.addf %294, %295 : vector<16x128xf32>
      %297 = vector.extract_strided_slice %288 {offsets = [0, 128], sizes = [16, 128], strides = [1, 1]} : vector<16x512xf32> to vector<16x128xf32>
      %cst_118 = arith.constant 5.000000e-01 : f32
      %298 = vector.broadcast %cst_118 : f32 to vector<16x128xf32>
      %299 = arith.mulf %298, %297 : vector<16x128xf32>
      %300 = math.tanh %299 : vector<16x128xf32>
      %cst_119 = arith.constant 5.000000e-01 : f32
      %301 = vector.broadcast %cst_119 : f32 to vector<16x128xf32>
      %302 = arith.mulf %301, %300 : vector<16x128xf32>
      %cst_120 = arith.constant 5.000000e-01 : f32
      %303 = vector.broadcast %cst_120 : f32 to vector<16x128xf32>
      %304 = arith.addf %302, %303 : vector<16x128xf32>
      %305 = vector.extract_strided_slice %288 {offsets = [0, 256], sizes = [16, 128], strides = [1, 1]} : vector<16x512xf32> to vector<16x128xf32>
      %306 = math.tanh %305 : vector<16x128xf32>
      %307 = vector.extract_strided_slice %288 {offsets = [0, 384], sizes = [16, 128], strides = [1, 1]} : vector<16x512xf32> to vector<16x128xf32>
      %cst_121 = arith.constant 5.000000e-01 : f32
      %308 = vector.broadcast %cst_121 : f32 to vector<16x128xf32>
      %309 = arith.mulf %308, %307 : vector<16x128xf32>
      %310 = math.tanh %309 : vector<16x128xf32>
      %cst_122 = arith.constant 5.000000e-01 : f32
      %311 = vector.broadcast %cst_122 : f32 to vector<16x128xf32>
      %312 = arith.mulf %311, %310 : vector<16x128xf32>
      %cst_123 = arith.constant 5.000000e-01 : f32
      %313 = vector.broadcast %cst_123 : f32 to vector<16x128xf32>
      %314 = arith.addf %312, %313 : vector<16x128xf32>
      %315 = arith.mulf %304, %276 : vector<16x128xf32>
      %316 = arith.mulf %296, %306 : vector<16x128xf32>
      %317 = arith.addf %315, %316 : vector<16x128xf32>
      %318 = math.tanh %317 : vector<16x128xf32>
      %319 = arith.mulf %314, %318 : vector<16x128xf32>
      %320 = arith.select %282, %319, %275 : vector<16x128xi1>, vector<16x128xf32>
      %321 = arith.select %282, %317, %276 : vector<16x128xi1>, vector<16x128xf32>
      %322 = arith.truncf %320 : vector<16x128xf32> to vector<16x128xbf16>
      %c2_i32_124 = arith.constant 2 : i32
      %323 = arith.addi %0, %c2_i32_124 : i32
      %324 = vector.broadcast %323 : i32 to vector<16x1xi32>
      %325 = arith.cmpi sgt, %11, %324 : vector<16x1xi32>
      %326 = vector.shape_cast %325 : vector<16x1xi1> to vector<16x1xi1>
      %327 = vector.broadcast %326 : vector<16x1xi1> to vector<16x128xi1>
      %c16_i32_125 = arith.constant 16 : i32
      %328 = arith.muli %c2_i32_124, %c16_i32_125 : i32
      %329 = tpu.assume_multiple %328, 16 : i32
      %330 = arith.index_cast %329 : i32 to index
      %c0_126 = arith.constant 0 : index
      %331 = vector.load %arg18[%330, %c0_126] : memref<64x512xf32, #tpu.memory_space<vmem>>, vector<16x512xf32>
      %cst_127 = arith.constant dense<0.000000e+00> : vector<16x512xf32>
      %332 = tpu.matmul %322, %222, %cst_127 {dimension_numbers = #tpu.dot_dimension_numbers<[1], [0], [0], [1], [0, 0, 1, 1], [], []>} : vector<16x128xbf16>, vector<128x512xbf16>, vector<16x512xf32> -> vector<16x512xf32>
      %333 = arith.addf %331, %332 : vector<16x512xf32>
      %334 = vector.extract_strided_slice %333 {offsets = [0, 0], sizes = [16, 128], strides = [1, 1]} : vector<16x512xf32> to vector<16x128xf32>
      %cst_128 = arith.constant 5.000000e-01 : f32
      %335 = vector.broadcast %cst_128 : f32 to vector<16x128xf32>
      %336 = arith.mulf %335, %334 : vector<16x128xf32>
      %337 = math.tanh %336 : vector<16x128xf32>
      %cst_129 = arith.constant 5.000000e-01 : f32
      %338 = vector.broadcast %cst_129 : f32 to vector<16x128xf32>
      %339 = arith.mulf %338, %337 : vector<16x128xf32>
      %cst_130 = arith.constant 5.000000e-01 : f32
      %340 = vector.broadcast %cst_130 : f32 to vector<16x128xf32>
      %341 = arith.addf %339, %340 : vector<16x128xf32>
      %342 = vector.extract_strided_slice %333 {offsets = [0, 128], sizes = [16, 128], strides = [1, 1]} : vector<16x512xf32> to vector<16x128xf32>
      %cst_131 = arith.constant 5.000000e-01 : f32
      %343 = vector.broadcast %cst_131 : f32 to vector<16x128xf32>
      %344 = arith.mulf %343, %342 : vector<16x128xf32>
      %345 = math.tanh %344 : vector<16x128xf32>
      %cst_132 = arith.constant 5.000000e-01 : f32
      %346 = vector.broadcast %cst_132 : f32 to vector<16x128xf32>
      %347 = arith.mulf %346, %345 : vector<16x128xf32>
      %cst_133 = arith.constant 5.000000e-01 : f32
      %348 = vector.broadcast %cst_133 : f32 to vector<16x128xf32>
      %349 = arith.addf %347, %348 : vector<16x128xf32>
      %350 = vector.extract_strided_slice %333 {offsets = [0, 256], sizes = [16, 128], strides = [1, 1]} : vector<16x512xf32> to vector<16x128xf32>
      %351 = math.tanh %350 : vector<16x128xf32>
      %352 = vector.extract_strided_slice %333 {offsets = [0, 384], sizes = [16, 128], strides = [1, 1]} : vector<16x512xf32> to vector<16x128xf32>
      %cst_134 = arith.constant 5.000000e-01 : f32
      %353 = vector.broadcast %cst_134 : f32 to vector<16x128xf32>
      %354 = arith.mulf %353, %352 : vector<16x128xf32>
      %355 = math.tanh %354 : vector<16x128xf32>
      %cst_135 = arith.constant 5.000000e-01 : f32
      %356 = vector.broadcast %cst_135 : f32 to vector<16x128xf32>
      %357 = arith.mulf %356, %355 : vector<16x128xf32>
      %cst_136 = arith.constant 5.000000e-01 : f32
      %358 = vector.broadcast %cst_136 : f32 to vector<16x128xf32>
      %359 = arith.addf %357, %358 : vector<16x128xf32>
      %360 = arith.mulf %349, %321 : vector<16x128xf32>
      %361 = arith.mulf %341, %351 : vector<16x128xf32>
      %362 = arith.addf %360, %361 : vector<16x128xf32>
      %363 = math.tanh %362 : vector<16x128xf32>
      %364 = arith.mulf %359, %363 : vector<16x128xf32>
      %365 = arith.select %327, %364, %320 : vector<16x128xi1>, vector<16x128xf32>
      %366 = arith.select %327, %362, %321 : vector<16x128xi1>, vector<16x128xf32>
      %367 = arith.truncf %365 : vector<16x128xf32> to vector<16x128xbf16>
      %c3_i32_137 = arith.constant 3 : i32
      %368 = arith.addi %0, %c3_i32_137 : i32
      %369 = vector.broadcast %368 : i32 to vector<16x1xi32>
      %370 = arith.cmpi sgt, %11, %369 : vector<16x1xi32>
      %371 = vector.shape_cast %370 : vector<16x1xi1> to vector<16x1xi1>
      %372 = vector.broadcast %371 : vector<16x1xi1> to vector<16x128xi1>
      %c16_i32_138 = arith.constant 16 : i32
      %373 = arith.muli %c3_i32_137, %c16_i32_138 : i32
      %374 = tpu.assume_multiple %373, 16 : i32
      %375 = arith.index_cast %374 : i32 to index
      %c0_139 = arith.constant 0 : index
      %376 = vector.load %arg18[%375, %c0_139] : memref<64x512xf32, #tpu.memory_space<vmem>>, vector<16x512xf32>
      %cst_140 = arith.constant dense<0.000000e+00> : vector<16x512xf32>
      %377 = tpu.matmul %367, %222, %cst_140 {dimension_numbers = #tpu.dot_dimension_numbers<[1], [0], [0], [1], [0, 0, 1, 1], [], []>} : vector<16x128xbf16>, vector<128x512xbf16>, vector<16x512xf32> -> vector<16x512xf32>
      %378 = arith.addf %376, %377 : vector<16x512xf32>
      %379 = vector.extract_strided_slice %378 {offsets = [0, 0], sizes = [16, 128], strides = [1, 1]} : vector<16x512xf32> to vector<16x128xf32>
      %cst_141 = arith.constant 5.000000e-01 : f32
      %380 = vector.broadcast %cst_141 : f32 to vector<16x128xf32>
      %381 = arith.mulf %380, %379 : vector<16x128xf32>
      %382 = math.tanh %381 : vector<16x128xf32>
      %cst_142 = arith.constant 5.000000e-01 : f32
      %383 = vector.broadcast %cst_142 : f32 to vector<16x128xf32>
      %384 = arith.mulf %383, %382 : vector<16x128xf32>
      %cst_143 = arith.constant 5.000000e-01 : f32
      %385 = vector.broadcast %cst_143 : f32 to vector<16x128xf32>
      %386 = arith.addf %384, %385 : vector<16x128xf32>
      %387 = vector.extract_strided_slice %378 {offsets = [0, 128], sizes = [16, 128], strides = [1, 1]} : vector<16x512xf32> to vector<16x128xf32>
      %cst_144 = arith.constant 5.000000e-01 : f32
      %388 = vector.broadcast %cst_144 : f32 to vector<16x128xf32>
      %389 = arith.mulf %388, %387 : vector<16x128xf32>
      %390 = math.tanh %389 : vector<16x128xf32>
      %cst_145 = arith.constant 5.000000e-01 : f32
      %391 = vector.broadcast %cst_145 : f32 to vector<16x128xf32>
      %392 = arith.mulf %391, %390 : vector<16x128xf32>
      %cst_146 = arith.constant 5.000000e-01 : f32
      %393 = vector.broadcast %cst_146 : f32 to vector<16x128xf32>
      %394 = arith.addf %392, %393 : vector<16x128xf32>
      %395 = vector.extract_strided_slice %378 {offsets = [0, 256], sizes = [16, 128], strides = [1, 1]} : vector<16x512xf32> to vector<16x128xf32>
      %396 = math.tanh %395 : vector<16x128xf32>
      %397 = vector.extract_strided_slice %378 {offsets = [0, 384], sizes = [16, 128], strides = [1, 1]} : vector<16x512xf32> to vector<16x128xf32>
      %cst_147 = arith.constant 5.000000e-01 : f32
      %398 = vector.broadcast %cst_147 : f32 to vector<16x128xf32>
      %399 = arith.mulf %398, %397 : vector<16x128xf32>
      %400 = math.tanh %399 : vector<16x128xf32>
      %cst_148 = arith.constant 5.000000e-01 : f32
      %401 = vector.broadcast %cst_148 : f32 to vector<16x128xf32>
      %402 = arith.mulf %401, %400 : vector<16x128xf32>
      %cst_149 = arith.constant 5.000000e-01 : f32
      %403 = vector.broadcast %cst_149 : f32 to vector<16x128xf32>
      %404 = arith.addf %402, %403 : vector<16x128xf32>
      %405 = arith.mulf %394, %366 : vector<16x128xf32>
      %406 = arith.mulf %386, %396 : vector<16x128xf32>
      %407 = arith.addf %405, %406 : vector<16x128xf32>
      %408 = math.tanh %407 : vector<16x128xf32>
      %409 = arith.mulf %404, %408 : vector<16x128xf32>
      %410 = arith.select %372, %409, %365 : vector<16x128xi1>, vector<16x128xf32>
      %411 = arith.select %372, %407, %366 : vector<16x128xi1>, vector<16x128xf32>
      %412 = arith.truncf %410 : vector<16x128xf32> to vector<16x128xbf16>
      %c4_i32_150 = arith.constant 4 : i32
      %c1_151 = arith.constant 1 : index
      %c0_152 = arith.constant 0 : index
      %c0_153 = arith.constant 0 : index
      %413 = vector.load %arg15[%c1_151, %c0_152, %c0_153] : memref<2x16x128xf32, #tpu.memory_space<vmem>>, vector<1x16x128xf32>
      %414 = vector.shape_cast %413 : vector<1x16x128xf32> to vector<16x128xf32>
      %415 = vector.shape_cast %410 : vector<16x128xf32> to vector<1x16x128xf32>
      tpu.vector_store %arg15[%c1_151, %c0_152, %c0_153], %415 {strides = array<i32>} : memref<2x16x128xf32, #tpu.memory_space<vmem>>, vector<1x16x128xf32>,
      %c1_154 = arith.constant 1 : index
      %c0_155 = arith.constant 0 : index
      %c0_156 = arith.constant 0 : index
      %416 = vector.load %arg16[%c1_154, %c0_155, %c0_156] : memref<2x16x128xf32, #tpu.memory_space<vmem>>, vector<1x16x128xf32>
      %417 = vector.shape_cast %416 : vector<1x16x128xf32> to vector<16x128xf32>
      %418 = vector.shape_cast %411 : vector<16x128xf32> to vector<1x16x128xf32>
      tpu.vector_store %arg16[%c1_154, %c0_155, %c0_156], %418 {strides = array<i32>} : memref<2x16x128xf32, #tpu.memory_space<vmem>>, vector<1x16x128xf32>,
    } else {
    }
    %c1_i32 = arith.constant 1 : i32
    %8 = arith.cmpi eq, %arg1, %c1_i32 : i32
    %9 = arith.extui %8 : i1 to i32
    %c0_i32_2 = arith.constant 0 : i32
    %10 = arith.cmpi ne, %9, %c0_i32_2 : i32
    scf.if %10 {
      %c1 = arith.constant 1 : index
      %c0_3 = arith.constant 0 : index
      %c0_4 = arith.constant 0 : index
      %11 = vector.load %arg15[%c1, %c0_3, %c0_4] : memref<2x16x128xf32, #tpu.memory_space<vmem>>, vector<1x16x128xf32>
      %12 = vector.shape_cast %11 : vector<1x16x128xf32> to vector<16x128xf32>
      %13 = arith.truncf %12 : vector<16x128xf32> to vector<16x128xbf16>
      %c0_5 = arith.constant 0 : index
      %c0_6 = arith.constant 0 : index
      %14 = vector.load %arg13[%c0_5, %c0_6] : memref<128x1xbf16, #tpu.memory_space<vmem>>, vector<128x1xbf16>
      %cst = arith.constant dense<0.000000e+00> : vector<16x1xf32>
      %15 = tpu.matmul %13, %14, %cst {dimension_numbers = #tpu.dot_dimension_numbers<[1], [0], [0], [1], [0, 0, 1, 1], [], []>} : vector<16x128xbf16>, vector<128x1xbf16>, vector<16x1xf32> -> vector<16x1xf32>
      %c0_7 = arith.constant 0 : index
      %c0_8 = arith.constant 0 : index
      %16 = vector.load %arg14[%c0_7, %c0_8] : memref<1x1xf32, #tpu.memory_space<vmem>>, vector<1x1xf32>
      %17 = vector.broadcast %16 : vector<1x1xf32> to vector<16x1xf32>
      %18 = arith.addf %15, %17 : vector<16x1xf32>
      %cst_9 = arith.constant 5.000000e-01 : f32
      %19 = vector.broadcast %cst_9 : f32 to vector<16x1xf32>
      %20 = arith.mulf %19, %18 : vector<16x1xf32>
      %21 = math.tanh %20 : vector<16x1xf32>
      %cst_10 = arith.constant 5.000000e-01 : f32
      %22 = vector.broadcast %cst_10 : f32 to vector<16x1xf32>
      %23 = arith.mulf %22, %21 : vector<16x1xf32>
      %cst_11 = arith.constant 5.000000e-01 : f32
      %24 = vector.broadcast %cst_11 : f32 to vector<16x1xf32>
      %25 = arith.addf %23, %24 : vector<16x1xf32>
      %c0_12 = arith.constant 0 : index
      %c0_13 = arith.constant 0 : index
      %26 = vector.load %arg17[%c0_12, %c0_13] : memref<16x1xf32, #tpu.memory_space<vmem>>, vector<16x1xf32>
      tpu.vector_store %arg17[%c0_12, %c0_13], %25 {strides = array<i32>} : memref<16x1xf32, #tpu.memory_space<vmem>>, vector<16x1xf32>,
    } else {
    }
    return
  }
  func.func @transform_0(%arg0: i32, %arg1: i32, %arg2: memref<1xi32, #tpu.memory_space<smem>>) -> (i32, i32, i32) {
    %c0_i32 = arith.constant 0 : i32
    %c0_i32_0 = arith.constant 0 : i32
    return %arg1, %arg0, %c0_i32 : i32, i32, i32
  }
  func.func @transform_1(%arg0: i32, %arg1: i32, %arg2: memref<1xi32, #tpu.memory_space<smem>>) -> (i32, i32) {
    %c0_i32 = arith.constant 0 : i32
    %c0_i32_0 = arith.constant 0 : i32
    return %arg0, %c0_i32 : i32, i32
  }
  func.func @transform_2(%arg0: i32, %arg1: i32, %arg2: memref<1xi32, #tpu.memory_space<smem>>) -> (i32, i32, i32) {
    %c0_i32 = arith.constant 0 : i32
    %c0_i32_0 = arith.constant 0 : i32
    %c0_i32_1 = arith.constant 0 : i32
    return %c0_i32, %arg0, %c0_i32_0 : i32, i32, i32
  }
  func.func @transform_3(%arg0: i32, %arg1: i32, %arg2: memref<1xi32, #tpu.memory_space<smem>>) -> (i32, i32, i32) {
    %c0_i32 = arith.constant 0 : i32
    %c0_i32_0 = arith.constant 0 : i32
    %c0_i32_1 = arith.constant 0 : i32
    return %c0_i32, %arg0, %c0_i32_0 : i32, i32, i32
  }
  func.func @transform_4(%arg0: i32, %arg1: i32, %arg2: memref<1xi32, #tpu.memory_space<smem>>) -> (i32, i32) {
    %c0_i32 = arith.constant 0 : i32
    %c0_i32_0 = arith.constant 0 : i32
    %c0_i32_1 = arith.constant 0 : i32
    return %c0_i32, %c0_i32_0 : i32, i32
  }
  func.func @transform_5(%arg0: i32, %arg1: i32, %arg2: memref<1xi32, #tpu.memory_space<smem>>) -> (i32, i32) {
    %c0_i32 = arith.constant 0 : i32
    %c0_i32_0 = arith.constant 0 : i32
    %c0_i32_1 = arith.constant 0 : i32
    return %c0_i32, %c0_i32_0 : i32, i32
  }
  func.func @transform_6(%arg0: i32, %arg1: i32, %arg2: memref<1xi32, #tpu.memory_space<smem>>) -> (i32, i32) {
    %c0_i32 = arith.constant 0 : i32
    %c0_i32_0 = arith.constant 0 : i32
    %c0_i32_1 = arith.constant 0 : i32
    return %c0_i32, %c0_i32_0 : i32, i32
  }
  func.func @transform_7(%arg0: i32, %arg1: i32, %arg2: memref<1xi32, #tpu.memory_space<smem>>) -> (i32, i32) {
    %c0_i32 = arith.constant 0 : i32
    %c0_i32_0 = arith.constant 0 : i32
    %c0_i32_1 = arith.constant 0 : i32
    return %c0_i32, %c0_i32_0 : i32, i32
  }
  func.func @transform_8(%arg0: i32, %arg1: i32, %arg2: memref<1xi32, #tpu.memory_space<smem>>) -> (i32, i32) {
    %c0_i32 = arith.constant 0 : i32
    %c0_i32_0 = arith.constant 0 : i32
    %c0_i32_1 = arith.constant 0 : i32
    return %c0_i32, %c0_i32_0 : i32, i32
  }
  func.func @transform_9(%arg0: i32, %arg1: i32, %arg2: memref<1xi32, #tpu.memory_space<smem>>) -> (i32, i32) {
    %c0_i32 = arith.constant 0 : i32
    %c0_i32_0 = arith.constant 0 : i32
    %c0_i32_1 = arith.constant 0 : i32
    return %c0_i32, %c0_i32_0 : i32, i32
  }
  func.func @transform_10(%arg0: i32, %arg1: i32, %arg2: memref<1xi32, #tpu.memory_space<smem>>) -> (i32, i32) {
    %c0_i32 = arith.constant 0 : i32
    %c0_i32_0 = arith.constant 0 : i32
    %c0_i32_1 = arith.constant 0 : i32
    return %c0_i32, %c0_i32_0 : i32, i32
  }
  func.func @transform_11(%arg0: i32, %arg1: i32, %arg2: memref<1xi32, #tpu.memory_space<smem>>) -> (i32, i32) {
    %c0_i32 = arith.constant 0 : i32
    %c0_i32_0 = arith.constant 0 : i32
    %c0_i32_1 = arith.constant 0 : i32
    return %c0_i32, %c0_i32_0 : i32, i32
  }
  func.func @transform_12(%arg0: i32, %arg1: i32, %arg2: memref<1xi32, #tpu.memory_space<smem>>) -> (i32, i32, i32) {
    %c0_i32 = arith.constant 0 : i32
    %c0_i32_0 = arith.constant 0 : i32
    %c0_i32_1 = arith.constant 0 : i32
    return %c0_i32, %arg0, %c0_i32_0 : i32, i32, i32
  }
  func.func @transform_13(%arg0: i32, %arg1: i32, %arg2: memref<1xi32, #tpu.memory_space<smem>>) -> (i32, i32, i32) {
    %c0_i32 = arith.constant 0 : i32
    %c0_i32_0 = arith.constant 0 : i32
    %c0_i32_1 = arith.constant 0 : i32
    return %c0_i32, %arg0, %c0_i32_0 : i32, i32, i32
  }
  func.func @transform_14(%arg0: i32, %arg1: i32, %arg2: memref<1xi32, #tpu.memory_space<smem>>) -> (i32, i32) {
    %c0_i32 = arith.constant 0 : i32
    %c0_i32_0 = arith.constant 0 : i32
    return %arg0, %c0_i32 : i32, i32
  }
}

</mosaic_0001>

<llo_original>
// kernel: lstm_forward.1
$region0: #{lstm_forward.1}
  #allocation0 [shape = 'u32[]', space=smem, size = 0x4, offset = 0x4, fixed_abs, tag = 'smem constant byte address 0x4 - core index']
  #allocation1 [shape = 'u32[144,128]{1,0:T(1,128)}', space=vmem, size = 0x12000, scoped, tag = 'internal scratch']
  #allocation2 [shape = 'f32[64,512]{1,0:T(8,128)}', space=vmem, size = 0x20000, scoped, tag = 'scratch operand']
  #allocation3 [shape = 'bf16[64,128]{1,0:T(8,128)(2,1)}', space=vmem, size = 0x4000, scoped, tag = 'scratch operand']
  #allocation4 [shape = 's32[1]{0}', space=sflag, size = 0x4, scoped, tag = 'scoped memory for lstm_forward.1']
  #allocation5 [shape = 's32[1]{0:T(128)S(6)}', space=smem, size = 0x200, scoped, tag = 'prefetched SMEM operand 0']
  #allocation6 [shape = 'f32[1,1]{1,0:T(1,128)S(1)}', space=vmem, size = 0x200, scoped, tag = 'scoped memory for lstm_forward.1']
  %s0 = inlined_call_operand.<no memory space> [shape: s32[1], index: 0, kind: input, shape index: {}]
  %s1 = inlined_call_operand.vmem [shape: bf16[8,16,128], index: 1, kind: input, shape index: {}]
  %s2 = inlined_call_operand.vmem [shape: s32[16,1], index: 2, kind: input, shape index: {}]
  %s3 = inlined_call_operand.vmem [shape: f32[2,16,128], index: 3, kind: input, shape index: {}]
  %s4 = inlined_call_operand.vmem [shape: f32[2,16,128], index: 4, kind: input, shape index: {}]
  %s5 = inlined_call_operand.vmem [shape: bf16[128,512], index: 5, kind: input, shape index: {}]
  %s6 = inlined_call_operand.vmem [shape: bf16[128,512], index: 6, kind: input, shape index: {}]
  %s7 = inlined_call_operand.vmem [shape: f32[1,512], index: 7, kind: input, shape index: {}]
  %s8 = inlined_call_operand.vmem [shape: bf16[128,512], index: 8, kind: input, shape index: {}]
  %s9 = inlined_call_operand.vmem [shape: bf16[128,512], index: 9, kind: input, shape index: {}]
  %s10 = inlined_call_operand.vmem [shape: f32[1,512], index: 10, kind: input, shape index: {}]
  %s11 = inlined_call_operand.vmem [shape: bf16[128,1], index: 11, kind: input, shape index: {}]
  %s12 = inlined_call_operand.<no memory space> [shape: f32[1,1], index: 12, kind: input, shape index: {}]
  %s13 = inlined_call_operand.vmem [shape: f32[2,16,128], index: 13, kind: output, shape index: {0}]
  %s14 = inlined_call_operand.vmem [shape: f32[2,16,128], index: 14, kind: output, shape index: {1}]
  %s15 = inlined_call_operand.vmem [shape: f32[16,1], index: 15, kind: output, shape index: {2}]
  %16 = xla_tuple %s13, %s14, %s15
  %s17 = sld [smem:[#allocation0]]
  $region109: #{lstm_forward.1} parent=0
    _
  %s19 = ssub.s32 1, %s17
  %s20 = scalar_select 0, %s19, %s17
  %21 = sst [smem:[#allocation5]] %s0
  %v22 = vstv %s12
  %23 = vst [vmem:[#allocation6] sm:$0x1] %v22
  loop: start=0, step=1, limit=4
  $region2: #{lstm_forward.1} parent=0 // loop_pre_header
    _
  $region3: #{lstm_forward.1} parent=0 // loop_header
    %s25 = sphi 0, %s29
    %p26 = scmp.ge.s32.totalorder %s25, 4
    %s32 = sphi 0, %s44
    %s33 = sphi 0, %s40
    %s34 = sphi 0, %s32
    %s35 = sphi 0, %s33
    %s36 = sphi 0, %s34
    %s37 = sphi 0, %s35
    %s49 = sphi 0, %s51
    %s52 = sphi 0, %s49
    %s53 = sphi 0, %s52
    %s69 = sphi 0, %s53
    %s75 = sphi 0, %s77
    %s78 = sphi 0, %s75
    %s79 = sphi 0, %s78
    %s95 = sphi 0, %s79
    %s101 = sphi 0, %s103
    %s104 = sphi 0, %s101
    %s105 = sphi 0, %s104
    %s121 = sphi 0, %s105
    %s127 = sphi 0, %s129
    %s130 = sphi 0, %s127
    %s131 = sphi 0, %s130
    %s147 = sphi 0, %s131
    %s151 = sphi 0, %s151
    %s153 = sphi 0, %s151
    %s154 = sphi 0, %s153
    %s168 = sphi 0, %s154
    %s172 = sphi 0, %s172
    %s174 = sphi 0, %s172
    %s175 = sphi 0, %s174
    %s189 = sphi 0, %s175
    %s193 = sphi 0, %s193
    %s195 = sphi 0, %s193
    %s196 = sphi 0, %s195
    %s210 = sphi 0, %s196
    %s214 = sphi 0, %s214
    %s216 = sphi 0, %s214
    %s217 = sphi 0, %s216
    %s231 = sphi 0, %s217
    %s235 = sphi 0, %s235
    %s237 = sphi 0, %s235
    %s238 = sphi 0, %s237
    %s252 = sphi 0, %s238
    %s256 = sphi 0, %s256
    %s258 = sphi 0, %s256
    %s259 = sphi 0, %s258
    %s273 = sphi 0, %s259
    %s277 = sphi 0, %s277
    %s279 = sphi 0, %s277
    %s280 = sphi 0, %s279
    %s294 = sphi 0, %s280
    %s298 = sphi 0, %s298
    %s300 = sphi 0, %s298
    %s301 = sphi 0, %s300
    %s315 = sphi 0, %s301
    %s321 = sphi 0, %s323
    %s324 = sphi 0, %s321
    %s325 = sphi 0, %s324
    %s341 = sphi 0, %s325
    %s347 = sphi 0, %s349
    %s350 = sphi 0, %s347
    %s351 = sphi 0, %s350
    %s367 = sphi 0, %s351
    %s373 = sphi 0, %s375
    %s376 = sphi 0, %s373
    %s377 = sphi 0, %s376
    %s393 = sphi 0, %s377
  $region4: #{lstm_forward.1} parent=0 // loop_header_branch
    %28 = sbr.rel (%p26) target = $region8
  $region5: #{lstm_forward.1} parent=0 // loop_body
    %s30 = ssub.s32 %s25, 1
    %s31 = ssub.s32 %s25, 2
    %s38 = sadd.s32 1, %s33
    %p39 = scmp.ge.s32.totalorder %s38, 2
    %s40 = scalar_select %p39, 0, %s38
    %s41 = sadd.s32 1, %s32
    %s42 = scalar_select %p39, %s41, %s32
    %p43 = scmp.ge.s32.totalorder %s42, 1
    %s44 = scalar_select %p43, 0, %s42
    %s45 = ssub.s32 %s33, %s40
    %s46 = ssub.s32 %s32, %s44
    %s47 = sor.u32 %s45, %s46
    %p48 = scmp.eq.s32.totalorder %s47, 0
    %s50 = sadd.s32 %s49, 1
    %s51 = scalar_select %p48, %s49, %s50
    %p54 = pneg %p48
    %p55 = scmp.eq.s32.totalorder %s25, 1
    %p56 = por %p54, %p55
    %p57 = scmp.ne.s32.totalorder %s49, %s52
    %p58 = scmp.eq.s32.totalorder %s25, 0
    %p59 = por %p57, %p58
    %p60 = scmp.ne.s32.totalorder %s49, %s52
    %p61 = scmp.eq.s32.totalorder %s30, 1
    %p62 = por %p60, %p61
    %p63 = scmp.ne.s32.totalorder %s52, %s53
    %p64 = scmp.eq.s32.totalorder %s30, 0
    %p65 = por %p63, %p64
    %p66 = scmp.ne.s32.totalorder %s52, %s53
    %p67 = scmp.eq.s32.totalorder %s31, 1
    %p68 = por %p66, %p67
    %p70 = scmp.ne.s32.totalorder %s53, %s69
    %p71 = scmp.eq.s32.totalorder %s31, 0
    %p72 = por %p70, %p71
    %s73 = ssub.s32 %s32, %s44
    %p74 = scmp.eq.s32.totalorder %s73, 0
    %s76 = sadd.s32 %s75, 1
    %s77 = scalar_select %p74, %s75, %s76
    %p80 = pneg %p74
    %p81 = scmp.eq.s32.totalorder %s25, 1
    %p82 = por %p80, %p81
    %p83 = scmp.ne.s32.totalorder %s75, %s78
    %p84 = scmp.eq.s32.totalorder %s25, 0
    %p85 = por %p83, %p84
    %p86 = scmp.ne.s32.totalorder %s75, %s78
    %p87 = scmp.eq.s32.totalorder %s30, 1
    %p88 = por %p86, %p87
    %p89 = scmp.ne.s32.totalorder %s78, %s79
    %p90 = scmp.eq.s32.totalorder %s30, 0
    %p91 = por %p89, %p90
    %p92 = scmp.ne.s32.totalorder %s78, %s79
    %p93 = scmp.eq.s32.totalorder %s31, 1
    %p94 = por %p92, %p93
    %p96 = scmp.ne.s32.totalorder %s79, %s95
    %p97 = scmp.eq.s32.totalorder %s31, 0
    %p98 = por %p96, %p97
    %s99 = ssub.s32 %s32, %s44
    %p100 = scmp.eq.s32.totalorder %s99, 0
    %s102 = sadd.s32 %s101, 1
    %s103 = scalar_select %p100, %s101, %s102
    %p106 = pneg %p100
    %p107 = scmp.eq.s32.totalorder %s25, 1
    %p108 = por %p106, %p107
    %p109 = scmp.ne.s32.totalorder %s101, %s104
    %p110 = scmp.eq.s32.totalorder %s25, 0
    %p111 = por %p109, %p110
    %p112 = scmp.ne.s32.totalorder %s101, %s104
    %p113 = scmp.eq.s32.totalorder %s30, 1
    %p114 = por %p112, %p113
    %p115 = scmp.ne.s32.totalorder %s104, %s105
    %p116 = scmp.eq.s32.totalorder %s30, 0
    %p117 = por %p115, %p116
    %p118 = scmp.ne.s32.totalorder %s104, %s105
    %p119 = scmp.eq.s32.totalorder %s31, 1
    %p120 = por %p118, %p119
    %p122 = scmp.ne.s32.totalorder %s105, %s121
    %p123 = scmp.eq.s32.totalorder %s31, 0
    %p124 = por %p122, %p123
    %s125 = ssub.s32 %s32, %s44
    %p126 = scmp.eq.s32.totalorder %s125, 0
    %s128 = sadd.s32 %s127, 1
    %s129 = scalar_select %p126, %s127, %s128
    %p132 = pneg %p126
    %p133 = scmp.eq.s32.totalorder %s25, 1
    %p134 = por %p132, %p133
    %p135 = scmp.ne.s32.totalorder %s127, %s130
    %p136 = scmp.eq.s32.totalorder %s25, 0
    %p137 = por %p135, %p136
    %p138 = scmp.ne.s32.totalorder %s127, %s130
    %p139 = scmp.eq.s32.totalorder %s30, 1
    %p140 = por %p138, %p139
    %p141 = scmp.ne.s32.totalorder %s130, %s131
    %p142 = scmp.eq.s32.totalorder %s30, 0
    %p143 = por %p141, %p142
    %p144 = scmp.ne.s32.totalorder %s130, %s131
    %p145 = scmp.eq.s32.totalorder %s31, 1
    %p146 = por %p144, %p145
    %p148 = scmp.ne.s32.totalorder %s131, %s147
    %p149 = scmp.eq.s32.totalorder %s31, 0
    %p150 = por %p148, %p149
    %s152 = sadd.s32 %s151, 1
    %p155 = scmp.eq.s32.totalorder %s25, 1
    %p156 = scmp.ne.s32.totalorder %s151, %s153
    %p157 = scmp.eq.s32.totalorder %s25, 0
    %p158 = por %p156, %p157
    %p159 = scmp.ne.s32.totalorder %s151, %s153
    %p160 = scmp.eq.s32.totalorder %s30, 1
    %p161 = por %p159, %p160
    %p162 = scmp.ne.s32.totalorder %s153, %s154
    %p163 = scmp.eq.s32.totalorder %s30, 0
    %p164 = por %p162, %p163
    %p165 = scmp.ne.s32.totalorder %s153, %s154
    %p166 = scmp.eq.s32.totalorder %s31, 1
    %p167 = por %p165, %p166
    %p169 = scmp.ne.s32.totalorder %s154, %s168
    %p170 = scmp.eq.s32.totalorder %s31, 0
    %p171 = por %p169, %p170
    %s173 = sadd.s32 %s172, 1
    %p176 = scmp.eq.s32.totalorder %s25, 1
    %p177 = scmp.ne.s32.totalorder %s172, %s174
    %p178 = scmp.eq.s32.totalorder %s25, 0
    %p179 = por %p177, %p178
    %p180 = scmp.ne.s32.totalorder %s172, %s174
    %p181 = scmp.eq.s32.totalorder %s30, 1
    %p182 = por %p180, %p181
    %p183 = scmp.ne.s32.totalorder %s174, %s175
    %p184 = scmp.eq.s32.totalorder %s30, 0
    %p185 = por %p183, %p184
    %p186 = scmp.ne.s32.totalorder %s174, %s175
    %p187 = scmp.eq.s32.totalorder %s31, 1
    %p188 = por %p186, %p187
    %p190 = scmp.ne.s32.totalorder %s175, %s189
    %p191 = scmp.eq.s32.totalorder %s31, 0
    %p192 = por %p190, %p191
    %s194 = sadd.s32 %s193, 1
    %p197 = scmp.eq.s32.totalorder %s25, 1
    %p198 = scmp.ne.s32.totalorder %s193, %s195
    %p199 = scmp.eq.s32.totalorder %s25, 0
    %p200 = por %p198, %p199
    %p201 = scmp.ne.s32.totalorder %s193, %s195
    %p202 = scmp.eq.s32.totalorder %s30, 1
    %p203 = por %p201, %p202
    %p204 = scmp.ne.s32.totalorder %s195, %s196
    %p205 = scmp.eq.s32.totalorder %s30, 0
    %p206 = por %p204, %p205
    %p207 = scmp.ne.s32.totalorder %s195, %s196
    %p208 = scmp.eq.s32.totalorder %s31, 1
    %p209 = por %p207, %p208
    %p211 = scmp.ne.s32.totalorder %s196, %s210
    %p212 = scmp.eq.s32.totalorder %s31, 0
    %p213 = por %p211, %p212
    %s215 = sadd.s32 %s214, 1
    %p218 = scmp.eq.s32.totalorder %s25, 1
    %p219 = scmp.ne.s32.totalorder %s214, %s216
    %p220 = scmp.eq.s32.totalorder %s25, 0
    %p221 = por %p219, %p220
    %p222 = scmp.ne.s32.totalorder %s214, %s216
    %p223 = scmp.eq.s32.totalorder %s30, 1
    %p224 = por %p222, %p223
    %p225 = scmp.ne.s32.totalorder %s216, %s217
    %p226 = scmp.eq.s32.totalorder %s30, 0
    %p227 = por %p225, %p226
    %p228 = scmp.ne.s32.totalorder %s216, %s217
    %p229 = scmp.eq.s32.totalorder %s31, 1
    %p230 = por %p228, %p229
    %p232 = scmp.ne.s32.totalorder %s217, %s231
    %p233 = scmp.eq.s32.totalorder %s31, 0
    %p234 = por %p232, %p233
    %s236 = sadd.s32 %s235, 1
    %p239 = scmp.eq.s32.totalorder %s25, 1
    %p240 = scmp.ne.s32.totalorder %s235, %s237
    %p241 = scmp.eq.s32.totalorder %s25, 0
    %p242 = por %p240, %p241
    %p243 = scmp.ne.s32.totalorder %s235, %s237
    %p244 = scmp.eq.s32.totalorder %s30, 1
    %p245 = por %p243, %p244
    %p246 = scmp.ne.s32.totalorder %s237, %s238
    %p247 = scmp.eq.s32.totalorder %s30, 0
    %p248 = por %p246, %p247
    %p249 = scmp.ne.s32.totalorder %s237, %s238
    %p250 = scmp.eq.s32.totalorder %s31, 1
    %p251 = por %p249, %p250
    %p253 = scmp.ne.s32.totalorder %s238, %s252
    %p254 = scmp.eq.s32.totalorder %s31, 0
    %p255 = por %p253, %p254
    %s257 = sadd.s32 %s256, 1
    %p260 = scmp.eq.s32.totalorder %s25, 1
    %p261 = scmp.ne.s32.totalorder %s256, %s258
    %p262 = scmp.eq.s32.totalorder %s25, 0
    %p263 = por %p261, %p262
    %p264 = scmp.ne.s32.totalorder %s256, %s258
    %p265 = scmp.eq.s32.totalorder %s30, 1
    %p266 = por %p264, %p265
    %p267 = scmp.ne.s32.totalorder %s258, %s259
    %p268 = scmp.eq.s32.totalorder %s30, 0
    %p269 = por %p267, %p268
    %p270 = scmp.ne.s32.totalorder %s258, %s259
    %p271 = scmp.eq.s32.totalorder %s31, 1
    %p272 = por %p270, %p271
    %p274 = scmp.ne.s32.totalorder %s259, %s273
    %p275 = scmp.eq.s32.totalorder %s31, 0
    %p276 = por %p274, %p275
    %s278 = sadd.s32 %s277, 1
    %p281 = scmp.eq.s32.totalorder %s25, 1
    %p282 = scmp.ne.s32.totalorder %s277, %s279
    %p283 = scmp.eq.s32.totalorder %s25, 0
    %p284 = por %p282, %p283
    %p285 = scmp.ne.s32.totalorder %s277, %s279
    %p286 = scmp.eq.s32.totalorder %s30, 1
    %p287 = por %p285, %p286
    %p288 = scmp.ne.s32.totalorder %s279, %s280
    %p289 = scmp.eq.s32.totalorder %s30, 0
    %p290 = por %p288, %p289
    %p291 = scmp.ne.s32.totalorder %s279, %s280
    %p292 = scmp.eq.s32.totalorder %s31, 1
    %p293 = por %p291, %p292
    %p295 = scmp.ne.s32.totalorder %s280, %s294
    %p296 = scmp.eq.s32.totalorder %s31, 0
    %p297 = por %p295, %p296
    %s299 = sadd.s32 %s298, 1
    %p302 = scmp.eq.s32.totalorder %s25, 1
    %p303 = scmp.ne.s32.totalorder %s298, %s300
    %p304 = scmp.eq.s32.totalorder %s25, 0
    %p305 = por %p303, %p304
    %p306 = scmp.ne.s32.totalorder %s298, %s300
    %p307 = scmp.eq.s32.totalorder %s30, 1
    %p308 = por %p306, %p307
    %p309 = scmp.ne.s32.totalorder %s300, %s301
    %p310 = scmp.eq.s32.totalorder %s30, 0
    %p311 = por %p309, %p310
    %p312 = scmp.ne.s32.totalorder %s300, %s301
    %p313 = scmp.eq.s32.totalorder %s31, 1
    %p314 = por %p312, %p313
    %p316 = scmp.ne.s32.totalorder %s301, %s315
    %p317 = scmp.eq.s32.totalorder %s31, 0
    %p318 = por %p316, %p317
    %s319 = ssub.s32 %s32, %s44
    %p320 = scmp.eq.s32.totalorder %s319, 0
    %s322 = sadd.s32 %s321, 1
    %s323 = scalar_select %p320, %s321, %s322
    %p326 = pneg %p320
    %p327 = scmp.eq.s32.totalorder %s25, 1
    %p328 = por %p326, %p327
    %p329 = scmp.ne.s32.totalorder %s321, %s324
    %p330 = scmp.eq.s32.totalorder %s25, 0
    %p331 = por %p329, %p330
    %p332 = scmp.ne.s32.totalorder %s321, %s324
    %p333 = scmp.eq.s32.totalorder %s30, 1
    %p334 = por %p332, %p333
    %p335 = scmp.ne.s32.totalorder %s324, %s325
    %p336 = scmp.eq.s32.totalorder %s30, 0
    %p337 = por %p335, %p336
    %p338 = scmp.ne.s32.totalorder %s324, %s325
    %p339 = scmp.eq.s32.totalorder %s31, 1
    %p340 = por %p338, %p339
    %p342 = scmp.ne.s32.totalorder %s325, %s341
    %p343 = scmp.eq.s32.totalorder %s31, 0
    %p344 = por %p342, %p343
    %s345 = ssub.s32 %s32, %s44
    %p346 = scmp.eq.s32.totalorder %s345, 0
    %s348 = sadd.s32 %s347, 1
    %s349 = scalar_select %p346, %s347, %s348
    %p352 = pneg %p346
    %p353 = scmp.eq.s32.totalorder %s25, 1
    %p354 = por %p352, %p353
    %p355 = scmp.ne.s32.totalorder %s347, %s350
    %p356 = scmp.eq.s32.totalorder %s25, 0
    %p357 = por %p355, %p356
    %p358 = scmp.ne.s32.totalorder %s347, %s350
    %p359 = scmp.eq.s32.totalorder %s30, 1
    %p360 = por %p358, %p359
    %p361 = scmp.ne.s32.totalorder %s350, %s351
    %p362 = scmp.eq.s32.totalorder %s30, 0
    %p363 = por %p361, %p362
    %p364 = scmp.ne.s32.totalorder %s350, %s351
    %p365 = scmp.eq.s32.totalorder %s31, 1
    %p366 = por %p364, %p365
    %p368 = scmp.ne.s32.totalorder %s351, %s367
    %p369 = scmp.eq.s32.totalorder %s31, 0
    %p370 = por %p368, %p369
    %s371 = ssub.s32 %s32, %s44
    %p372 = scmp.eq.s32.totalorder %s371, 0
    %s374 = sadd.s32 %s373, 1
    %s375 = scalar_select %p372, %s373, %s374
    %p378 = pneg %p372
    %p379 = scmp.eq.s32.totalorder %s25, 1
    %p380 = por %p378, %p379
    %p381 = scmp.ne.s32.totalorder %s373, %s376
    %p382 = scmp.eq.s32.totalorder %s25, 0
    %p383 = por %p381, %p382
    %p384 = scmp.ne.s32.totalorder %s373, %s376
    %p385 = scmp.eq.s32.totalorder %s30, 1
    %p386 = por %p384, %p385
    %p387 = scmp.ne.s32.totalorder %s376, %s377
    %p388 = scmp.eq.s32.totalorder %s30, 0
    %p389 = por %p387, %p388
    %p390 = scmp.ne.s32.totalorder %s376, %s377
    %p391 = scmp.eq.s32.totalorder %s31, 1
    %p392 = por %p390, %p391
    %p394 = scmp.ne.s32.totalorder %s377, %s393
    %p395 = scmp.eq.s32.totalorder %s31, 0
    %p396 = por %p394, %p395
    %p397 = scmp.le.s32.totalorder 1, %s25
    %p398 = scmp.lt.s32.totalorder %s25, 3
    %p399 = pnand %p397, %p398
    %p400 = pneg %p399
    // Predicated region
    $region9: #{lstm_forward.1} parent=5 // pred_check
      _
    $region10: #{lstm_forward.1} parent=5 // pred_check_branch
      %402 = sbr.rel (%p399) target = $region12
    $region11: #{lstm_forward.1} parent=5 // pred_region
      %s403 = ssub.s32 %s25, 1
      // Predicated region
      $region13: #{lstm_forward.1} parent=11 // pred_check
        %p404 = pneg %p91
      $region14: #{lstm_forward.1} parent=11 // pred_check_branch
        %406 = sbr.rel (%p404) target = $region16
      $region15: #{lstm_forward.1} parent=11 // pred_region
        %s407 = smul.u32 2, %s34
        %p408 = scmp.lt.s32.totalorder %s407, 1
        %s409 = scalar_select %p408, %s407, 1
        %s410 = smul.addr %s409, 8
        %s411 = scalar_lea.vmem %s2, %s410
        %s412 = smul.u32 2, %s34
      $region16: #{lstm_forward.1} parent=11 // pred_fallthru
        _
      // Predicated region
      $region17: #{lstm_forward.1} parent=11 // pred_check
        %p413 = pneg %p117
      $region18: #{lstm_forward.1} parent=11 // pred_check_branch
        %415 = sbr.rel (%p413) target = $region20
      $region19: #{lstm_forward.1} parent=11 // pred_region
        %s416 = smul.u32 2, %s34
        %p417 = scmp.lt.s32.totalorder %s416, 1
        %s418 = scalar_select %p417, %s416, 1
        %s419 = smul.addr %s418, 8
        %s420 = scalar_lea.vmem %s3, %s419
        %s421 = smul.u32 2, %s34
      $region20: #{lstm_forward.1} parent=11 // pred_fallthru
        _
      // Predicated region
      $region21: #{lstm_forward.1} parent=11 // pred_check
        %p422 = pneg %p143
      $region22: #{lstm_forward.1} parent=11 // pred_check_branch
        %424 = sbr.rel (%p422) target = $region24
      $region23: #{lstm_forward.1} parent=11 // pred_region
        %s425 = smul.u32 2, %s34
        %p426 = scmp.lt.s32.totalorder %s425, 1
        %s427 = scalar_select %p426, %s425, 1
        %s428 = smul.addr %s427, 8
        %s429 = scalar_lea.vmem %s4, %s428
        %s430 = smul.u32 2, %s34
      $region24: #{lstm_forward.1} parent=11 // pred_fallthru
        _
      // Predicated region
      $region25: #{lstm_forward.1} parent=11 // pred_check
        %p431 = pneg %p164
      $region26: #{lstm_forward.1} parent=11 // pred_check_branch
        %433 = sbr.rel (%p431) target = $region28
      $region27: #{lstm_forward.1} parent=11 // pred_region
        _
      $region28: #{lstm_forward.1} parent=11 // pred_fallthru
        _
      // Predicated region
      $region29: #{lstm_forward.1} parent=11 // pred_check
        %p434 = pneg %p185
      $region30: #{lstm_forward.1} parent=11 // pred_check_branch
        %436 = sbr.rel (%p434) target = $region32
      $region31: #{lstm_forward.1} parent=11 // pred_region
        _
      $region32: #{lstm_forward.1} parent=11 // pred_fallthru
        _
      // Predicated region
      $region33: #{lstm_forward.1} parent=11 // pred_check
        %p437 = pneg %p206
      $region34: #{lstm_forward.1} parent=11 // pred_check_branch
        %439 = sbr.rel (%p437) target = $region36
      $region35: #{lstm_forward.1} parent=11 // pred_region
        _
      $region36: #{lstm_forward.1} parent=11 // pred_fallthru
        _
      // Predicated region
      $region37: #{lstm_forward.1} parent=11 // pred_check
        %p440 = pneg %p227
      $region38: #{lstm_forward.1} parent=11 // pred_check_branch
        %442 = sbr.rel (%p440) target = $region40
      $region39: #{lstm_forward.1} parent=11 // pred_region
        _
      $region40: #{lstm_forward.1} parent=11 // pred_fallthru
        _
      // Predicated region
      $region41: #{lstm_forward.1} parent=11 // pred_check
        %p443 = pneg %p248
      $region42: #{lstm_forward.1} parent=11 // pred_check_branch
        %445 = sbr.rel (%p443) target = $region44
      $region43: #{lstm_forward.1} parent=11 // pred_region
        _
      $region44: #{lstm_forward.1} parent=11 // pred_fallthru
        _
      // Predicated region
      $region45: #{lstm_forward.1} parent=11 // pred_check
        %p446 = pneg %p269
      $region46: #{lstm_forward.1} parent=11 // pred_check_branch
        %448 = sbr.rel (%p446) target = $region48
      $region47: #{lstm_forward.1} parent=11 // pred_region
        _
      $region48: #{lstm_forward.1} parent=11 // pred_fallthru
        _
      // Predicated region
      $region49: #{lstm_forward.1} parent=11 // pred_check
        %p449 = pneg %p290
      $region50: #{lstm_forward.1} parent=11 // pred_check_branch
        %451 = sbr.rel (%p449) target = $region52
      $region51: #{lstm_forward.1} parent=11 // pred_region
        _
      $region52: #{lstm_forward.1} parent=11 // pred_fallthru
        _
      // Predicated region
      $region53: #{lstm_forward.1} parent=11 // pred_check
        %p452 = pneg %p311
      $region54: #{lstm_forward.1} parent=11 // pred_check_branch
        %454 = sbr.rel (%p452) target = $region56
      $region55: #{lstm_forward.1} parent=11 // pred_region
        _
      $region56: #{lstm_forward.1} parent=11 // pred_fallthru
        _
    $region12: #{lstm_forward.1} parent=5 // pred_fallthru
      _
    %p455 = scmp.lt.s32.totalorder %s25, 2
    // Predicated region
    $region57: #{lstm_forward.1} parent=5 // pred_check
      %p456 = pneg %p455
    $region58: #{lstm_forward.1} parent=5 // pred_check_branch
      %458 = sbr.rel (%p456) target = $region60
    $region59: #{lstm_forward.1} parent=5 // pred_region
      // Predicated region
      $region61: #{lstm_forward.1} parent=59 // pred_check
        %p459 = pneg %p59
      $region62: #{lstm_forward.1} parent=59 // pred_check_branch
        %461 = sbr.rel (%p459) target = $region64
      $region63: #{lstm_forward.1} parent=59 // pred_region
        %s462 = smul.u32 4, %s33
        %s463 = smul.u32 2, %s32
        %p464 = scmp.lt.s32.totalorder %s462, 7
        %s465 = scalar_select %p464, %s462, 7
        %p466 = scmp.lt.s32.totalorder %s463, 1
        %s467 = scalar_select %p466, %s463, 1
        %s468 = smul.addr %s465, 2
        %s469 = sadd.s32 %s467, %s468
        %s470 = smul.addr %s469, 4
        %s471 = scalar_lea.vmem %s1, %s470
        %s472 = smul.u32 4, %s33
        %s473 = smul.u32 2, %s32
      $region64: #{lstm_forward.1} parent=59 // pred_fallthru
        _
    $region60: #{lstm_forward.1} parent=5 // pred_fallthru
      _
    %p474 = scmp.le.s32.totalorder 1, %s25
    %p475 = scmp.lt.s32.totalorder %s25, 3
    %p476 = pnand %p474, %p475
    %p477 = pneg %p476
    // Predicated region
    $region65: #{lstm_forward.1} parent=5 // pred_check
      _
    $region66: #{lstm_forward.1} parent=5 // pred_check_branch
      %479 = sbr.rel (%p476) target = $region68
    $region67: #{lstm_forward.1} parent=5 // pred_region
      %s480 = ssub.s32 %s25, 1
      %s481 = smul.u32 4, %s35
      %s482 = smul.u32 2, %s34
      %p483 = scmp.lt.s32.totalorder %s481, 7
      %s484 = scalar_select %p483, %s481, 7
      %p485 = scmp.lt.s32.totalorder %s482, 1
      %s486 = scalar_select %p485, %s482, 1
      %s487 = smul.addr %s484, 2
      %s488 = sadd.s32 %s486, %s487
      %s489 = smul.addr %s488, 4
      %s490 = scalar_lea.vmem %s1, %s489
      %p491 = pneg %p65
      %p492 = pneg %p62
      %s493 = smul.u32 2, %s34
      %p494 = scmp.lt.s32.totalorder %s493, 1
      %s495 = scalar_select %p494, %s493, 1
      %s496 = smul.addr %s495, 8
      %s497 = scalar_lea.vmem %s2, %s496
      %p498 = pneg %p91
      %p499 = pneg %p88
      %s500 = smul.u32 2, %s34
      %p501 = scmp.lt.s32.totalorder %s500, 1
      %s502 = scalar_select %p501, %s500, 1
      %s503 = smul.addr %s502, 8
      %s504 = scalar_lea.vmem %s3, %s503
      %p505 = pneg %p117
      %p506 = pneg %p114
      %s507 = smul.u32 2, %s34
      %p508 = scmp.lt.s32.totalorder %s507, 1
      %s509 = scalar_select %p508, %s507, 1
      %s510 = smul.addr %s509, 8
      %s511 = scalar_lea.vmem %s4, %s510
      %p512 = pneg %p143
      %p513 = pneg %p140
      %p514 = pneg %p164
      %p515 = pneg %p161
      %p516 = pneg %p185
      %p517 = pneg %p182
      %p518 = pneg %p206
      %p519 = pneg %p203
      %p520 = pneg %p227
      %p521 = pneg %p224
      %p522 = pneg %p248
      %p523 = pneg %p245
      %p524 = pneg %p269
      %p525 = pneg %p266
      %p526 = pneg %p290
      %p527 = pneg %p287
      %p528 = pneg %p311
      %p529 = pneg %p308
      %p530 = pneg %p337
      %p531 = pneg %p334
      %s532 = smul.u32 2, %s34
      %p533 = scmp.lt.s32.totalorder %s532, 1
      %s534 = scalar_select %p533, %s532, 1
      %s535 = smul.addr %s534, 8
      %s536 = scalar_lea.vmem %s13, %s535
      %p537 = pneg %p363
      %p538 = pneg %p360
      %s539 = smul.u32 2, %s34
      %p540 = scmp.lt.s32.totalorder %s539, 1
      %s541 = scalar_select %p540, %s539, 1
      %s542 = smul.addr %s541, 8
      %s543 = scalar_lea.vmem %s14, %s542
      %p544 = pneg %p389
      %p545 = pneg %p386
      %s546 = smul.u32 2, %s34
      %p547 = scmp.lt.s32.totalorder %s546, 1
      %s548 = scalar_select %p547, %s546, 1
      %s549 = smul.addr %s548, 8
      %s550 = scalar_lea.vmem %s15, %s549
      %s551 = smul.u32 4, %s35
      %s552 = smul.u32 2, %s34
      %p553 = scmp.lt.s32.totalorder %s551, 7
      %s554 = scalar_select %p553, %s551, 7
      %p555 = scmp.lt.s32.totalorder %s552, 1
      %s556 = scalar_select %p555, %s552, 1
      %s557 = smul.addr %s554, 2
      %s558 = sadd.s32 %s556, %s557
      %s559 = smul.addr %s558, 4
      %s560 = scalar_lea.vmem %s1, %s559
      %s561 = smul.u32 4, %s35
      %s562 = smul.u32 2, %s34
      %s563 = smul.u32 2, %s34
      %p564 = scmp.lt.s32.totalorder %s563, 1
      %s565 = scalar_select %p564, %s563, 1
      %s566 = smul.addr %s565, 8
      %s567 = scalar_lea.vmem %s2, %s566
      %s568 = smul.u32 2, %s34
      %s569 = smul.u32 2, %s34
      %p570 = scmp.lt.s32.totalorder %s569, 1
      %s571 = scalar_select %p570, %s569, 1
      %s572 = smul.addr %s571, 8
      %s573 = scalar_lea.vmem %s3, %s572
      %s574 = smul.u32 2, %s34
      %s575 = smul.u32 2, %s34
      %p576 = scmp.lt.s32.totalorder %s575, 1
      %s577 = scalar_select %p576, %s575, 1
      %s578 = smul.addr %s577, 8
      %s579 = scalar_lea.vmem %s4, %s578
      %s580 = smul.u32 2, %s34
      %s581 = smul.u32 2, %s34
      %p582 = scmp.lt.s32.totalorder %s581, 1
      %s583 = scalar_select %p582, %s581, 1
      %s584 = smul.addr %s583, 8
      %s585 = scalar_lea.vmem %s13, %s584
      %s586 = smul.u32 2, %s34
      %s587 = smul.u32 2, %s34
      %p588 = scmp.lt.s32.totalorder %s587, 1
      %s589 = scalar_select %p588, %s587, 1
      %s590 = smul.addr %s589, 8
      %s591 = scalar_lea.vmem %s14, %s590
      %s592 = smul.u32 2, %s34
      %s593 = smul.u32 2, %s34
      %p594 = scmp.lt.s32.totalorder %s593, 1
      %s595 = scalar_select %p594, %s593, 1
      %s596 = smul.addr %s595, 8
      %s597 = scalar_lea.vmem %s15, %s596
      %s598 = smul.u32 2, %s34
      %s600 = smul.u32 %s35, 4
      %p601 = scmp.eq.s32.totalorder %s35, 0
      // Predicated region
      $region69: #{lstm_forward.1} parent=67 // pred_check
        %p602 = pneg %p601
      $region70: #{lstm_forward.1} parent=67 // pred_check_branch
        %604 = sbr.rel (%p602) target = $region72
      $region71: #{lstm_forward.1} parent=67 // pred_region
        %v605 = vld [vmem:[%s573] sm:$0xff]
        %v606 = vld [vmem:[%s573 + $0x8] sm:$0xff]
        %v607 = vld [vmem:[%s573 + $0x10] sm:$0xff]
        %v608 = vld [vmem:[%s573 + $0x18] sm:$0xff]
        %609 = vst [vmem:[%s585] sm:$0xff] %v605
        %610 = vst [vmem:[%s585 + $0x8] sm:$0xff] %v606
        %611 = vst [vmem:[%s585 + $0x10] sm:$0xff] %v607
        %612 = vst [vmem:[%s585 + $0x18] sm:$0xff] %v608
        %v613 = vld [vmem:[%s579] sm:$0xff]
        %v614 = vld [vmem:[%s579 + $0x8] sm:$0xff]
        %v615 = vld [vmem:[%s579 + $0x10] sm:$0xff]
        %v616 = vld [vmem:[%s579 + $0x18] sm:$0xff]
        %617 = vst [vmem:[%s591] sm:$0xff] %v613
        %618 = vst [vmem:[%s591 + $0x8] sm:$0xff] %v614
        %619 = vst [vmem:[%s591 + $0x10] sm:$0xff] %v615
        %620 = vst [vmem:[%s591 + $0x18] sm:$0xff] %v616
      $region72: #{lstm_forward.1} parent=67 // pred_fallthru
        _
      %s621 = sld [smem:[#allocation5]]
      %p622 = scmp.lt.s32.totalorder %s600, %s621
      // Predicated region
      $region73: #{lstm_forward.1} parent=67 // pred_check
        %p623 = pneg %p622
      $region74: #{lstm_forward.1} parent=67 // pred_check_branch
        %625 = sbr.rel (%p623) target = $region76
      $region75: #{lstm_forward.1} parent=67 // pred_region
        %v626 = vld [vmem:[%s567] sm:$0xff]
        %v627 = vld [vmem:[%s567 + $0x8] sm:$0xff]
        %v628 = vld [vmem:[%s560] sm:$0xf]
        %v629 = vld [vmem:[%s560 + $0x4] sm:$0xf]
        %v630 = vld [vmem:[%s560 + $0x8] sm:$0xf]
        %v631 = vld [vmem:[%s560 + $0xc] sm:$0xf]
        %v632 = vld [vmem:[%s560 + $0x10] sm:$0xf]
        %v633 = vld [vmem:[%s560 + $0x14] sm:$0xf]
        %v634 = vld [vmem:[%s560 + $0x18] sm:$0xf]
        %v635 = vld [vmem:[%s560 + $0x1c] sm:$0xf]
        %v636 = vld [vmem:[%s5] sm:$0xff]
        %v637 = vld [vmem:[%s5 + $0x8] sm:$0xff]
        %v638 = vld [vmem:[%s5 + $0x10] sm:$0xff]
        %v639 = vld [vmem:[%s5 + $0x18] sm:$0xff]
        %v640 = vld [vmem:[%s5 + $0x20] sm:$0xff]
        %v641 = vld [vmem:[%s5 + $0x28] sm:$0xff]
        %v642 = vld [vmem:[%s5 + $0x30] sm:$0xff]
        %v643 = vld [vmem:[%s5 + $0x38] sm:$0xff]
        %v644 = vld [vmem:[%s5 + $0x40] sm:$0xff]
        %v645 = vld [vmem:[%s5 + $0x48] sm:$0xff]
        %v646 = vld [vmem:[%s5 + $0x50] sm:$0xff]
        %v647 = vld [vmem:[%s5 + $0x58] sm:$0xff]
        %v648 = vld [vmem:[%s5 + $0x60] sm:$0xff]
        %v649 = vld [vmem:[%s5 + $0x68] sm:$0xff]
        %v650 = vld [vmem:[%s5 + $0x70] sm:$0xff]
        %v651 = vld [vmem:[%s5 + $0x78] sm:$0xff]
        %v652 = vld [vmem:[%s5 + $0x80] sm:$0xff]
        %v653 = vld [vmem:[%s5 + $0x88] sm:$0xff]
        %v654 = vld [vmem:[%s5 + $0x90] sm:$0xff]
        %v655 = vld [vmem:[%s5 + $0x98] sm:$0xff]
        %v656 = vld [vmem:[%s5 + $0xa0] sm:$0xff]
        %v657 = vld [vmem:[%s5 + $0xa8] sm:$0xff]
        %v658 = vld [vmem:[%s5 + $0xb0] sm:$0xff]
        %v659 = vld [vmem:[%s5 + $0xb8] sm:$0xff]
        %v660 = vld [vmem:[%s5 + $0xc0] sm:$0xff]
        %v661 = vld [vmem:[%s5 + $0xc8] sm:$0xff]
        %v662 = vld [vmem:[%s5 + $0xd0] sm:$0xff]
        %v663 = vld [vmem:[%s5 + $0xd8] sm:$0xff]
        %v664 = vld [vmem:[%s5 + $0xe0] sm:$0xff]
        %v665 = vld [vmem:[%s5 + $0xe8] sm:$0xff]
        %v666 = vld [vmem:[%s5 + $0xf0] sm:$0xff]
        %v667 = vld [vmem:[%s5 + $0xf8] sm:$0xff]
        %v668 = vld [vmem:[%s6] sm:$0xff]
        %v669 = vld [vmem:[%s6 + $0x8] sm:$0xff]
        %v670 = vld [vmem:[%s6 + $0x10] sm:$0xff]
        %v671 = vld [vmem:[%s6 + $0x18] sm:$0xff]
        %v672 = vld [vmem:[%s6 + $0x20] sm:$0xff]
        %v673 = vld [vmem:[%s6 + $0x28] sm:$0xff]
        %v674 = vld [vmem:[%s6 + $0x30] sm:$0xff]
        %v675 = vld [vmem:[%s6 + $0x38] sm:$0xff]
        %v676 = vld [vmem:[%s6 + $0x40] sm:$0xff]
        %v677 = vld [vmem:[%s6 + $0x48] sm:$0xff]
        %v678 = vld [vmem:[%s6 + $0x50] sm:$0xff]
        %v679 = vld [vmem:[%s6 + $0x58] sm:$0xff]
        %v680 = vld [vmem:[%s6 + $0x60] sm:$0xff]
        %v681 = vld [vmem:[%s6 + $0x68] sm:$0xff]
        %v682 = vld [vmem:[%s6 + $0x70] sm:$0xff]
        %v683 = vld [vmem:[%s6 + $0x78] sm:$0xff]
        %v684 = vld [vmem:[%s6 + $0x80] sm:$0xff]
        %v685 = vld [vmem:[%s6 + $0x88] sm:$0xff]
        %v686 = vld [vmem:[%s6 + $0x90] sm:$0xff]
        %v687 = vld [vmem:[%s6 + $0x98] sm:$0xff]
        %v688 = vld [vmem:[%s6 + $0xa0] sm:$0xff]
        %v689 = vld [vmem:[%s6 + $0xa8] sm:$0xff]
        %v690 = vld [vmem:[%s6 + $0xb0] sm:$0xff]
        %v691 = vld [vmem:[%s6 + $0xb8] sm:$0xff]
        %v692 = vld [vmem:[%s6 + $0xc0] sm:$0xff]
        %v693 = vld [vmem:[%s6 + $0xc8] sm:$0xff]
        %v694 = vld [vmem:[%s6 + $0xd0] sm:$0xff]
        %v695 = vld [vmem:[%s6 + $0xd8] sm:$0xff]
        %v696 = vld [vmem:[%s6 + $0xe0] sm:$0xff]
        %v697 = vld [vmem:[%s6 + $0xe8] sm:$0xff]
        %v698 = vld [vmem:[%s6 + $0xf0] sm:$0xff]
        %v699 = vld [vmem:[%s6 + $0xf8] sm:$0xff]
        %v700 = vld [vmem:[%s7] sm:$0xf]
        %v702 = vlaneseq
        %v703 = vshrl.u32 %v702, 7
        %v704 = vsub.s32 0, %v703
        %v705 = vrot.slane %v700, %v704
        %v706 = vlaneseq
        %v707 = vshrl.u32 %v706, 7
        %v708 = vsub.s32 1, %v707
        %v709 = vrot.slane %v700, %v708
        %v710 = vlaneseq
        %v711 = vshrl.u32 %v710, 7
        %v712 = vsub.s32 2, %v711
        %v713 = vrot.slane %v700, %v712
        %v714 = vlaneseq
        %v715 = vshrl.u32 %v714, 7
        %v716 = vsub.s32 3, %v715
        %v717 = vrot.slane %v700, %v716
        %v730 = vunpack.c.l.b16 %v628
        %v731 = vunpack.c.l.b16 %v629
        %v732 = vunpack.c.l.b16 %v630
        %v733 = vunpack.c.l.b16 %v631
        %v734 = vunpack.c.l.b16 %v632
        %v735 = vunpack.c.l.b16 %v633
        %v736 = vunpack.c.l.b16 %v634
        %v737 = vunpack.c.l.b16 %v635
        %v738 = vpack.c.b16 %v731, %v730
        %v739 = vpack.c.b16 %v733, %v732
        %v740 = vpack.c.b16 %v735, %v734
        %v741 = vpack.c.b16 %v737, %v736
        %v778 = vunpack.c.l.b16 %v636
        %v779 = vunpack.c.h.b16 %v636
        %v780 = vunpack.c.l.b16 %v637
        %v781 = vunpack.c.h.b16 %v637
        %v782 = vunpack.c.l.b16 %v638
        %v783 = vunpack.c.h.b16 %v638
        %v784 = vunpack.c.l.b16 %v639
        %v785 = vunpack.c.h.b16 %v639
        %v786 = vunpack.c.l.b16 %v640
        %v787 = vunpack.c.h.b16 %v640
        %v788 = vunpack.c.l.b16 %v641
        %v789 = vunpack.c.h.b16 %v641
        %v790 = vunpack.c.l.b16 %v642
        %v791 = vunpack.c.h.b16 %v642
        %v792 = vunpack.c.l.b16 %v643
        %v793 = vunpack.c.h.b16 %v643
        %v794 = vunpack.c.l.b16 %v644
        %v795 = vunpack.c.h.b16 %v644
        %v796 = vunpack.c.l.b16 %v645
        %v797 = vunpack.c.h.b16 %v645
        %v798 = vunpack.c.l.b16 %v646
        %v799 = vunpack.c.h.b16 %v646
        %v800 = vunpack.c.l.b16 %v647
        %v801 = vunpack.c.h.b16 %v647
        %v802 = vunpack.c.l.b16 %v648
        %v803 = vunpack.c.h.b16 %v648
        %v804 = vunpack.c.l.b16 %v649
        %v805 = vunpack.c.h.b16 %v649
        %v806 = vunpack.c.l.b16 %v650
        %v807 = vunpack.c.h.b16 %v650
        %v808 = vunpack.c.l.b16 %v651
        %v809 = vunpack.c.h.b16 %v651
        %v810 = vunpack.c.l.b16 %v652
        %v811 = vunpack.c.h.b16 %v652
        %v812 = vunpack.c.l.b16 %v653
        %v813 = vunpack.c.h.b16 %v653
        %v814 = vunpack.c.l.b16 %v654
        %v815 = vunpack.c.h.b16 %v654
        %v816 = vunpack.c.l.b16 %v655
        %v817 = vunpack.c.h.b16 %v655
        %v818 = vunpack.c.l.b16 %v656
        %v819 = vunpack.c.h.b16 %v656
        %v820 = vunpack.c.l.b16 %v657
        %v821 = vunpack.c.h.b16 %v657
        %v822 = vunpack.c.l.b16 %v658
        %v823 = vunpack.c.h.b16 %v658
        %v824 = vunpack.c.l.b16 %v659
        %v825 = vunpack.c.h.b16 %v659
        %v826 = vunpack.c.l.b16 %v660
        %v827 = vunpack.c.h.b16 %v660
        %v828 = vunpack.c.l.b16 %v661
        %v829 = vunpack.c.h.b16 %v661
        %v830 = vunpack.c.l.b16 %v662
        %v831 = vunpack.c.h.b16 %v662
        %v832 = vunpack.c.l.b16 %v663
        %v833 = vunpack.c.h.b16 %v663
        %v834 = vunpack.c.l.b16 %v664
        %v835 = vunpack.c.h.b16 %v664
        %v836 = vunpack.c.l.b16 %v665
        %v837 = vunpack.c.h.b16 %v665
        %v838 = vunpack.c.l.b16 %v666
        %v839 = vunpack.c.h.b16 %v666
        %v840 = vunpack.c.l.b16 %v667
        %v841 = vunpack.c.h.b16 %v667
        %v842 = vpack.c.b16 %v782, %v778
        %v843 = vpack.c.b16 %v783, %v779
        %v844 = vpack.c.b16 %v784, %v780
        %v845 = vpack.c.b16 %v785, %v781
        %v846 = vpack.c.b16 %v790, %v786
        %v847 = vpack.c.b16 %v791, %v787
        %v848 = vpack.c.b16 %v792, %v788
        %v849 = vpack.c.b16 %v793, %v789
        %v850 = vpack.c.b16 %v798, %v794
        %v851 = vpack.c.b16 %v799, %v795
        %v852 = vpack.c.b16 %v800, %v796
        %v853 = vpack.c.b16 %v801, %v797
        %v854 = vpack.c.b16 %v806, %v802
        %v855 = vpack.c.b16 %v807, %v803
        %v856 = vpack.c.b16 %v808, %v804
        %v857 = vpack.c.b16 %v809, %v805
        %v858 = vpack.c.b16 %v814, %v810
        %v859 = vpack.c.b16 %v815, %v811
        %v860 = vpack.c.b16 %v816, %v812
        %v861 = vpack.c.b16 %v817, %v813
        %v862 = vpack.c.b16 %v822, %v818
        %v863 = vpack.c.b16 %v823, %v819
        %v864 = vpack.c.b16 %v824, %v820
        %v865 = vpack.c.b16 %v825, %v821
        %v866 = vpack.c.b16 %v830, %v826
        %v867 = vpack.c.b16 %v831, %v827
        %v868 = vpack.c.b16 %v832, %v828
        %v869 = vpack.c.b16 %v833, %v829
        %v870 = vpack.c.b16 %v838, %v834
        %v871 = vpack.c.b16 %v839, %v835
        %v872 = vpack.c.b16 %v840, %v836
        %v873 = vpack.c.b16 %v841, %v837
        %906 = vmatprep.subr.bf16.mxu0 %v871
        %907 = vmatpush1.bf16.msra.mxu0 %v870
        %908 = vmatprep.subr.bf16.mxu0 %v867
        %909 = vmatpush1.bf16.msra.mxu0 %v866
        %910 = vmatprep.subr.bf16.mxu0 %v863
        %911 = vmatpush1.bf16.msra.mxu0 %v862
        %912 = vmatprep.subr.bf16.mxu0 %v859
        %913 = vmatpush1.bf16.msra.mxu0 %v858
        %914 = vmatprep.subr.bf16.mxu0 %v855
        %915 = vmatpush1.bf16.msra.mxu0 %v854
        %916 = vmatprep.subr.bf16.mxu0 %v851
        %917 = vmatpush1.bf16.msra.mxu0 %v850
        %918 = vmatprep.subr.bf16.mxu0 %v847
        %919 = vmatpush1.bf16.msra.mxu0 %v846
        %920 = vmatprep.subr.bf16.mxu0 %v843
        %921 = vmatpush1.bf16.msra.mxu0 %v842
        %922 = vmatprep.subr.bf16.mxu0 0
        %923 = vmatpush2.bf16.msra.mxu0 0
        %924 = vmatprep.subr.bf16.mxu0 0
        %925 = vmatpush2.bf16.msra.mxu0 0
        %926 = vmatprep.subr.bf16.mxu0 0
        %927 = vmatpush2.bf16.msra.mxu0 0
        %928 = vmatprep.subr.bf16.mxu0 0
        %929 = vmatpush2.bf16.msra.mxu0 0
        %930 = vmatprep.subr.bf16.mxu0 0
        %931 = vmatpush2.bf16.msra.mxu0 0
        %932 = vmatprep.subr.bf16.mxu0 0
        %933 = vmatpush2.bf16.msra.mxu0 0
        %934 = vmatprep.subr.bf16.mxu0 0
        %935 = vmatpush2.bf16.msra.mxu0 0
        %936 = vmatprep.subr.bf16.mxu0 0
        %937 = vmatpush2.bf16.msra.mxu0 0
        %938 = vmatprep.mubr.bf16.mxu0 0
        %939 = vmatmul.mubr.bf16.gmra.mxu0 %v738
        %v940 = vpop.f32.mrf.mxu0
        %v941 = vadd.f32 %v705, %v940
        %v942 = vpop.f32.mrf.mxu0
        %v943 = vadd.f32 %v709, %v942
        %v944 = vpop.f32.mrf.mxu0
        %v945 = vadd.f32 %v705, %v944
        %v946 = vpop.f32.mrf.mxu0
        %v947 = vadd.f32 %v709, %v946
        %948 = vmatprep.mubr.bf16.mxu0 0
        %949 = vmatmul.mubr.bf16.gmra.mxu0 %v739
        %v950 = vpop.f32.mrf.mxu0
        %v951 = vadd.f32 %v705, %v950
        %v952 = vpop.f32.mrf.mxu0
        %v953 = vadd.f32 %v709, %v952
        %v954 = vpop.f32.mrf.mxu0
        %v955 = vadd.f32 %v705, %v954
        %v956 = vpop.f32.mrf.mxu0
        %v957 = vadd.f32 %v709, %v956
        %958 = vmatprep.mubr.bf16.mxu0 0
        %959 = vmatmul.mubr.bf16.gmra.mxu0 %v740
        %v960 = vpop.f32.mrf.mxu0
        %v961 = vadd.f32 %v705, %v960
        %v962 = vpop.f32.mrf.mxu0
        %v963 = vadd.f32 %v709, %v962
        %v964 = vpop.f32.mrf.mxu0
        %v965 = vadd.f32 %v705, %v964
        %v966 = vpop.f32.mrf.mxu0
        %v967 = vadd.f32 %v709, %v966
        %968 = vmatprep.mubr.bf16.mxu0 0
        %969 = vmatmul.mubr.bf16.gmra.mxu0 %v741
        %v970 = vpop.f32.mrf.mxu0
        %v971 = vadd.f32 %v705, %v970
        %v972 = vpop.f32.mrf.mxu0
        %v973 = vadd.f32 %v709, %v972
        %v974 = vpop.f32.mrf.mxu0
        %v975 = vadd.f32 %v705, %v974
        %v976 = vpop.f32.mrf.mxu0
        %v977 = vadd.f32 %v709, %v976
        %978 = vdwg.mxu0
        %979 = vmatprep.subr.bf16.mxu0 %v873
        %980 = vmatpush1.bf16.msra.mxu0 %v872
        %981 = vmatprep.subr.bf16.mxu0 %v869
        %982 = vmatpush1.bf16.msra.mxu0 %v868
        %983 = vmatprep.subr.bf16.mxu0 %v865
        %984 = vmatpush1.bf16.msra.mxu0 %v864
        %985 = vmatprep.subr.bf16.mxu0 %v861
        %986 = vmatpush1.bf16.msra.mxu0 %v860
        %987 = vmatprep.subr.bf16.mxu0 %v857
        %988 = vmatpush1.bf16.msra.mxu0 %v856
        %989 = vmatprep.subr.bf16.mxu0 %v853
        %990 = vmatpush1.bf16.msra.mxu0 %v852
        %991 = vmatprep.subr.bf16.mxu0 %v849
        %992 = vmatpush1.bf16.msra.mxu0 %v848
        %993 = vmatprep.subr.bf16.mxu0 %v845
        %994 = vmatpush1.bf16.msra.mxu0 %v844
        %995 = vmatprep.subr.bf16.mxu0 0
        %996 = vmatpush2.bf16.msra.mxu0 0
        %997 = vmatprep.subr.bf16.mxu0 0
        %998 = vmatpush2.bf16.msra.mxu0 0
        %999 = vmatprep.subr.bf16.mxu0 0
        %1000 = vmatpush2.bf16.msra.mxu0 0
        %1001 = vmatprep.subr.bf16.mxu0 0
        %1002 = vmatpush2.bf16.msra.mxu0 0
        %1003 = vmatprep.subr.bf16.mxu0 0
        %1004 = vmatpush2.bf16.msra.mxu0 0
        %1005 = vmatprep.subr.bf16.mxu0 0
        %1006 = vmatpush2.bf16.msra.mxu0 0
        %1007 = vmatprep.subr.bf16.mxu0 0
        %1008 = vmatpush2.bf16.msra.mxu0 0
        %1009 = vmatprep.subr.bf16.mxu0 0
        %1010 = vmatpush2.bf16.msra.mxu0 0
        %1011 = vmatprep.mubr.bf16.mxu0 0
        %1012 = vmatmul.mubr.bf16.gmra.mxu0 %v738
        %v1013 = vpop.f32.mrf.mxu0
        %v1014 = vadd.f32 %v713, %v1013
        %v1015 = vpop.f32.mrf.mxu0
        %v1016 = vadd.f32 %v717, %v1015
        %v1017 = vpop.f32.mrf.mxu0
        %v1018 = vadd.f32 %v713, %v1017
        %v1019 = vpop.f32.mrf.mxu0
        %v1020 = vadd.f32 %v717, %v1019
        %1021 = vmatprep.mubr.bf16.mxu0 0
        %1022 = vmatmul.mubr.bf16.gmra.mxu0 %v739
        %v1023 = vpop.f32.mrf.mxu0
        %v1024 = vadd.f32 %v713, %v1023
        %v1025 = vpop.f32.mrf.mxu0
        %v1026 = vadd.f32 %v717, %v1025
        %v1027 = vpop.f32.mrf.mxu0
        %v1028 = vadd.f32 %v713, %v1027
        %v1029 = vpop.f32.mrf.mxu0
        %v1030 = vadd.f32 %v717, %v1029
        %1031 = vmatprep.mubr.bf16.mxu0 0
        %1032 = vmatmul.mubr.bf16.gmra.mxu0 %v740
        %v1033 = vpop.f32.mrf.mxu0
        %v1034 = vadd.f32 %v713, %v1033
        %v1035 = vpop.f32.mrf.mxu0
        %v1036 = vadd.f32 %v717, %v1035
        %v1037 = vpop.f32.mrf.mxu0
        %v1038 = vadd.f32 %v713, %v1037
        %v1039 = vpop.f32.mrf.mxu0
        %v1040 = vadd.f32 %v717, %v1039
        %1041 = vmatprep.mubr.bf16.mxu0 0
        %1042 = vmatmul.mubr.bf16.gmra.mxu0 %v741
        %v1043 = vpop.f32.mrf.mxu0
        %v1044 = vadd.f32 %v713, %v1043
        %v1045 = vpop.f32.mrf.mxu0
        %v1046 = vadd.f32 %v717, %v1045
        %v1047 = vpop.f32.mrf.mxu0
        %v1048 = vadd.f32 %v713, %v1047
        %v1049 = vpop.f32.mrf.mxu0
        %v1050 = vadd.f32 %v717, %v1049
        %1051 = vdwg.mxu0
        %1052 = vst [vmem:[#allocation2] sm:$0xff] %v941
        %1053 = vst [vmem:[#allocation2 + $0x8] sm:$0xff] %v943
        %1054 = vst [vmem:[#allocation2 + $0x10] sm:$0xff] %v1014
        %1055 = vst [vmem:[#allocation2 + $0x18] sm:$0xff] %v1016
        %1056 = vst [vmem:[#allocation2 + $0x20] sm:$0xff] %v945
        %1057 = vst [vmem:[#allocation2 + $0x28] sm:$0xff] %v947
        %1058 = vst [vmem:[#allocation2 + $0x30] sm:$0xff] %v1018
        %1059 = vst [vmem:[#allocation2 + $0x38] sm:$0xff] %v1020
        %1060 = vst [vmem:[#allocation2 + $0x40] sm:$0xff] %v951
        %1061 = vst [vmem:[#allocation2 + $0x48] sm:$0xff] %v953
        %1062 = vst [vmem:[#allocation2 + $0x50] sm:$0xff] %v1024
        %1063 = vst [vmem:[#allocation2 + $0x58] sm:$0xff] %v1026
        %1064 = vst [vmem:[#allocation2 + $0x60] sm:$0xff] %v955
        %1065 = vst [vmem:[#allocation2 + $0x68] sm:$0xff] %v957
        %1066 = vst [vmem:[#allocation2 + $0x70] sm:$0xff] %v1028
        %1067 = vst [vmem:[#allocation2 + $0x78] sm:$0xff] %v1030
        %1068 = vst [vmem:[#allocation2 + $0x80] sm:$0xff] %v961
        %1069 = vst [vmem:[#allocation2 + $0x88] sm:$0xff] %v963
        %1070 = vst [vmem:[#allocation2 + $0x90] sm:$0xff] %v1034
        %1071 = vst [vmem:[#allocation2 + $0x98] sm:$0xff] %v1036
        %1072 = vst [vmem:[#allocation2 + $0xa0] sm:$0xff] %v965
        %1073 = vst [vmem:[#allocation2 + $0xa8] sm:$0xff] %v967
        %1074 = vst [vmem:[#allocation2 + $0xb0] sm:$0xff] %v1038
        %1075 = vst [vmem:[#allocation2 + $0xb8] sm:$0xff] %v1040
        %1076 = vst [vmem:[#allocation2 + $0xc0] sm:$0xff] %v971
        %1077 = vst [vmem:[#allocation2 + $0xc8] sm:$0xff] %v973
        %1078 = vst [vmem:[#allocation2 + $0xd0] sm:$0xff] %v1044
        %1079 = vst [vmem:[#allocation2 + $0xd8] sm:$0xff] %v1046
        %1080 = vst [vmem:[#allocation2 + $0xe0] sm:$0xff] %v975
        %1081 = vst [vmem:[#allocation2 + $0xe8] sm:$0xff] %v977
        %1082 = vst [vmem:[#allocation2 + $0xf0] sm:$0xff] %v1048
        %1083 = vst [vmem:[#allocation2 + $0xf8] sm:$0xff] %v1050
        %v1084 = vld [vmem:[%s585] sm:$0xff]
        %v1085 = vld [vmem:[%s585 + $0x8] sm:$0xff]
        %v1086 = vld [vmem:[%s591] sm:$0xff]
        %v1087 = vld [vmem:[%s591 + $0x8] sm:$0xff]
        %v1088 = vpack.c.bf16 %v1085, %v1084
        %v1089 = vstv %s600
        %vm1090 = vcmp.gt.s32.totalorder %v626, %v1089
        %vm1091 = vcmp.gt.s32.totalorder %v627, %v1089
        %v1092 = vsel %vm1090, 1, 0
        %v1093 = vsel %vm1091, 1, 0
        %1094 = vset.pattern.permute.xlu0 0
        %1095 = vperm.xlu0 %1094, %v1092
        %v1096 = vpop.permute.xlu0 %1095
        %1097 = vset.pattern.permute.xlu0 0
        %1098 = vperm.xlu0 %1097, %v1093
        %v1099 = vpop.permute.xlu0 %1098
        %vm1100 = vcmp.eq.s32.totalorder %v1096, 1
        %vm1101 = vcmp.eq.s32.totalorder %v1099, 1
        %s1102 = smul.u32 0, 4
        %s1103 = smul.addr %s1102, 8
        %s1104 = scalar_lea.vmem [#allocation2], %s1103
        %v1105 = vld [vmem:[%s1104] sm:$0xff]
        %v1106 = vld [vmem:[%s1104 + $0x8] sm:$0xff]
        %v1107 = vld [vmem:[%s1104 + $0x10] sm:$0xff]
        %v1108 = vld [vmem:[%s1104 + $0x18] sm:$0xff]
        %v1109 = vld [vmem:[%s1104 + $0x20] sm:$0xff]
        %v1110 = vld [vmem:[%s1104 + $0x28] sm:$0xff]
        %v1111 = vld [vmem:[%s1104 + $0x30] sm:$0xff]
        %v1112 = vld [vmem:[%s1104 + $0x38] sm:$0xff]
        %v1145 = vunpack.c.l.b16 %v668
        %v1146 = vunpack.c.h.b16 %v668
        %v1147 = vunpack.c.l.b16 %v669
        %v1148 = vunpack.c.h.b16 %v669
        %v1149 = vunpack.c.l.b16 %v670
        %v1150 = vunpack.c.h.b16 %v670
        %v1151 = vunpack.c.l.b16 %v671
        %v1152 = vunpack.c.h.b16 %v671
        %v1153 = vunpack.c.l.b16 %v672
        %v1154 = vunpack.c.h.b16 %v672
        %v1155 = vunpack.c.l.b16 %v673
        %v1156 = vunpack.c.h.b16 %v673
        %v1157 = vunpack.c.l.b16 %v674
        %v1158 = vunpack.c.h.b16 %v674
        %v1159 = vunpack.c.l.b16 %v675
        %v1160 = vunpack.c.h.b16 %v675
        %v1161 = vunpack.c.l.b16 %v676
        %v1162 = vunpack.c.h.b16 %v676
        %v1163 = vunpack.c.l.b16 %v677
        %v1164 = vunpack.c.h.b16 %v677
        %v1165 = vunpack.c.l.b16 %v678
        %v1166 = vunpack.c.h.b16 %v678
        %v1167 = vunpack.c.l.b16 %v679
        %v1168 = vunpack.c.h.b16 %v679
        %v1169 = vunpack.c.l.b16 %v680
        %v1170 = vunpack.c.h.b16 %v680
        %v1171 = vunpack.c.l.b16 %v681
        %v1172 = vunpack.c.h.b16 %v681
        %v1173 = vunpack.c.l.b16 %v682
        %v1174 = vunpack.c.h.b16 %v682
        %v1175 = vunpack.c.l.b16 %v683
        %v1176 = vunpack.c.h.b16 %v683
        %v1177 = vunpack.c.l.b16 %v684
        %v1178 = vunpack.c.h.b16 %v684
        %v1179 = vunpack.c.l.b16 %v685
        %v1180 = vunpack.c.h.b16 %v685
        %v1181 = vunpack.c.l.b16 %v686
        %v1182 = vunpack.c.h.b16 %v686
        %v1183 = vunpack.c.l.b16 %v687
        %v1184 = vunpack.c.h.b16 %v687
        %v1185 = vunpack.c.l.b16 %v688
        %v1186 = vunpack.c.h.b16 %v688
        %v1187 = vunpack.c.l.b16 %v689
        %v1188 = vunpack.c.h.b16 %v689
        %v1189 = vunpack.c.l.b16 %v690
        %v1190 = vunpack.c.h.b16 %v690
        %v1191 = vunpack.c.l.b16 %v691
        %v1192 = vunpack.c.h.b16 %v691
        %v1193 = vunpack.c.l.b16 %v692
        %v1194 = vunpack.c.h.b16 %v692
        %v1195 = vunpack.c.l.b16 %v693
        %v1196 = vunpack.c.h.b16 %v693
        %v1197 = vunpack.c.l.b16 %v694
        %v1198 = vunpack.c.h.b16 %v694
        %v1199 = vunpack.c.l.b16 %v695
        %v1200 = vunpack.c.h.b16 %v695
        %v1201 = vunpack.c.l.b16 %v696
        %v1202 = vunpack.c.h.b16 %v696
        %v1203 = vunpack.c.l.b16 %v697
        %v1204 = vunpack.c.h.b16 %v697
        %v1205 = vunpack.c.l.b16 %v698
        %v1206 = vunpack.c.h.b16 %v698
        %v1207 = vunpack.c.l.b16 %v699
        %v1208 = vunpack.c.h.b16 %v699
        %v1209 = vpack.c.b16 %v1149, %v1145
        %v1210 = vpack.c.b16 %v1150, %v1146
        %v1211 = vpack.c.b16 %v1151, %v1147
        %v1212 = vpack.c.b16 %v1152, %v1148
        %v1213 = vpack.c.b16 %v1157, %v1153
        %v1214 = vpack.c.b16 %v1158, %v1154
        %v1215 = vpack.c.b16 %v1159, %v1155
        %v1216 = vpack.c.b16 %v1160, %v1156
        %v1217 = vpack.c.b16 %v1165, %v1161
        %v1218 = vpack.c.b16 %v1166, %v1162
        %v1219 = vpack.c.b16 %v1167, %v1163
        %v1220 = vpack.c.b16 %v1168, %v1164
        %v1221 = vpack.c.b16 %v1173, %v1169
        %v1222 = vpack.c.b16 %v1174, %v1170
        %v1223 = vpack.c.b16 %v1175, %v1171
        %v1224 = vpack.c.b16 %v1176, %v1172
        %v1225 = vpack.c.b16 %v1181, %v1177
        %v1226 = vpack.c.b16 %v1182, %v1178
        %v1227 = vpack.c.b16 %v1183, %v1179
        %v1228 = vpack.c.b16 %v1184, %v1180
        %v1229 = vpack.c.b16 %v1189, %v1185
        %v1230 = vpack.c.b16 %v1190, %v1186
        %v1231 = vpack.c.b16 %v1191, %v1187
        %v1232 = vpack.c.b16 %v1192, %v1188
        %v1233 = vpack.c.b16 %v1197, %v1193
        %v1234 = vpack.c.b16 %v1198, %v1194
        %v1235 = vpack.c.b16 %v1199, %v1195
        %v1236 = vpack.c.b16 %v1200, %v1196
        %v1237 = vpack.c.b16 %v1205, %v1201
        %v1238 = vpack.c.b16 %v1206, %v1202
        %v1239 = vpack.c.b16 %v1207, %v1203
        %v1240 = vpack.c.b16 %v1208, %v1204
        %1273 = vmatprep.subr.bf16.mxu0 %v1238
        %1274 = vmatpush1.bf16.msra.mxu0 %v1237
        %1275 = vmatprep.subr.bf16.mxu0 %v1234
        %1276 = vmatpush1.bf16.msra.mxu0 %v1233
        %1277 = vmatprep.subr.bf16.mxu0 %v1230
        %1278 = vmatpush1.bf16.msra.mxu0 %v1229
        %1279 = vmatprep.subr.bf16.mxu0 %v1226
        %1280 = vmatpush1.bf16.msra.mxu0 %v1225
        %1281 = vmatprep.subr.bf16.mxu0 %v1222
        %1282 = vmatpush1.bf16.msra.mxu0 %v1221
        %1283 = vmatprep.subr.bf16.mxu0 %v1218
        %1284 = vmatpush1.bf16.msra.mxu0 %v1217
        %1285 = vmatprep.subr.bf16.mxu0 %v1214
        %1286 = vmatpush1.bf16.msra.mxu0 %v1213
        %1287 = vmatprep.subr.bf16.mxu0 %v1210
        %1288 = vmatpush1.bf16.msra.mxu0 %v1209
        %1289 = vmatprep.subr.bf16.mxu0 0
        %1290 = vmatpush2.bf16.msra.mxu0 0
        %1291 = vmatprep.subr.bf16.mxu0 0
        %1292 = vmatpush2.bf16.msra.mxu0 0
        %1293 = vmatprep.subr.bf16.mxu0 0
        %1294 = vmatpush2.bf16.msra.mxu0 0
        %1295 = vmatprep.subr.bf16.mxu0 0
        %1296 = vmatpush2.bf16.msra.mxu0 0
        %1297 = vmatprep.subr.bf16.mxu0 0
        %1298 = vmatpush2.bf16.msra.mxu0 0
        %1299 = vmatprep.subr.bf16.mxu0 0
        %1300 = vmatpush2.bf16.msra.mxu0 0
        %1301 = vmatprep.subr.bf16.mxu0 0
        %1302 = vmatpush2.bf16.msra.mxu0 0
        %1303 = vmatprep.subr.bf16.mxu0 0
        %1304 = vmatpush2.bf16.msra.mxu0 0
        %1305 = vmatprep.mubr.bf16.mxu0 0
        %1306 = vmatmul.mubr.bf16.gmra.mxu0 %v1088
        %v1307 = vpop.f32.mrf.mxu0
        %v1308 = vadd.f32 0.0, %v1307
        %v1309 = vpop.f32.mrf.mxu0
        %v1310 = vadd.f32 0.0, %v1309
        %v1311 = vpop.f32.mrf.mxu0
        %v1312 = vadd.f32 0.0, %v1311
        %v1313 = vpop.f32.mrf.mxu0
        %v1314 = vadd.f32 0.0, %v1313
        %1315 = vdwg.mxu0
        %1316 = vmatprep.subr.bf16.mxu0 %v1240
        %1317 = vmatpush1.bf16.msra.mxu0 %v1239
        %1318 = vmatprep.subr.bf16.mxu0 %v1236
        %1319 = vmatpush1.bf16.msra.mxu0 %v1235
        %1320 = vmatprep.subr.bf16.mxu0 %v1232
        %1321 = vmatpush1.bf16.msra.mxu0 %v1231
        %1322 = vmatprep.subr.bf16.mxu0 %v1228
        %1323 = vmatpush1.bf16.msra.mxu0 %v1227
        %1324 = vmatprep.subr.bf16.mxu0 %v1224
        %1325 = vmatpush1.bf16.msra.mxu0 %v1223
        %1326 = vmatprep.subr.bf16.mxu0 %v1220
        %1327 = vmatpush1.bf16.msra.mxu0 %v1219
        %1328 = vmatprep.subr.bf16.mxu0 %v1216
        %1329 = vmatpush1.bf16.msra.mxu0 %v1215
        %1330 = vmatprep.subr.bf16.mxu0 %v1212
        %1331 = vmatpush1.bf16.msra.mxu0 %v1211
        %1332 = vmatprep.subr.bf16.mxu0 0
        %1333 = vmatpush2.bf16.msra.mxu0 0
        %1334 = vmatprep.subr.bf16.mxu0 0
        %1335 = vmatpush2.bf16.msra.mxu0 0
        %1336 = vmatprep.subr.bf16.mxu0 0
        %1337 = vmatpush2.bf16.msra.mxu0 0
        %1338 = vmatprep.subr.bf16.mxu0 0
        %1339 = vmatpush2.bf16.msra.mxu0 0
        %1340 = vmatprep.subr.bf16.mxu0 0
        %1341 = vmatpush2.bf16.msra.mxu0 0
        %1342 = vmatprep.subr.bf16.mxu0 0
        %1343 = vmatpush2.bf16.msra.mxu0 0
        %1344 = vmatprep.subr.bf16.mxu0 0
        %1345 = vmatpush2.bf16.msra.mxu0 0
        %1346 = vmatprep.subr.bf16.mxu0 0
        %1347 = vmatpush2.bf16.msra.mxu0 0
        %1348 = vmatprep.mubr.bf16.mxu0 0
        %1349 = vmatmul.mubr.bf16.gmra.mxu0 %v1088
        %v1350 = vpop.f32.mrf.mxu0
        %v1351 = vadd.f32 0.0, %v1350
        %v1352 = vpop.f32.mrf.mxu0
        %v1353 = vadd.f32 0.0, %v1352
        %v1354 = vpop.f32.mrf.mxu0
        %v1355 = vadd.f32 0.0, %v1354
        %v1356 = vpop.f32.mrf.mxu0
        %v1357 = vadd.f32 0.0, %v1356
        %1358 = vdwg.mxu0
        %v1359 = vadd.f32 %v1105, %v1308
        %v1360 = vadd.f32 %v1106, %v1310
        %v1361 = vadd.f32 %v1107, %v1351
        %v1362 = vadd.f32 %v1108, %v1353
        %v1363 = vadd.f32 %v1109, %v1312
        %v1364 = vadd.f32 %v1110, %v1314
        %v1365 = vadd.f32 %v1111, %v1355
        %v1366 = vadd.f32 %v1112, %v1357
        %v1367 = vmul.f32 %v1359, 0.5
        %v1368 = vmul.f32 %v1363, 0.5
        %v1369 = vtanh.pop %v1367
        %v1370 = vtanh.pop %v1368
        %v1371 = vmul.f32 %v1369, 0.5
        %v1372 = vmul.f32 %v1370, 0.5
        %v1373 = vadd.f32 %v1371, 0.5
        %v1374 = vadd.f32 %v1372, 0.5
        %v1375 = vmul.f32 %v1360, 0.5
        %v1376 = vmul.f32 %v1364, 0.5
        %v1377 = vtanh.pop %v1375
        %v1378 = vtanh.pop %v1376
        %v1379 = vmul.f32 %v1377, 0.5
        %v1380 = vmul.f32 %v1378, 0.5
        %v1381 = vadd.f32 %v1379, 0.5
        %v1382 = vadd.f32 %v1380, 0.5
        %v1383 = vtanh.pop %v1361
        %v1384 = vtanh.pop %v1365
        %v1385 = vmul.f32 %v1362, 0.5
        %v1386 = vmul.f32 %v1366, 0.5
        %v1387 = vtanh.pop %v1385
        %v1388 = vtanh.pop %v1386
        %v1389 = vmul.f32 %v1387, 0.5
        %v1390 = vmul.f32 %v1388, 0.5
        %v1391 = vadd.f32 %v1389, 0.5
        %v1392 = vadd.f32 %v1390, 0.5
        %v1393 = vmul.f32 %v1381, %v1086
        %v1394 = vmul.f32 %v1382, %v1087
        %v1395 = vmul.f32 %v1373, %v1383
        %v1396 = vmul.f32 %v1374, %v1384
        %v1397 = vadd.f32 %v1393, %v1395
        %v1398 = vadd.f32 %v1394, %v1396
        %v1399 = vtanh.pop %v1397
        %v1400 = vtanh.pop %v1398
        %v1401 = vmul.f32 %v1391, %v1399
        %v1402 = vmul.f32 %v1392, %v1400
        %v1403 = vsel %vm1100, %v1401, %v1084
        %v1404 = vsel %vm1101, %v1402, %v1085
        %v1405 = vsel %vm1100, %v1397, %v1086
        %v1406 = vsel %vm1101, %v1398, %v1087
        %v1407 = vpack.c.bf16 %v1404, %v1403
        %v1409 = vunpack.c.l.b16 %v1407
        %v1410 = vunpack.c.h.b16 %v1407
        %v1411 = vpack.c.b16 %v1409, %v1409
        %v1412 = vpack.c.b16 %v1410, %v1410
        %1415 = vst [vmem:[#allocation3] sm:$0xf] %v1411
        %1416 = vst [vmem:[#allocation3 + $0x4] sm:$0xf] %v1412
        %s1417 = sadd.s32 %s600, 1
        %v1418 = vstv %s1417
        %vm1419 = vcmp.gt.s32.totalorder %v626, %v1418
        %vm1420 = vcmp.gt.s32.totalorder %v627, %v1418
        %v1421 = vsel %vm1419, 1, 0
        %v1422 = vsel %vm1420, 1, 0
        %1423 = vset.pattern.permute.xlu0 0
        %1424 = vperm.xlu0 %1423, %v1421
        %v1425 = vpop.permute.xlu0 %1424
        %1426 = vset.pattern.permute.xlu0 0
        %1427 = vperm.xlu0 %1426, %v1422
        %v1428 = vpop.permute.xlu0 %1427
        %vm1429 = vcmp.eq.s32.totalorder %v1425, 1
        %vm1430 = vcmp.eq.s32.totalorder %v1428, 1
        %s1431 = smul.u32 2, 4
        %s1432 = smul.addr %s1431, 8
        %s1433 = scalar_lea.vmem [#allocation2], %s1432
        %v1434 = vld [vmem:[%s1433] sm:$0xff]
        %v1435 = vld [vmem:[%s1433 + $0x8] sm:$0xff]
        %v1436 = vld [vmem:[%s1433 + $0x10] sm:$0xff]
        %v1437 = vld [vmem:[%s1433 + $0x18] sm:$0xff]
        %v1438 = vld [vmem:[%s1433 + $0x20] sm:$0xff]
        %v1439 = vld [vmem:[%s1433 + $0x28] sm:$0xff]
        %v1440 = vld [vmem:[%s1433 + $0x30] sm:$0xff]
        %v1441 = vld [vmem:[%s1433 + $0x38] sm:$0xff]
        %1442 = vmatprep.subr.bf16.mxu0 %v1238
        %1443 = vmatpush1.bf16.msra.mxu0 %v1237
        %1444 = vmatprep.subr.bf16.mxu0 %v1234
        %1445 = vmatpush1.bf16.msra.mxu0 %v1233
        %1446 = vmatprep.subr.bf16.mxu0 %v1230
        %1447 = vmatpush1.bf16.msra.mxu0 %v1229
        %1448 = vmatprep.subr.bf16.mxu0 %v1226
        %1449 = vmatpush1.bf16.msra.mxu0 %v1225
        %1450 = vmatprep.subr.bf16.mxu0 %v1222
        %1451 = vmatpush1.bf16.msra.mxu0 %v1221
        %1452 = vmatprep.subr.bf16.mxu0 %v1218
        %1453 = vmatpush1.bf16.msra.mxu0 %v1217
        %1454 = vmatprep.subr.bf16.mxu0 %v1214
        %1455 = vmatpush1.bf16.msra.mxu0 %v1213
        %1456 = vmatprep.subr.bf16.mxu0 %v1210
        %1457 = vmatpush1.bf16.msra.mxu0 %v1209
        %1458 = vmatprep.subr.bf16.mxu0 0
        %1459 = vmatpush2.bf16.msra.mxu0 0
        %1460 = vmatprep.subr.bf16.mxu0 0
        %1461 = vmatpush2.bf16.msra.mxu0 0
        %1462 = vmatprep.subr.bf16.mxu0 0
        %1463 = vmatpush2.bf16.msra.mxu0 0
        %1464 = vmatprep.subr.bf16.mxu0 0
        %1465 = vmatpush2.bf16.msra.mxu0 0
        %1466 = vmatprep.subr.bf16.mxu0 0
        %1467 = vmatpush2.bf16.msra.mxu0 0
        %1468 = vmatprep.subr.bf16.mxu0 0
        %1469 = vmatpush2.bf16.msra.mxu0 0
        %1470 = vmatprep.subr.bf16.mxu0 0
        %1471 = vmatpush2.bf16.msra.mxu0 0
        %1472 = vmatprep.subr.bf16.mxu0 0
        %1473 = vmatpush2.bf16.msra.mxu0 0
        %1474 = vmatprep.mubr.bf16.mxu0 0
        %1475 = vmatmul.mubr.bf16.gmra.mxu0 %v1407
        %v1476 = vpop.f32.mrf.mxu0
        %v1477 = vadd.f32 0.0, %v1476
        %v1478 = vpop.f32.mrf.mxu0
        %v1479 = vadd.f32 0.0, %v1478
        %v1480 = vpop.f32.mrf.mxu0
        %v1481 = vadd.f32 0.0, %v1480
        %v1482 = vpop.f32.mrf.mxu0
        %v1483 = vadd.f32 0.0, %v1482
        %1484 = vdwg.mxu0
        %1485 = vmatprep.subr.bf16.mxu0 %v1240
        %1486 = vmatpush1.bf16.msra.mxu0 %v1239
        %1487 = vmatprep.subr.bf16.mxu0 %v1236
        %1488 = vmatpush1.bf16.msra.mxu0 %v1235
        %1489 = vmatprep.subr.bf16.mxu0 %v1232
        %1490 = vmatpush1.bf16.msra.mxu0 %v1231
        %1491 = vmatprep.subr.bf16.mxu0 %v1228
        %1492 = vmatpush1.bf16.msra.mxu0 %v1227
        %1493 = vmatprep.subr.bf16.mxu0 %v1224
        %1494 = vmatpush1.bf16.msra.mxu0 %v1223
        %1495 = vmatprep.subr.bf16.mxu0 %v1220
        %1496 = vmatpush1.bf16.msra.mxu0 %v1219
        %1497 = vmatprep.subr.bf16.mxu0 %v1216
        %1498 = vmatpush1.bf16.msra.mxu0 %v1215
        %1499 = vmatprep.subr.bf16.mxu0 %v1212
        %1500 = vmatpush1.bf16.msra.mxu0 %v1211
        %1501 = vmatprep.subr.bf16.mxu0 0
        %1502 = vmatpush2.bf16.msra.mxu0 0
        %1503 = vmatprep.subr.bf16.mxu0 0
        %1504 = vmatpush2.bf16.msra.mxu0 0
        %1505 = vmatprep.subr.bf16.mxu0 0
        %1506 = vmatpush2.bf16.msra.mxu0 0
        %1507 = vmatprep.subr.bf16.mxu0 0
        %1508 = vmatpush2.bf16.msra.mxu0 0
        %1509 = vmatprep.subr.bf16.mxu0 0
        %1510 = vmatpush2.bf16.msra.mxu0 0
        %1511 = vmatprep.subr.bf16.mxu0 0
        %1512 = vmatpush2.bf16.msra.mxu0 0
        %1513 = vmatprep.subr.bf16.mxu0 0
        %1514 = vmatpush2.bf16.msra.mxu0 0
        %1515 = vmatprep.subr.bf16.mxu0 0
        %1516 = vmatpush2.bf16.msra.mxu0 0
        %1517 = vmatprep.mubr.bf16.mxu0 0
        %1518 = vmatmul.mubr.bf16.gmra.mxu0 %v1407
        %v1519 = vpop.f32.mrf.mxu0
        %v1520 = vadd.f32 0.0, %v1519
        %v1521 = vpop.f32.mrf.mxu0
        %v1522 = vadd.f32 0.0, %v1521
        %v1523 = vpop.f32.mrf.mxu0
        %v1524 = vadd.f32 0.0, %v1523
        %v1525 = vpop.f32.mrf.mxu0
        %v1526 = vadd.f32 0.0, %v1525
        %1527 = vdwg.mxu0
        %v1528 = vadd.f32 %v1434, %v1477
        %v1529 = vadd.f32 %v1435, %v1479
        %v1530 = vadd.f32 %v1436, %v1520
        %v1531 = vadd.f32 %v1437, %v1522
        %v1532 = vadd.f32 %v1438, %v1481
        %v1533 = vadd.f32 %v1439, %v1483
        %v1534 = vadd.f32 %v1440, %v1524
        %v1535 = vadd.f32 %v1441, %v1526
        %v1536 = vmul.f32 %v1528, 0.5
        %v1537 = vmul.f32 %v1532, 0.5
        %v1538 = vtanh.pop %v1536
        %v1539 = vtanh.pop %v1537
        %v1540 = vmul.f32 %v1538, 0.5
        %v1541 = vmul.f32 %v1539, 0.5
        %v1542 = vadd.f32 %v1540, 0.5
        %v1543 = vadd.f32 %v1541, 0.5
        %v1544 = vmul.f32 %v1529, 0.5
        %v1545 = vmul.f32 %v1533, 0.5
        %v1546 = vtanh.pop %v1544
        %v1547 = vtanh.pop %v1545
        %v1548 = vmul.f32 %v1546, 0.5
        %v1549 = vmul.f32 %v1547, 0.5
        %v1550 = vadd.f32 %v1548, 0.5
        %v1551 = vadd.f32 %v1549, 0.5
        %v1552 = vtanh.pop %v1530
        %v1553 = vtanh.pop %v1534
        %v1554 = vmul.f32 %v1531, 0.5
        %v1555 = vmul.f32 %v1535, 0.5
        %v1556 = vtanh.pop %v1554
        %v1557 = vtanh.pop %v1555
        %v1558 = vmul.f32 %v1556, 0.5
        %v1559 = vmul.f32 %v1557, 0.5
        %v1560 = vadd.f32 %v1558, 0.5
        %v1561 = vadd.f32 %v1559, 0.5
        %v1562 = vmul.f32 %v1550, %v1405
        %v1563 = vmul.f32 %v1551, %v1406
        %v1564 = vmul.f32 %v1542, %v1552
        %v1565 = vmul.f32 %v1543, %v1553
        %v1566 = vadd.f32 %v1562, %v1564
        %v1567 = vadd.f32 %v1563, %v1565
        %v1568 = vtanh.pop %v1566
        %v1569 = vtanh.pop %v1567
        %v1570 = vmul.f32 %v1560, %v1568
        %v1571 = vmul.f32 %v1561, %v1569
        %v1572 = vsel %vm1429, %v1570, %v1403
        %v1573 = vsel %vm1430, %v1571, %v1404
        %v1574 = vsel %vm1429, %v1566, %v1405
        %v1575 = vsel %vm1430, %v1567, %v1406
        %v1576 = vpack.c.bf16 %v1573, %v1572
        %v1578 = vunpack.c.l.b16 %v1576
        %v1579 = vunpack.c.h.b16 %v1576
        %v1580 = vpack.c.b16 %v1578, %v1578
        %v1581 = vpack.c.b16 %v1579, %v1579
        %s1584 = scalar_lea.vmem [#allocation3], 8
        %1585 = vst [vmem:[%s1584] sm:$0xf] %v1580
        %1586 = vst [vmem:[%s1584 + $0x4] sm:$0xf] %v1581
        %s1587 = sadd.s32 %s600, 2
        %v1588 = vstv %s1587
        %vm1589 = vcmp.gt.s32.totalorder %v626, %v1588
        %vm1590 = vcmp.gt.s32.totalorder %v627, %v1588
        %v1591 = vsel %vm1589, 1, 0
        %v1592 = vsel %vm1590, 1, 0
        %1593 = vset.pattern.permute.xlu0 0
        %1594 = vperm.xlu0 %1593, %v1591
        %v1595 = vpop.permute.xlu0 %1594
        %1596 = vset.pattern.permute.xlu0 0
        %1597 = vperm.xlu0 %1596, %v1592
        %v1598 = vpop.permute.xlu0 %1597
        %vm1599 = vcmp.eq.s32.totalorder %v1595, 1
        %vm1600 = vcmp.eq.s32.totalorder %v1598, 1
        %s1601 = smul.u32 4, 4
        %s1602 = smul.addr %s1601, 8
        %s1603 = scalar_lea.vmem [#allocation2], %s1602
        %v1604 = vld [vmem:[%s1603] sm:$0xff]
        %v1605 = vld [vmem:[%s1603 + $0x8] sm:$0xff]
        %v1606 = vld [vmem:[%s1603 + $0x10] sm:$0xff]
        %v1607 = vld [vmem:[%s1603 + $0x18] sm:$0xff]
        %v1608 = vld [vmem:[%s1603 + $0x20] sm:$0xff]
        %v1609 = vld [vmem:[%s1603 + $0x28] sm:$0xff]
        %v1610 = vld [vmem:[%s1603 + $0x30] sm:$0xff]
        %v1611 = vld [vmem:[%s1603 + $0x38] sm:$0xff]
        %1612 = vmatprep.subr.bf16.mxu0 %v1238
        %1613 = vmatpush1.bf16.msra.mxu0 %v1237
        %1614 = vmatprep.subr.bf16.mxu0 %v1234
        %1615 = vmatpush1.bf16.msra.mxu0 %v1233
        %1616 = vmatprep.subr.bf16.mxu0 %v1230
        %1617 = vmatpush1.bf16.msra.mxu0 %v1229
        %1618 = vmatprep.subr.bf16.mxu0 %v1226
        %1619 = vmatpush1.bf16.msra.mxu0 %v1225
        %1620 = vmatprep.subr.bf16.mxu0 %v1222
        %1621 = vmatpush1.bf16.msra.mxu0 %v1221
        %1622 = vmatprep.subr.bf16.mxu0 %v1218
        %1623 = vmatpush1.bf16.msra.mxu0 %v1217
        %1624 = vmatprep.subr.bf16.mxu0 %v1214
        %1625 = vmatpush1.bf16.msra.mxu0 %v1213
        %1626 = vmatprep.subr.bf16.mxu0 %v1210
        %1627 = vmatpush1.bf16.msra.mxu0 %v1209
        %1628 = vmatprep.subr.bf16.mxu0 0
        %1629 = vmatpush2.bf16.msra.mxu0 0
        %1630 = vmatprep.subr.bf16.mxu0 0
        %1631 = vmatpush2.bf16.msra.mxu0 0
        %1632 = vmatprep.subr.bf16.mxu0 0
        %1633 = vmatpush2.bf16.msra.mxu0 0
        %1634 = vmatprep.subr.bf16.mxu0 0
        %1635 = vmatpush2.bf16.msra.mxu0 0
        %1636 = vmatprep.subr.bf16.mxu0 0
        %1637 = vmatpush2.bf16.msra.mxu0 0
        %1638 = vmatprep.subr.bf16.mxu0 0
        %1639 = vmatpush2.bf16.msra.mxu0 0
        %1640 = vmatprep.subr.bf16.mxu0 0
        %1641 = vmatpush2.bf16.msra.mxu0 0
        %1642 = vmatprep.subr.bf16.mxu0 0
        %1643 = vmatpush2.bf16.msra.mxu0 0
        %1644 = vmatprep.mubr.bf16.mxu0 0
        %1645 = vmatmul.mubr.bf16.gmra.mxu0 %v1576
        %v1646 = vpop.f32.mrf.mxu0
        %v1647 = vadd.f32 0.0, %v1646
        %v1648 = vpop.f32.mrf.mxu0
        %v1649 = vadd.f32 0.0, %v1648
        %v1650 = vpop.f32.mrf.mxu0
        %v1651 = vadd.f32 0.0, %v1650
        %v1652 = vpop.f32.mrf.mxu0
        %v1653 = vadd.f32 0.0, %v1652
        %1654 = vdwg.mxu0
        %1655 = vmatprep.subr.bf16.mxu0 %v1240
        %1656 = vmatpush1.bf16.msra.mxu0 %v1239
        %1657 = vmatprep.subr.bf16.mxu0 %v1236
        %1658 = vmatpush1.bf16.msra.mxu0 %v1235
        %1659 = vmatprep.subr.bf16.mxu0 %v1232
        %1660 = vmatpush1.bf16.msra.mxu0 %v1231
        %1661 = vmatprep.subr.bf16.mxu0 %v1228
        %1662 = vmatpush1.bf16.msra.mxu0 %v1227
        %1663 = vmatprep.subr.bf16.mxu0 %v1224
        %1664 = vmatpush1.bf16.msra.mxu0 %v1223
        %1665 = vmatprep.subr.bf16.mxu0 %v1220
        %1666 = vmatpush1.bf16.msra.mxu0 %v1219
        %1667 = vmatprep.subr.bf16.mxu0 %v1216
        %1668 = vmatpush1.bf16.msra.mxu0 %v1215
        %1669 = vmatprep.subr.bf16.mxu0 %v1212
        %1670 = vmatpush1.bf16.msra.mxu0 %v1211
        %1671 = vmatprep.subr.bf16.mxu0 0
        %1672 = vmatpush2.bf16.msra.mxu0 0
        %1673 = vmatprep.subr.bf16.mxu0 0
        %1674 = vmatpush2.bf16.msra.mxu0 0
        %1675 = vmatprep.subr.bf16.mxu0 0
        %1676 = vmatpush2.bf16.msra.mxu0 0
        %1677 = vmatprep.subr.bf16.mxu0 0
        %1678 = vmatpush2.bf16.msra.mxu0 0
        %1679 = vmatprep.subr.bf16.mxu0 0
        %1680 = vmatpush2.bf16.msra.mxu0 0
        %1681 = vmatprep.subr.bf16.mxu0 0
        %1682 = vmatpush2.bf16.msra.mxu0 0
        %1683 = vmatprep.subr.bf16.mxu0 0
        %1684 = vmatpush2.bf16.msra.mxu0 0
        %1685 = vmatprep.subr.bf16.mxu0 0
        %1686 = vmatpush2.bf16.msra.mxu0 0
        %1687 = vmatprep.mubr.bf16.mxu0 0
        %1688 = vmatmul.mubr.bf16.gmra.mxu0 %v1576
        %v1689 = vpop.f32.mrf.mxu0
        %v1690 = vadd.f32 0.0, %v1689
        %v1691 = vpop.f32.mrf.mxu0
        %v1692 = vadd.f32 0.0, %v1691
        %v1693 = vpop.f32.mrf.mxu0
        %v1694 = vadd.f32 0.0, %v1693
        %v1695 = vpop.f32.mrf.mxu0
        %v1696 = vadd.f32 0.0, %v1695
        %1697 = vdwg.mxu0
        %v1698 = vadd.f32 %v1604, %v1647
        %v1699 = vadd.f32 %v1605, %v1649
        %v1700 = vadd.f32 %v1606, %v1690
        %v1701 = vadd.f32 %v1607, %v1692
        %v1702 = vadd.f32 %v1608, %v1651
        %v1703 = vadd.f32 %v1609, %v1653
        %v1704 = vadd.f32 %v1610, %v1694
        %v1705 = vadd.f32 %v1611, %v1696
        %v1706 = vmul.f32 %v1698, 0.5
        %v1707 = vmul.f32 %v1702, 0.5
        %v1708 = vtanh.pop %v1706
        %v1709 = vtanh.pop %v1707
        %v1710 = vmul.f32 %v1708, 0.5
        %v1711 = vmul.f32 %v1709, 0.5
        %v1712 = vadd.f32 %v1710, 0.5
        %v1713 = vadd.f32 %v1711, 0.5
        %v1714 = vmul.f32 %v1699, 0.5
        %v1715 = vmul.f32 %v1703, 0.5
        %v1716 = vtanh.pop %v1714
        %v1717 = vtanh.pop %v1715
        %v1718 = vmul.f32 %v1716, 0.5
        %v1719 = vmul.f32 %v1717, 0.5
        %v1720 = vadd.f32 %v1718, 0.5
        %v1721 = vadd.f32 %v1719, 0.5
        %v1722 = vtanh.pop %v1700
        %v1723 = vtanh.pop %v1704
        %v1724 = vmul.f32 %v1701, 0.5
        %v1725 = vmul.f32 %v1705, 0.5
        %v1726 = vtanh.pop %v1724
        %v1727 = vtanh.pop %v1725
        %v1728 = vmul.f32 %v1726, 0.5
        %v1729 = vmul.f32 %v1727, 0.5
        %v1730 = vadd.f32 %v1728, 0.5
        %v1731 = vadd.f32 %v1729, 0.5
        %v1732 = vmul.f32 %v1720, %v1574
        %v1733 = vmul.f32 %v1721, %v1575
        %v1734 = vmul.f32 %v1712, %v1722
        %v1735 = vmul.f32 %v1713, %v1723
        %v1736 = vadd.f32 %v1732, %v1734
        %v1737 = vadd.f32 %v1733, %v1735
        %v1738 = vtanh.pop %v1736
        %v1739 = vtanh.pop %v1737
        %v1740 = vmul.f32 %v1730, %v1738
        %v1741 = vmul.f32 %v1731, %v1739
        %v1742 = vsel %vm1599, %v1740, %v1572
        %v1743 = vsel %vm1600, %v1741, %v1573
        %v1744 = vsel %vm1599, %v1736, %v1574
        %v1745 = vsel %vm1600, %v1737, %v1575
        %v1746 = vpack.c.bf16 %v1743, %v1742
        %v1748 = vunpack.c.l.b16 %v1746
        %v1749 = vunpack.c.h.b16 %v1746
        %v1750 = vpack.c.b16 %v1748, %v1748
        %v1751 = vpack.c.b16 %v1749, %v1749
        %s1754 = scalar_lea.vmem [#allocation3], 16
        %1755 = vst [vmem:[%s1754] sm:$0xf] %v1750
        %1756 = vst [vmem:[%s1754 + $0x4] sm:$0xf] %v1751
        %s1757 = sadd.s32 %s600, 3
        %v1758 = vstv %s1757
        %vm1759 = vcmp.gt.s32.totalorder %v626, %v1758
        %vm1760 = vcmp.gt.s32.totalorder %v627, %v1758
        %v1761 = vsel %vm1759, 1, 0
        %v1762 = vsel %vm1760, 1, 0
        %1763 = vset.pattern.permute.xlu0 0
        %1764 = vperm.xlu0 %1763, %v1761
        %v1765 = vpop.permute.xlu0 %1764
        %1766 = vset.pattern.permute.xlu0 0
        %1767 = vperm.xlu0 %1766, %v1762
        %v1768 = vpop.permute.xlu0 %1767
        %vm1769 = vcmp.eq.s32.totalorder %v1765, 1
        %vm1770 = vcmp.eq.s32.totalorder %v1768, 1
        %s1771 = smul.u32 6, 4
        %s1772 = smul.addr %s1771, 8
        %s1773 = scalar_lea.vmem [#allocation2], %s1772
        %v1774 = vld [vmem:[%s1773] sm:$0xff]
        %v1775 = vld [vmem:[%s1773 + $0x8] sm:$0xff]
        %v1776 = vld [vmem:[%s1773 + $0x10] sm:$0xff]
        %v1777 = vld [vmem:[%s1773 + $0x18] sm:$0xff]
        %v1778 = vld [vmem:[%s1773 + $0x20] sm:$0xff]
        %v1779 = vld [vmem:[%s1773 + $0x28] sm:$0xff]
        %v1780 = vld [vmem:[%s1773 + $0x30] sm:$0xff]
        %v1781 = vld [vmem:[%s1773 + $0x38] sm:$0xff]
        %1782 = vmatprep.subr.bf16.mxu0 %v1238
        %1783 = vmatpush1.bf16.msra.mxu0 %v1237
        %1784 = vmatprep.subr.bf16.mxu0 %v1234
        %1785 = vmatpush1.bf16.msra.mxu0 %v1233
        %1786 = vmatprep.subr.bf16.mxu0 %v1230
        %1787 = vmatpush1.bf16.msra.mxu0 %v1229
        %1788 = vmatprep.subr.bf16.mxu0 %v1226
        %1789 = vmatpush1.bf16.msra.mxu0 %v1225
        %1790 = vmatprep.subr.bf16.mxu0 %v1222
        %1791 = vmatpush1.bf16.msra.mxu0 %v1221
        %1792 = vmatprep.subr.bf16.mxu0 %v1218
        %1793 = vmatpush1.bf16.msra.mxu0 %v1217
        %1794 = vmatprep.subr.bf16.mxu0 %v1214
        %1795 = vmatpush1.bf16.msra.mxu0 %v1213
        %1796 = vmatprep.subr.bf16.mxu0 %v1210
        %1797 = vmatpush1.bf16.msra.mxu0 %v1209
        %1798 = vmatprep.subr.bf16.mxu0 0
        %1799 = vmatpush2.bf16.msra.mxu0 0
        %1800 = vmatprep.subr.bf16.mxu0 0
        %1801 = vmatpush2.bf16.msra.mxu0 0
        %1802 = vmatprep.subr.bf16.mxu0 0
        %1803 = vmatpush2.bf16.msra.mxu0 0
        %1804 = vmatprep.subr.bf16.mxu0 0
        %1805 = vmatpush2.bf16.msra.mxu0 0
        %1806 = vmatprep.subr.bf16.mxu0 0
        %1807 = vmatpush2.bf16.msra.mxu0 0
        %1808 = vmatprep.subr.bf16.mxu0 0
        %1809 = vmatpush2.bf16.msra.mxu0 0
        %1810 = vmatprep.subr.bf16.mxu0 0
        %1811 = vmatpush2.bf16.msra.mxu0 0
        %1812 = vmatprep.subr.bf16.mxu0 0
        %1813 = vmatpush2.bf16.msra.mxu0 0
        %1814 = vmatprep.mubr.bf16.mxu0 0
        %1815 = vmatmul.mubr.bf16.gmra.mxu0 %v1746
        %v1816 = vpop.f32.mrf.mxu0
        %v1817 = vadd.f32 0.0, %v1816
        %v1818 = vpop.f32.mrf.mxu0
        %v1819 = vadd.f32 0.0, %v1818
        %v1820 = vpop.f32.mrf.mxu0
        %v1821 = vadd.f32 0.0, %v1820
        %v1822 = vpop.f32.mrf.mxu0
        %v1823 = vadd.f32 0.0, %v1822
        %1824 = vdwg.mxu0
        %1825 = vmatprep.subr.bf16.mxu0 %v1240
        %1826 = vmatpush1.bf16.msra.mxu0 %v1239
        %1827 = vmatprep.subr.bf16.mxu0 %v1236
        %1828 = vmatpush1.bf16.msra.mxu0 %v1235
        %1829 = vmatprep.subr.bf16.mxu0 %v1232
        %1830 = vmatpush1.bf16.msra.mxu0 %v1231
        %1831 = vmatprep.subr.bf16.mxu0 %v1228
        %1832 = vmatpush1.bf16.msra.mxu0 %v1227
        %1833 = vmatprep.subr.bf16.mxu0 %v1224
        %1834 = vmatpush1.bf16.msra.mxu0 %v1223
        %1835 = vmatprep.subr.bf16.mxu0 %v1220
        %1836 = vmatpush1.bf16.msra.mxu0 %v1219
        %1837 = vmatprep.subr.bf16.mxu0 %v1216
        %1838 = vmatpush1.bf16.msra.mxu0 %v1215
        %1839 = vmatprep.subr.bf16.mxu0 %v1212
        %1840 = vmatpush1.bf16.msra.mxu0 %v1211
        %1841 = vmatprep.subr.bf16.mxu0 0
        %1842 = vmatpush2.bf16.msra.mxu0 0
        %1843 = vmatprep.subr.bf16.mxu0 0
        %1844 = vmatpush2.bf16.msra.mxu0 0
        %1845 = vmatprep.subr.bf16.mxu0 0
        %1846 = vmatpush2.bf16.msra.mxu0 0
        %1847 = vmatprep.subr.bf16.mxu0 0
        %1848 = vmatpush2.bf16.msra.mxu0 0
        %1849 = vmatprep.subr.bf16.mxu0 0
        %1850 = vmatpush2.bf16.msra.mxu0 0
        %1851 = vmatprep.subr.bf16.mxu0 0
        %1852 = vmatpush2.bf16.msra.mxu0 0
        %1853 = vmatprep.subr.bf16.mxu0 0
        %1854 = vmatpush2.bf16.msra.mxu0 0
        %1855 = vmatprep.subr.bf16.mxu0 0
        %1856 = vmatpush2.bf16.msra.mxu0 0
        %1857 = vmatprep.mubr.bf16.mxu0 0
        %1858 = vmatmul.mubr.bf16.gmra.mxu0 %v1746
        %v1859 = vpop.f32.mrf.mxu0
        %v1860 = vadd.f32 0.0, %v1859
        %v1861 = vpop.f32.mrf.mxu0
        %v1862 = vadd.f32 0.0, %v1861
        %v1863 = vpop.f32.mrf.mxu0
        %v1864 = vadd.f32 0.0, %v1863
        %v1865 = vpop.f32.mrf.mxu0
        %v1866 = vadd.f32 0.0, %v1865
        %1867 = vdwg.mxu0
        %v1868 = vadd.f32 %v1774, %v1817
        %v1869 = vadd.f32 %v1775, %v1819
        %v1870 = vadd.f32 %v1776, %v1860
        %v1871 = vadd.f32 %v1777, %v1862
        %v1872 = vadd.f32 %v1778, %v1821
        %v1873 = vadd.f32 %v1779, %v1823
        %v1874 = vadd.f32 %v1780, %v1864
        %v1875 = vadd.f32 %v1781, %v1866
        %v1876 = vmul.f32 %v1868, 0.5
        %v1877 = vmul.f32 %v1872, 0.5
        %v1878 = vtanh.pop %v1876
        %v1879 = vtanh.pop %v1877
        %v1880 = vmul.f32 %v1878, 0.5
        %v1881 = vmul.f32 %v1879, 0.5
        %v1882 = vadd.f32 %v1880, 0.5
        %v1883 = vadd.f32 %v1881, 0.5
        %v1884 = vmul.f32 %v1869, 0.5
        %v1885 = vmul.f32 %v1873, 0.5
        %v1886 = vtanh.pop %v1884
        %v1887 = vtanh.pop %v1885
        %v1888 = vmul.f32 %v1886, 0.5
        %v1889 = vmul.f32 %v1887, 0.5
        %v1890 = vadd.f32 %v1888, 0.5
        %v1891 = vadd.f32 %v1889, 0.5
        %v1892 = vtanh.pop %v1870
        %v1893 = vtanh.pop %v1874
        %v1894 = vmul.f32 %v1871, 0.5
        %v1895 = vmul.f32 %v1875, 0.5
        %v1896 = vtanh.pop %v1894
        %v1897 = vtanh.pop %v1895
        %v1898 = vmul.f32 %v1896, 0.5
        %v1899 = vmul.f32 %v1897, 0.5
        %v1900 = vadd.f32 %v1898, 0.5
        %v1901 = vadd.f32 %v1899, 0.5
        %v1902 = vmul.f32 %v1890, %v1744
        %v1903 = vmul.f32 %v1891, %v1745
        %v1904 = vmul.f32 %v1882, %v1892
        %v1905 = vmul.f32 %v1883, %v1893
        %v1906 = vadd.f32 %v1902, %v1904
        %v1907 = vadd.f32 %v1903, %v1905
        %v1908 = vtanh.pop %v1906
        %v1909 = vtanh.pop %v1907
        %v1910 = vmul.f32 %v1900, %v1908
        %v1911 = vmul.f32 %v1901, %v1909
        %v1912 = vsel %vm1769, %v1910, %v1742
        %v1913 = vsel %vm1770, %v1911, %v1743
        %v1914 = vsel %vm1769, %v1906, %v1744
        %v1915 = vsel %vm1770, %v1907, %v1745
        %v1916 = vpack.c.bf16 %v1913, %v1912
        %v1918 = vunpack.c.l.b16 %v1916
        %v1919 = vunpack.c.h.b16 %v1916
        %v1920 = vpack.c.b16 %v1918, %v1918
        %v1921 = vpack.c.b16 %v1919, %v1919
        %s1924 = scalar_lea.vmem [#allocation3], 24
        %1925 = vst [vmem:[%s1924] sm:$0xf] %v1920
        %1926 = vst [vmem:[%s1924 + $0x4] sm:$0xf] %v1921
        %1927 = vst [vmem:[%s585] sm:$0xff] %v1912
        %1928 = vst [vmem:[%s585 + $0x8] sm:$0xff] %v1913
        %1929 = vst [vmem:[%s591] sm:$0xff] %v1914
        %1930 = vst [vmem:[%s591 + $0x8] sm:$0xff] %v1915
        %v1931 = vld [vmem:[#allocation3] sm:$0xf]
        %v1932 = vld [vmem:[#allocation3 + $0x4] sm:$0xf]
        %v1933 = vld [vmem:[#allocation3 + $0x8] sm:$0xf]
        %v1934 = vld [vmem:[#allocation3 + $0xc] sm:$0xf]
        %v1935 = vld [vmem:[#allocation3 + $0x10] sm:$0xf]
        %v1936 = vld [vmem:[#allocation3 + $0x14] sm:$0xf]
        %v1937 = vld [vmem:[#allocation3 + $0x18] sm:$0xf]
        %v1938 = vld [vmem:[#allocation3 + $0x1c] sm:$0xf]
        %v1939 = vld [vmem:[%s8] sm:$0xff]
        %v1940 = vld [vmem:[%s8 + $0x8] sm:$0xff]
        %v1941 = vld [vmem:[%s8 + $0x10] sm:$0xff]
        %v1942 = vld [vmem:[%s8 + $0x18] sm:$0xff]
        %v1943 = vld [vmem:[%s8 + $0x20] sm:$0xff]
        %v1944 = vld [vmem:[%s8 + $0x28] sm:$0xff]
        %v1945 = vld [vmem:[%s8 + $0x30] sm:$0xff]
        %v1946 = vld [vmem:[%s8 + $0x38] sm:$0xff]
        %v1947 = vld [vmem:[%s8 + $0x40] sm:$0xff]
        %v1948 = vld [vmem:[%s8 + $0x48] sm:$0xff]
        %v1949 = vld [vmem:[%s8 + $0x50] sm:$0xff]
        %v1950 = vld [vmem:[%s8 + $0x58] sm:$0xff]
        %v1951 = vld [vmem:[%s8 + $0x60] sm:$0xff]
        %v1952 = vld [vmem:[%s8 + $0x68] sm:$0xff]
        %v1953 = vld [vmem:[%s8 + $0x70] sm:$0xff]
        %v1954 = vld [vmem:[%s8 + $0x78] sm:$0xff]
        %v1955 = vld [vmem:[%s8 + $0x80] sm:$0xff]
        %v1956 = vld [vmem:[%s8 + $0x88] sm:$0xff]
        %v1957 = vld [vmem:[%s8 + $0x90] sm:$0xff]
        %v1958 = vld [vmem:[%s8 + $0x98] sm:$0xff]
        %v1959 = vld [vmem:[%s8 + $0xa0] sm:$0xff]
        %v1960 = vld [vmem:[%s8 + $0xa8] sm:$0xff]
        %v1961 = vld [vmem:[%s8 + $0xb0] sm:$0xff]
        %v1962 = vld [vmem:[%s8 + $0xb8] sm:$0xff]
        %v1963 = vld [vmem:[%s8 + $0xc0] sm:$0xff]
        %v1964 = vld [vmem:[%s8 + $0xc8] sm:$0xff]
        %v1965 = vld [vmem:[%s8 + $0xd0] sm:$0xff]
        %v1966 = vld [vmem:[%s8 + $0xd8] sm:$0xff]
        %v1967 = vld [vmem:[%s8 + $0xe0] sm:$0xff]
        %v1968 = vld [vmem:[%s8 + $0xe8] sm:$0xff]
        %v1969 = vld [vmem:[%s8 + $0xf0] sm:$0xff]
        %v1970 = vld [vmem:[%s8 + $0xf8] sm:$0xff]
        %v1971 = vld [vmem:[%s9] sm:$0xff]
        %v1972 = vld [vmem:[%s9 + $0x8] sm:$0xff]
        %v1973 = vld [vmem:[%s9 + $0x10] sm:$0xff]
        %v1974 = vld [vmem:[%s9 + $0x18] sm:$0xff]
        %v1975 = vld [vmem:[%s9 + $0x20] sm:$0xff]
        %v1976 = vld [vmem:[%s9 + $0x28] sm:$0xff]
        %v1977 = vld [vmem:[%s9 + $0x30] sm:$0xff]
        %v1978 = vld [vmem:[%s9 + $0x38] sm:$0xff]
        %v1979 = vld [vmem:[%s9 + $0x40] sm:$0xff]
        %v1980 = vld [vmem:[%s9 + $0x48] sm:$0xff]
        %v1981 = vld [vmem:[%s9 + $0x50] sm:$0xff]
        %v1982 = vld [vmem:[%s9 + $0x58] sm:$0xff]
        %v1983 = vld [vmem:[%s9 + $0x60] sm:$0xff]
        %v1984 = vld [vmem:[%s9 + $0x68] sm:$0xff]
        %v1985 = vld [vmem:[%s9 + $0x70] sm:$0xff]
        %v1986 = vld [vmem:[%s9 + $0x78] sm:$0xff]
        %v1987 = vld [vmem:[%s9 + $0x80] sm:$0xff]
        %v1988 = vld [vmem:[%s9 + $0x88] sm:$0xff]
        %v1989 = vld [vmem:[%s9 + $0x90] sm:$0xff]
        %v1990 = vld [vmem:[%s9 + $0x98] sm:$0xff]
        %v1991 = vld [vmem:[%s9 + $0xa0] sm:$0xff]
        %v1992 = vld [vmem:[%s9 + $0xa8] sm:$0xff]
        %v1993 = vld [vmem:[%s9 + $0xb0] sm:$0xff]
        %v1994 = vld [vmem:[%s9 + $0xb8] sm:$0xff]
        %v1995 = vld [vmem:[%s9 + $0xc0] sm:$0xff]
        %v1996 = vld [vmem:[%s9 + $0xc8] sm:$0xff]
        %v1997 = vld [vmem:[%s9 + $0xd0] sm:$0xff]
        %v1998 = vld [vmem:[%s9 + $0xd8] sm:$0xff]
        %v1999 = vld [vmem:[%s9 + $0xe0] sm:$0xff]
        %v2000 = vld [vmem:[%s9 + $0xe8] sm:$0xff]
        %v2001 = vld [vmem:[%s9 + $0xf0] sm:$0xff]
        %v2002 = vld [vmem:[%s9 + $0xf8] sm:$0xff]
        %v2003 = vld [vmem:[%s10] sm:$0xf]
        %v2005 = vlaneseq
        %v2006 = vshrl.u32 %v2005, 7
        %v2007 = vsub.s32 0, %v2006
        %v2008 = vrot.slane %v2003, %v2007
        %v2009 = vlaneseq
        %v2010 = vshrl.u32 %v2009, 7
        %v2011 = vsub.s32 1, %v2010
        %v2012 = vrot.slane %v2003, %v2011
        %v2013 = vlaneseq
        %v2014 = vshrl.u32 %v2013, 7
        %v2015 = vsub.s32 2, %v2014
        %v2016 = vrot.slane %v2003, %v2015
        %v2017 = vlaneseq
        %v2018 = vshrl.u32 %v2017, 7
        %v2019 = vsub.s32 3, %v2018
        %v2020 = vrot.slane %v2003, %v2019
        %v2033 = vunpack.c.l.b16 %v1931
        %v2034 = vunpack.c.l.b16 %v1932
        %v2035 = vunpack.c.l.b16 %v1933
        %v2036 = vunpack.c.l.b16 %v1934
        %v2037 = vunpack.c.l.b16 %v1935
        %v2038 = vunpack.c.l.b16 %v1936
        %v2039 = vunpack.c.l.b16 %v1937
        %v2040 = vunpack.c.l.b16 %v1938
        %v2041 = vpack.c.b16 %v2034, %v2033
        %v2042 = vpack.c.b16 %v2036, %v2035
        %v2043 = vpack.c.b16 %v2038, %v2037
        %v2044 = vpack.c.b16 %v2040, %v2039
        %v2081 = vunpack.c.l.b16 %v1939
        %v2082 = vunpack.c.h.b16 %v1939
        %v2083 = vunpack.c.l.b16 %v1940
        %v2084 = vunpack.c.h.b16 %v1940
        %v2085 = vunpack.c.l.b16 %v1941
        %v2086 = vunpack.c.h.b16 %v1941
        %v2087 = vunpack.c.l.b16 %v1942
        %v2088 = vunpack.c.h.b16 %v1942
        %v2089 = vunpack.c.l.b16 %v1943
        %v2090 = vunpack.c.h.b16 %v1943
        %v2091 = vunpack.c.l.b16 %v1944
        %v2092 = vunpack.c.h.b16 %v1944
        %v2093 = vunpack.c.l.b16 %v1945
        %v2094 = vunpack.c.h.b16 %v1945
        %v2095 = vunpack.c.l.b16 %v1946
        %v2096 = vunpack.c.h.b16 %v1946
        %v2097 = vunpack.c.l.b16 %v1947
        %v2098 = vunpack.c.h.b16 %v1947
        %v2099 = vunpack.c.l.b16 %v1948
        %v2100 = vunpack.c.h.b16 %v1948
        %v2101 = vunpack.c.l.b16 %v1949
        %v2102 = vunpack.c.h.b16 %v1949
        %v2103 = vunpack.c.l.b16 %v1950
        %v2104 = vunpack.c.h.b16 %v1950
        %v2105 = vunpack.c.l.b16 %v1951
        %v2106 = vunpack.c.h.b16 %v1951
        %v2107 = vunpack.c.l.b16 %v1952
        %v2108 = vunpack.c.h.b16 %v1952
        %v2109 = vunpack.c.l.b16 %v1953
        %v2110 = vunpack.c.h.b16 %v1953
        %v2111 = vunpack.c.l.b16 %v1954
        %v2112 = vunpack.c.h.b16 %v1954
        %v2113 = vunpack.c.l.b16 %v1955
        %v2114 = vunpack.c.h.b16 %v1955
        %v2115 = vunpack.c.l.b16 %v1956
        %v2116 = vunpack.c.h.b16 %v1956
        %v2117 = vunpack.c.l.b16 %v1957
        %v2118 = vunpack.c.h.b16 %v1957
        %v2119 = vunpack.c.l.b16 %v1958
        %v2120 = vunpack.c.h.b16 %v1958
        %v2121 = vunpack.c.l.b16 %v1959
        %v2122 = vunpack.c.h.b16 %v1959
        %v2123 = vunpack.c.l.b16 %v1960
        %v2124 = vunpack.c.h.b16 %v1960
        %v2125 = vunpack.c.l.b16 %v1961
        %v2126 = vunpack.c.h.b16 %v1961
        %v2127 = vunpack.c.l.b16 %v1962
        %v2128 = vunpack.c.h.b16 %v1962
        %v2129 = vunpack.c.l.b16 %v1963
        %v2130 = vunpack.c.h.b16 %v1963
        %v2131 = vunpack.c.l.b16 %v1964
        %v2132 = vunpack.c.h.b16 %v1964
        %v2133 = vunpack.c.l.b16 %v1965
        %v2134 = vunpack.c.h.b16 %v1965
        %v2135 = vunpack.c.l.b16 %v1966
        %v2136 = vunpack.c.h.b16 %v1966
        %v2137 = vunpack.c.l.b16 %v1967
        %v2138 = vunpack.c.h.b16 %v1967
        %v2139 = vunpack.c.l.b16 %v1968
        %v2140 = vunpack.c.h.b16 %v1968
        %v2141 = vunpack.c.l.b16 %v1969
        %v2142 = vunpack.c.h.b16 %v1969
        %v2143 = vunpack.c.l.b16 %v1970
        %v2144 = vunpack.c.h.b16 %v1970
        %v2145 = vpack.c.b16 %v2085, %v2081
        %v2146 = vpack.c.b16 %v2086, %v2082
        %v2147 = vpack.c.b16 %v2087, %v2083
        %v2148 = vpack.c.b16 %v2088, %v2084
        %v2149 = vpack.c.b16 %v2093, %v2089
        %v2150 = vpack.c.b16 %v2094, %v2090
        %v2151 = vpack.c.b16 %v2095, %v2091
        %v2152 = vpack.c.b16 %v2096, %v2092
        %v2153 = vpack.c.b16 %v2101, %v2097
        %v2154 = vpack.c.b16 %v2102, %v2098
        %v2155 = vpack.c.b16 %v2103, %v2099
        %v2156 = vpack.c.b16 %v2104, %v2100
        %v2157 = vpack.c.b16 %v2109, %v2105
        %v2158 = vpack.c.b16 %v2110, %v2106
        %v2159 = vpack.c.b16 %v2111, %v2107
        %v2160 = vpack.c.b16 %v2112, %v2108
        %v2161 = vpack.c.b16 %v2117, %v2113
        %v2162 = vpack.c.b16 %v2118, %v2114
        %v2163 = vpack.c.b16 %v2119, %v2115
        %v2164 = vpack.c.b16 %v2120, %v2116
        %v2165 = vpack.c.b16 %v2125, %v2121
        %v2166 = vpack.c.b16 %v2126, %v2122
        %v2167 = vpack.c.b16 %v2127, %v2123
        %v2168 = vpack.c.b16 %v2128, %v2124
        %v2169 = vpack.c.b16 %v2133, %v2129
        %v2170 = vpack.c.b16 %v2134, %v2130
        %v2171 = vpack.c.b16 %v2135, %v2131
        %v2172 = vpack.c.b16 %v2136, %v2132
        %v2173 = vpack.c.b16 %v2141, %v2137
        %v2174 = vpack.c.b16 %v2142, %v2138
        %v2175 = vpack.c.b16 %v2143, %v2139
        %v2176 = vpack.c.b16 %v2144, %v2140
        %2209 = vmatprep.subr.bf16.mxu0 %v2174
        %2210 = vmatpush1.bf16.msra.mxu0 %v2173
        %2211 = vmatprep.subr.bf16.mxu0 %v2170
        %2212 = vmatpush1.bf16.msra.mxu0 %v2169
        %2213 = vmatprep.subr.bf16.mxu0 %v2166
        %2214 = vmatpush1.bf16.msra.mxu0 %v2165
        %2215 = vmatprep.subr.bf16.mxu0 %v2162
        %2216 = vmatpush1.bf16.msra.mxu0 %v2161
        %2217 = vmatprep.subr.bf16.mxu0 %v2158
        %2218 = vmatpush1.bf16.msra.mxu0 %v2157
        %2219 = vmatprep.subr.bf16.mxu0 %v2154
        %2220 = vmatpush1.bf16.msra.mxu0 %v2153
        %2221 = vmatprep.subr.bf16.mxu0 %v2150
        %2222 = vmatpush1.bf16.msra.mxu0 %v2149
        %2223 = vmatprep.subr.bf16.mxu0 %v2146
        %2224 = vmatpush1.bf16.msra.mxu0 %v2145
        %2225 = vmatprep.subr.bf16.mxu0 0
        %2226 = vmatpush2.bf16.msra.mxu0 0
        %2227 = vmatprep.subr.bf16.mxu0 0
        %2228 = vmatpush2.bf16.msra.mxu0 0
        %2229 = vmatprep.subr.bf16.mxu0 0
        %2230 = vmatpush2.bf16.msra.mxu0 0
        %2231 = vmatprep.subr.bf16.mxu0 0
        %2232 = vmatpush2.bf16.msra.mxu0 0
        %2233 = vmatprep.subr.bf16.mxu0 0
        %2234 = vmatpush2.bf16.msra.mxu0 0
        %2235 = vmatprep.subr.bf16.mxu0 0
        %2236 = vmatpush2.bf16.msra.mxu0 0
        %2237 = vmatprep.subr.bf16.mxu0 0
        %2238 = vmatpush2.bf16.msra.mxu0 0
        %2239 = vmatprep.subr.bf16.mxu0 0
        %2240 = vmatpush2.bf16.msra.mxu0 0
        %2241 = vmatprep.mubr.bf16.mxu0 0
        %2242 = vmatmul.mubr.bf16.gmra.mxu0 %v2041
        %v2243 = vpop.f32.mrf.mxu0
        %v2244 = vadd.f32 %v2008, %v2243
        %v2245 = vpop.f32.mrf.mxu0
        %v2246 = vadd.f32 %v2012, %v2245
        %v2247 = vpop.f32.mrf.mxu0
        %v2248 = vadd.f32 %v2008, %v2247
        %v2249 = vpop.f32.mrf.mxu0
        %v2250 = vadd.f32 %v2012, %v2249
        %2251 = vmatprep.mubr.bf16.mxu0 0
        %2252 = vmatmul.mubr.bf16.gmra.mxu0 %v2042
        %v2253 = vpop.f32.mrf.mxu0
        %v2254 = vadd.f32 %v2008, %v2253
        %v2255 = vpop.f32.mrf.mxu0
        %v2256 = vadd.f32 %v2012, %v2255
        %v2257 = vpop.f32.mrf.mxu0
        %v2258 = vadd.f32 %v2008, %v2257
        %v2259 = vpop.f32.mrf.mxu0
        %v2260 = vadd.f32 %v2012, %v2259
        %2261 = vmatprep.mubr.bf16.mxu0 0
        %2262 = vmatmul.mubr.bf16.gmra.mxu0 %v2043
        %v2263 = vpop.f32.mrf.mxu0
        %v2264 = vadd.f32 %v2008, %v2263
        %v2265 = vpop.f32.mrf.mxu0
        %v2266 = vadd.f32 %v2012, %v2265
        %v2267 = vpop.f32.mrf.mxu0
        %v2268 = vadd.f32 %v2008, %v2267
        %v2269 = vpop.f32.mrf.mxu0
        %v2270 = vadd.f32 %v2012, %v2269
        %2271 = vmatprep.mubr.bf16.mxu0 0
        %2272 = vmatmul.mubr.bf16.gmra.mxu0 %v2044
        %v2273 = vpop.f32.mrf.mxu0
        %v2274 = vadd.f32 %v2008, %v2273
        %v2275 = vpop.f32.mrf.mxu0
        %v2276 = vadd.f32 %v2012, %v2275
        %v2277 = vpop.f32.mrf.mxu0
        %v2278 = vadd.f32 %v2008, %v2277
        %v2279 = vpop.f32.mrf.mxu0
        %v2280 = vadd.f32 %v2012, %v2279
        %2281 = vdwg.mxu0
        %2282 = vmatprep.subr.bf16.mxu0 %v2176
        %2283 = vmatpush1.bf16.msra.mxu0 %v2175
        %2284 = vmatprep.subr.bf16.mxu0 %v2172
        %2285 = vmatpush1.bf16.msra.mxu0 %v2171
        %2286 = vmatprep.subr.bf16.mxu0 %v2168
        %2287 = vmatpush1.bf16.msra.mxu0 %v2167
        %2288 = vmatprep.subr.bf16.mxu0 %v2164
        %2289 = vmatpush1.bf16.msra.mxu0 %v2163
        %2290 = vmatprep.subr.bf16.mxu0 %v2160
        %2291 = vmatpush1.bf16.msra.mxu0 %v2159
        %2292 = vmatprep.subr.bf16.mxu0 %v2156
        %2293 = vmatpush1.bf16.msra.mxu0 %v2155
        %2294 = vmatprep.subr.bf16.mxu0 %v2152
        %2295 = vmatpush1.bf16.msra.mxu0 %v2151
        %2296 = vmatprep.subr.bf16.mxu0 %v2148
        %2297 = vmatpush1.bf16.msra.mxu0 %v2147
        %2298 = vmatprep.subr.bf16.mxu0 0
        %2299 = vmatpush2.bf16.msra.mxu0 0
        %2300 = vmatprep.subr.bf16.mxu0 0
        %2301 = vmatpush2.bf16.msra.mxu0 0
        %2302 = vmatprep.subr.bf16.mxu0 0
        %2303 = vmatpush2.bf16.msra.mxu0 0
        %2304 = vmatprep.subr.bf16.mxu0 0
        %2305 = vmatpush2.bf16.msra.mxu0 0
        %2306 = vmatprep.subr.bf16.mxu0 0
        %2307 = vmatpush2.bf16.msra.mxu0 0
        %2308 = vmatprep.subr.bf16.mxu0 0
        %2309 = vmatpush2.bf16.msra.mxu0 0
        %2310 = vmatprep.subr.bf16.mxu0 0
        %2311 = vmatpush2.bf16.msra.mxu0 0
        %2312 = vmatprep.subr.bf16.mxu0 0
        %2313 = vmatpush2.bf16.msra.mxu0 0
        %2314 = vmatprep.mubr.bf16.mxu0 0
        %2315 = vmatmul.mubr.bf16.gmra.mxu0 %v2041
        %v2316 = vpop.f32.mrf.mxu0
        %v2317 = vadd.f32 %v2016, %v2316
        %v2318 = vpop.f32.mrf.mxu0
        %v2319 = vadd.f32 %v2020, %v2318
        %v2320 = vpop.f32.mrf.mxu0
        %v2321 = vadd.f32 %v2016, %v2320
        %v2322 = vpop.f32.mrf.mxu0
        %v2323 = vadd.f32 %v2020, %v2322
        %2324 = vmatprep.mubr.bf16.mxu0 0
        %2325 = vmatmul.mubr.bf16.gmra.mxu0 %v2042
        %v2326 = vpop.f32.mrf.mxu0
        %v2327 = vadd.f32 %v2016, %v2326
        %v2328 = vpop.f32.mrf.mxu0
        %v2329 = vadd.f32 %v2020, %v2328
        %v2330 = vpop.f32.mrf.mxu0
        %v2331 = vadd.f32 %v2016, %v2330
        %v2332 = vpop.f32.mrf.mxu0
        %v2333 = vadd.f32 %v2020, %v2332
        %2334 = vmatprep.mubr.bf16.mxu0 0
        %2335 = vmatmul.mubr.bf16.gmra.mxu0 %v2043
        %v2336 = vpop.f32.mrf.mxu0
        %v2337 = vadd.f32 %v2016, %v2336
        %v2338 = vpop.f32.mrf.mxu0
        %v2339 = vadd.f32 %v2020, %v2338
        %v2340 = vpop.f32.mrf.mxu0
        %v2341 = vadd.f32 %v2016, %v2340
        %v2342 = vpop.f32.mrf.mxu0
        %v2343 = vadd.f32 %v2020, %v2342
        %2344 = vmatprep.mubr.bf16.mxu0 0
        %2345 = vmatmul.mubr.bf16.gmra.mxu0 %v2044
        %v2346 = vpop.f32.mrf.mxu0
        %v2347 = vadd.f32 %v2016, %v2346
        %v2348 = vpop.f32.mrf.mxu0
        %v2349 = vadd.f32 %v2020, %v2348
        %v2350 = vpop.f32.mrf.mxu0
        %v2351 = vadd.f32 %v2016, %v2350
        %v2352 = vpop.f32.mrf.mxu0
        %v2353 = vadd.f32 %v2020, %v2352
        %2354 = vdwg.mxu0
        %2355 = vst [vmem:[#allocation2] sm:$0xff] %v2244
        %2356 = vst [vmem:[#allocation2 + $0x8] sm:$0xff] %v2246
        %2357 = vst [vmem:[#allocation2 + $0x10] sm:$0xff] %v2317
        %2358 = vst [vmem:[#allocation2 + $0x18] sm:$0xff] %v2319
        %2359 = vst [vmem:[#allocation2 + $0x20] sm:$0xff] %v2248
        %2360 = vst [vmem:[#allocation2 + $0x28] sm:$0xff] %v2250
        %2361 = vst [vmem:[#allocation2 + $0x30] sm:$0xff] %v2321
        %2362 = vst [vmem:[#allocation2 + $0x38] sm:$0xff] %v2323
        %2363 = vst [vmem:[#allocation2 + $0x40] sm:$0xff] %v2254
        %2364 = vst [vmem:[#allocation2 + $0x48] sm:$0xff] %v2256
        %2365 = vst [vmem:[#allocation2 + $0x50] sm:$0xff] %v2327
        %2366 = vst [vmem:[#allocation2 + $0x58] sm:$0xff] %v2329
        %2367 = vst [vmem:[#allocation2 + $0x60] sm:$0xff] %v2258
        %2368 = vst [vmem:[#allocation2 + $0x68] sm:$0xff] %v2260
        %2369 = vst [vmem:[#allocation2 + $0x70] sm:$0xff] %v2331
        %2370 = vst [vmem:[#allocation2 + $0x78] sm:$0xff] %v2333
        %2371 = vst [vmem:[#allocation2 + $0x80] sm:$0xff] %v2264
        %2372 = vst [vmem:[#allocation2 + $0x88] sm:$0xff] %v2266
        %2373 = vst [vmem:[#allocation2 + $0x90] sm:$0xff] %v2337
        %2374 = vst [vmem:[#allocation2 + $0x98] sm:$0xff] %v2339
        %2375 = vst [vmem:[#allocation2 + $0xa0] sm:$0xff] %v2268
        %2376 = vst [vmem:[#allocation2 + $0xa8] sm:$0xff] %v2270
        %2377 = vst [vmem:[#allocation2 + $0xb0] sm:$0xff] %v2341
        %2378 = vst [vmem:[#allocation2 + $0xb8] sm:$0xff] %v2343
        %2379 = vst [vmem:[#allocation2 + $0xc0] sm:$0xff] %v2274
        %2380 = vst [vmem:[#allocation2 + $0xc8] sm:$0xff] %v2276
        %2381 = vst [vmem:[#allocation2 + $0xd0] sm:$0xff] %v2347
        %2382 = vst [vmem:[#allocation2 + $0xd8] sm:$0xff] %v2349
        %2383 = vst [vmem:[#allocation2 + $0xe0] sm:$0xff] %v2278
        %2384 = vst [vmem:[#allocation2 + $0xe8] sm:$0xff] %v2280
        %2385 = vst [vmem:[#allocation2 + $0xf0] sm:$0xff] %v2351
        %2386 = vst [vmem:[#allocation2 + $0xf8] sm:$0xff] %v2353
        %s2387 = scalar_lea.vmem %s585, 16
        %v2388 = vld [vmem:[%s2387] sm:$0xff]
        %v2389 = vld [vmem:[%s2387 + $0x8] sm:$0xff]
        %s2390 = scalar_lea.vmem %s591, 16
        %v2391 = vld [vmem:[%s2390] sm:$0xff]
        %v2392 = vld [vmem:[%s2390 + $0x8] sm:$0xff]
        %v2393 = vpack.c.bf16 %v2389, %v2388
        %v2394 = vld [vmem:[%s1104] sm:$0xff]
        %v2395 = vld [vmem:[%s1104 + $0x8] sm:$0xff]
        %v2396 = vld [vmem:[%s1104 + $0x10] sm:$0xff]
        %v2397 = vld [vmem:[%s1104 + $0x18] sm:$0xff]
        %v2398 = vld [vmem:[%s1104 + $0x20] sm:$0xff]
        %v2399 = vld [vmem:[%s1104 + $0x28] sm:$0xff]
        %v2400 = vld [vmem:[%s1104 + $0x30] sm:$0xff]
        %v2401 = vld [vmem:[%s1104 + $0x38] sm:$0xff]
        %v2434 = vunpack.c.l.b16 %v1971
        %v2435 = vunpack.c.h.b16 %v1971
        %v2436 = vunpack.c.l.b16 %v1972
        %v2437 = vunpack.c.h.b16 %v1972
        %v2438 = vunpack.c.l.b16 %v1973
        %v2439 = vunpack.c.h.b16 %v1973
        %v2440 = vunpack.c.l.b16 %v1974
        %v2441 = vunpack.c.h.b16 %v1974
        %v2442 = vunpack.c.l.b16 %v1975
        %v2443 = vunpack.c.h.b16 %v1975
        %v2444 = vunpack.c.l.b16 %v1976
        %v2445 = vunpack.c.h.b16 %v1976
        %v2446 = vunpack.c.l.b16 %v1977
        %v2447 = vunpack.c.h.b16 %v1977
        %v2448 = vunpack.c.l.b16 %v1978
        %v2449 = vunpack.c.h.b16 %v1978
        %v2450 = vunpack.c.l.b16 %v1979
        %v2451 = vunpack.c.h.b16 %v1979
        %v2452 = vunpack.c.l.b16 %v1980
        %v2453 = vunpack.c.h.b16 %v1980
        %v2454 = vunpack.c.l.b16 %v1981
        %v2455 = vunpack.c.h.b16 %v1981
        %v2456 = vunpack.c.l.b16 %v1982
        %v2457 = vunpack.c.h.b16 %v1982
        %v2458 = vunpack.c.l.b16 %v1983
        %v2459 = vunpack.c.h.b16 %v1983
        %v2460 = vunpack.c.l.b16 %v1984
        %v2461 = vunpack.c.h.b16 %v1984
        %v2462 = vunpack.c.l.b16 %v1985
        %v2463 = vunpack.c.h.b16 %v1985
        %v2464 = vunpack.c.l.b16 %v1986
        %v2465 = vunpack.c.h.b16 %v1986
        %v2466 = vunpack.c.l.b16 %v1987
        %v2467 = vunpack.c.h.b16 %v1987
        %v2468 = vunpack.c.l.b16 %v1988
        %v2469 = vunpack.c.h.b16 %v1988
        %v2470 = vunpack.c.l.b16 %v1989
        %v2471 = vunpack.c.h.b16 %v1989
        %v2472 = vunpack.c.l.b16 %v1990
        %v2473 = vunpack.c.h.b16 %v1990
        %v2474 = vunpack.c.l.b16 %v1991
        %v2475 = vunpack.c.h.b16 %v1991
        %v2476 = vunpack.c.l.b16 %v1992
        %v2477 = vunpack.c.h.b16 %v1992
        %v2478 = vunpack.c.l.b16 %v1993
        %v2479 = vunpack.c.h.b16 %v1993
        %v2480 = vunpack.c.l.b16 %v1994
        %v2481 = vunpack.c.h.b16 %v1994
        %v2482 = vunpack.c.l.b16 %v1995
        %v2483 = vunpack.c.h.b16 %v1995
        %v2484 = vunpack.c.l.b16 %v1996
        %v2485 = vunpack.c.h.b16 %v1996
        %v2486 = vunpack.c.l.b16 %v1997
        %v2487 = vunpack.c.h.b16 %v1997
        %v2488 = vunpack.c.l.b16 %v1998
        %v2489 = vunpack.c.h.b16 %v1998
        %v2490 = vunpack.c.l.b16 %v1999
        %v2491 = vunpack.c.h.b16 %v1999
        %v2492 = vunpack.c.l.b16 %v2000
        %v2493 = vunpack.c.h.b16 %v2000
        %v2494 = vunpack.c.l.b16 %v2001
        %v2495 = vunpack.c.h.b16 %v2001
        %v2496 = vunpack.c.l.b16 %v2002
        %v2497 = vunpack.c.h.b16 %v2002
        %v2498 = vpack.c.b16 %v2438, %v2434
        %v2499 = vpack.c.b16 %v2439, %v2435
        %v2500 = vpack.c.b16 %v2440, %v2436
        %v2501 = vpack.c.b16 %v2441, %v2437
        %v2502 = vpack.c.b16 %v2446, %v2442
        %v2503 = vpack.c.b16 %v2447, %v2443
        %v2504 = vpack.c.b16 %v2448, %v2444
        %v2505 = vpack.c.b16 %v2449, %v2445
        %v2506 = vpack.c.b16 %v2454, %v2450
        %v2507 = vpack.c.b16 %v2455, %v2451
        %v2508 = vpack.c.b16 %v2456, %v2452
        %v2509 = vpack.c.b16 %v2457, %v2453
        %v2510 = vpack.c.b16 %v2462, %v2458
        %v2511 = vpack.c.b16 %v2463, %v2459
        %v2512 = vpack.c.b16 %v2464, %v2460
        %v2513 = vpack.c.b16 %v2465, %v2461
        %v2514 = vpack.c.b16 %v2470, %v2466
        %v2515 = vpack.c.b16 %v2471, %v2467
        %v2516 = vpack.c.b16 %v2472, %v2468
        %v2517 = vpack.c.b16 %v2473, %v2469
        %v2518 = vpack.c.b16 %v2478, %v2474
        %v2519 = vpack.c.b16 %v2479, %v2475
        %v2520 = vpack.c.b16 %v2480, %v2476
        %v2521 = vpack.c.b16 %v2481, %v2477
        %v2522 = vpack.c.b16 %v2486, %v2482
        %v2523 = vpack.c.b16 %v2487, %v2483
        %v2524 = vpack.c.b16 %v2488, %v2484
        %v2525 = vpack.c.b16 %v2489, %v2485
        %v2526 = vpack.c.b16 %v2494, %v2490
        %v2527 = vpack.c.b16 %v2495, %v2491
        %v2528 = vpack.c.b16 %v2496, %v2492
        %v2529 = vpack.c.b16 %v2497, %v2493
        %2562 = vmatprep.subr.bf16.mxu0 %v2527
        %2563 = vmatpush1.bf16.msra.mxu0 %v2526
        %2564 = vmatprep.subr.bf16.mxu0 %v2523
        %2565 = vmatpush1.bf16.msra.mxu0 %v2522
        %2566 = vmatprep.subr.bf16.mxu0 %v2519
        %2567 = vmatpush1.bf16.msra.mxu0 %v2518
        %2568 = vmatprep.subr.bf16.mxu0 %v2515
        %2569 = vmatpush1.bf16.msra.mxu0 %v2514
        %2570 = vmatprep.subr.bf16.mxu0 %v2511
        %2571 = vmatpush1.bf16.msra.mxu0 %v2510
        %2572 = vmatprep.subr.bf16.mxu0 %v2507
        %2573 = vmatpush1.bf16.msra.mxu0 %v2506
        %2574 = vmatprep.subr.bf16.mxu0 %v2503
        %2575 = vmatpush1.bf16.msra.mxu0 %v2502
        %2576 = vmatprep.subr.bf16.mxu0 %v2499
        %2577 = vmatpush1.bf16.msra.mxu0 %v2498
        %2578 = vmatprep.subr.bf16.mxu0 0
        %2579 = vmatpush2.bf16.msra.mxu0 0
        %2580 = vmatprep.subr.bf16.mxu0 0
        %2581 = vmatpush2.bf16.msra.mxu0 0
        %2582 = vmatprep.subr.bf16.mxu0 0
        %2583 = vmatpush2.bf16.msra.mxu0 0
        %2584 = vmatprep.subr.bf16.mxu0 0
        %2585 = vmatpush2.bf16.msra.mxu0 0
        %2586 = vmatprep.subr.bf16.mxu0 0
        %2587 = vmatpush2.bf16.msra.mxu0 0
        %2588 = vmatprep.subr.bf16.mxu0 0
        %2589 = vmatpush2.bf16.msra.mxu0 0
        %2590 = vmatprep.subr.bf16.mxu0 0
        %2591 = vmatpush2.bf16.msra.mxu0 0
        %2592 = vmatprep.subr.bf16.mxu0 0
        %2593 = vmatpush2.bf16.msra.mxu0 0
        %2594 = vmatprep.mubr.bf16.mxu0 0
        %2595 = vmatmul.mubr.bf16.gmra.mxu0 %v2393
        %v2596 = vpop.f32.mrf.mxu0
        %v2597 = vadd.f32 0.0, %v2596
        %v2598 = vpop.f32.mrf.mxu0
        %v2599 = vadd.f32 0.0, %v2598
        %v2600 = vpop.f32.mrf.mxu0
        %v2601 = vadd.f32 0.0, %v2600
        %v2602 = vpop.f32.mrf.mxu0
        %v2603 = vadd.f32 0.0, %v2602
        %2604 = vdwg.mxu0
        %2605 = vmatprep.subr.bf16.mxu0 %v2529
        %2606 = vmatpush1.bf16.msra.mxu0 %v2528
        %2607 = vmatprep.subr.bf16.mxu0 %v2525
        %2608 = vmatpush1.bf16.msra.mxu0 %v2524
        %2609 = vmatprep.subr.bf16.mxu0 %v2521
        %2610 = vmatpush1.bf16.msra.mxu0 %v2520
        %2611 = vmatprep.subr.bf16.mxu0 %v2517
        %2612 = vmatpush1.bf16.msra.mxu0 %v2516
        %2613 = vmatprep.subr.bf16.mxu0 %v2513
        %2614 = vmatpush1.bf16.msra.mxu0 %v2512
        %2615 = vmatprep.subr.bf16.mxu0 %v2509
        %2616 = vmatpush1.bf16.msra.mxu0 %v2508
        %2617 = vmatprep.subr.bf16.mxu0 %v2505
        %2618 = vmatpush1.bf16.msra.mxu0 %v2504
        %2619 = vmatprep.subr.bf16.mxu0 %v2501
        %2620 = vmatpush1.bf16.msra.mxu0 %v2500
        %2621 = vmatprep.subr.bf16.mxu0 0
        %2622 = vmatpush2.bf16.msra.mxu0 0
        %2623 = vmatprep.subr.bf16.mxu0 0
        %2624 = vmatpush2.bf16.msra.mxu0 0
        %2625 = vmatprep.subr.bf16.mxu0 0
        %2626 = vmatpush2.bf16.msra.mxu0 0
        %2627 = vmatprep.subr.bf16.mxu0 0
        %2628 = vmatpush2.bf16.msra.mxu0 0
        %2629 = vmatprep.subr.bf16.mxu0 0
        %2630 = vmatpush2.bf16.msra.mxu0 0
        %2631 = vmatprep.subr.bf16.mxu0 0
        %2632 = vmatpush2.bf16.msra.mxu0 0
        %2633 = vmatprep.subr.bf16.mxu0 0
        %2634 = vmatpush2.bf16.msra.mxu0 0
        %2635 = vmatprep.subr.bf16.mxu0 0
        %2636 = vmatpush2.bf16.msra.mxu0 0
        %2637 = vmatprep.mubr.bf16.mxu0 0
        %2638 = vmatmul.mubr.bf16.gmra.mxu0 %v2393
        %v2639 = vpop.f32.mrf.mxu0
        %v2640 = vadd.f32 0.0, %v2639
        %v2641 = vpop.f32.mrf.mxu0
        %v2642 = vadd.f32 0.0, %v2641
        %v2643 = vpop.f32.mrf.mxu0
        %v2644 = vadd.f32 0.0, %v2643
        %v2645 = vpop.f32.mrf.mxu0
        %v2646 = vadd.f32 0.0, %v2645
        %2647 = vdwg.mxu0
        %v2648 = vadd.f32 %v2394, %v2597
        %v2649 = vadd.f32 %v2395, %v2599
        %v2650 = vadd.f32 %v2396, %v2640
        %v2651 = vadd.f32 %v2397, %v2642
        %v2652 = vadd.f32 %v2398, %v2601
        %v2653 = vadd.f32 %v2399, %v2603
        %v2654 = vadd.f32 %v2400, %v2644
        %v2655 = vadd.f32 %v2401, %v2646
        %v2656 = vmul.f32 %v2648, 0.5
        %v2657 = vmul.f32 %v2652, 0.5
        %v2658 = vtanh.pop %v2656
        %v2659 = vtanh.pop %v2657
        %v2660 = vmul.f32 %v2658, 0.5
        %v2661 = vmul.f32 %v2659, 0.5
        %v2662 = vadd.f32 %v2660, 0.5
        %v2663 = vadd.f32 %v2661, 0.5
        %v2664 = vmul.f32 %v2649, 0.5
        %v2665 = vmul.f32 %v2653, 0.5
        %v2666 = vtanh.pop %v2664
        %v2667 = vtanh.pop %v2665
        %v2668 = vmul.f32 %v2666, 0.5
        %v2669 = vmul.f32 %v2667, 0.5
        %v2670 = vadd.f32 %v2668, 0.5
        %v2671 = vadd.f32 %v2669, 0.5
        %v2672 = vtanh.pop %v2650
        %v2673 = vtanh.pop %v2654
        %v2674 = vmul.f32 %v2651, 0.5
        %v2675 = vmul.f32 %v2655, 0.5
        %v2676 = vtanh.pop %v2674
        %v2677 = vtanh.pop %v2675
        %v2678 = vmul.f32 %v2676, 0.5
        %v2679 = vmul.f32 %v2677, 0.5
        %v2680 = vadd.f32 %v2678, 0.5
        %v2681 = vadd.f32 %v2679, 0.5
        %v2682 = vmul.f32 %v2670, %v2391
        %v2683 = vmul.f32 %v2671, %v2392
        %v2684 = vmul.f32 %v2662, %v2672
        %v2685 = vmul.f32 %v2663, %v2673
        %v2686 = vadd.f32 %v2682, %v2684
        %v2687 = vadd.f32 %v2683, %v2685
        %v2688 = vtanh.pop %v2686
        %v2689 = vtanh.pop %v2687
        %v2690 = vmul.f32 %v2680, %v2688
        %v2691 = vmul.f32 %v2681, %v2689
        %v2692 = vsel %vm1100, %v2690, %v2388
        %v2693 = vsel %vm1101, %v2691, %v2389
        %v2694 = vsel %vm1100, %v2686, %v2391
        %v2695 = vsel %vm1101, %v2687, %v2392
        %v2696 = vpack.c.bf16 %v2693, %v2692
        %v2697 = vld [vmem:[%s1433] sm:$0xff]
        %v2698 = vld [vmem:[%s1433 + $0x8] sm:$0xff]
        %v2699 = vld [vmem:[%s1433 + $0x10] sm:$0xff]
        %v2700 = vld [vmem:[%s1433 + $0x18] sm:$0xff]
        %v2701 = vld [vmem:[%s1433 + $0x20] sm:$0xff]
        %v2702 = vld [vmem:[%s1433 + $0x28] sm:$0xff]
        %v2703 = vld [vmem:[%s1433 + $0x30] sm:$0xff]
        %v2704 = vld [vmem:[%s1433 + $0x38] sm:$0xff]
        %2705 = vmatprep.subr.bf16.mxu0 %v2527
        %2706 = vmatpush1.bf16.msra.mxu0 %v2526
        %2707 = vmatprep.subr.bf16.mxu0 %v2523
        %2708 = vmatpush1.bf16.msra.mxu0 %v2522
        %2709 = vmatprep.subr.bf16.mxu0 %v2519
        %2710 = vmatpush1.bf16.msra.mxu0 %v2518
        %2711 = vmatprep.subr.bf16.mxu0 %v2515
        %2712 = vmatpush1.bf16.msra.mxu0 %v2514
        %2713 = vmatprep.subr.bf16.mxu0 %v2511
        %2714 = vmatpush1.bf16.msra.mxu0 %v2510
        %2715 = vmatprep.subr.bf16.mxu0 %v2507
        %2716 = vmatpush1.bf16.msra.mxu0 %v2506
        %2717 = vmatprep.subr.bf16.mxu0 %v2503
        %2718 = vmatpush1.bf16.msra.mxu0 %v2502
        %2719 = vmatprep.subr.bf16.mxu0 %v2499
        %2720 = vmatpush1.bf16.msra.mxu0 %v2498
        %2721 = vmatprep.subr.bf16.mxu0 0
        %2722 = vmatpush2.bf16.msra.mxu0 0
        %2723 = vmatprep.subr.bf16.mxu0 0
        %2724 = vmatpush2.bf16.msra.mxu0 0
        %2725 = vmatprep.subr.bf16.mxu0 0
        %2726 = vmatpush2.bf16.msra.mxu0 0
        %2727 = vmatprep.subr.bf16.mxu0 0
        %2728 = vmatpush2.bf16.msra.mxu0 0
        %2729 = vmatprep.subr.bf16.mxu0 0
        %2730 = vmatpush2.bf16.msra.mxu0 0
        %2731 = vmatprep.subr.bf16.mxu0 0
        %2732 = vmatpush2.bf16.msra.mxu0 0
        %2733 = vmatprep.subr.bf16.mxu0 0
        %2734 = vmatpush2.bf16.msra.mxu0 0
        %2735 = vmatprep.subr.bf16.mxu0 0
        %2736 = vmatpush2.bf16.msra.mxu0 0
        %2737 = vmatprep.mubr.bf16.mxu0 0
        %2738 = vmatmul.mubr.bf16.gmra.mxu0 %v2696
        %v2739 = vpop.f32.mrf.mxu0
        %v2740 = vadd.f32 0.0, %v2739
        %v2741 = vpop.f32.mrf.mxu0
        %v2742 = vadd.f32 0.0, %v2741
        %v2743 = vpop.f32.mrf.mxu0
        %v2744 = vadd.f32 0.0, %v2743
        %v2745 = vpop.f32.mrf.mxu0
        %v2746 = vadd.f32 0.0, %v2745
        %2747 = vdwg.mxu0
        %2748 = vmatprep.subr.bf16.mxu0 %v2529
        %2749 = vmatpush1.bf16.msra.mxu0 %v2528
        %2750 = vmatprep.subr.bf16.mxu0 %v2525
        %2751 = vmatpush1.bf16.msra.mxu0 %v2524
        %2752 = vmatprep.subr.bf16.mxu0 %v2521
        %2753 = vmatpush1.bf16.msra.mxu0 %v2520
        %2754 = vmatprep.subr.bf16.mxu0 %v2517
        %2755 = vmatpush1.bf16.msra.mxu0 %v2516
        %2756 = vmatprep.subr.bf16.mxu0 %v2513
        %2757 = vmatpush1.bf16.msra.mxu0 %v2512
        %2758 = vmatprep.subr.bf16.mxu0 %v2509
        %2759 = vmatpush1.bf16.msra.mxu0 %v2508
        %2760 = vmatprep.subr.bf16.mxu0 %v2505
        %2761 = vmatpush1.bf16.msra.mxu0 %v2504
        %2762 = vmatprep.subr.bf16.mxu0 %v2501
        %2763 = vmatpush1.bf16.msra.mxu0 %v2500
        %2764 = vmatprep.subr.bf16.mxu0 0
        %2765 = vmatpush2.bf16.msra.mxu0 0
        %2766 = vmatprep.subr.bf16.mxu0 0
        %2767 = vmatpush2.bf16.msra.mxu0 0
        %2768 = vmatprep.subr.bf16.mxu0 0
        %2769 = vmatpush2.bf16.msra.mxu0 0
        %2770 = vmatprep.subr.bf16.mxu0 0
        %2771 = vmatpush2.bf16.msra.mxu0 0
        %2772 = vmatprep.subr.bf16.mxu0 0
        %2773 = vmatpush2.bf16.msra.mxu0 0
        %2774 = vmatprep.subr.bf16.mxu0 0
        %2775 = vmatpush2.bf16.msra.mxu0 0
        %2776 = vmatprep.subr.bf16.mxu0 0
        %2777 = vmatpush2.bf16.msra.mxu0 0
        %2778 = vmatprep.subr.bf16.mxu0 0
        %2779 = vmatpush2.bf16.msra.mxu0 0
        %2780 = vmatprep.mubr.bf16.mxu0 0
        %2781 = vmatmul.mubr.bf16.gmra.mxu0 %v2696
        %v2782 = vpop.f32.mrf.mxu0
        %v2783 = vadd.f32 0.0, %v2782
        %v2784 = vpop.f32.mrf.mxu0
        %v2785 = vadd.f32 0.0, %v2784
        %v2786 = vpop.f32.mrf.mxu0
        %v2787 = vadd.f32 0.0, %v2786
        %v2788 = vpop.f32.mrf.mxu0
        %v2789 = vadd.f32 0.0, %v2788
        %2790 = vdwg.mxu0
        %v2791 = vadd.f32 %v2697, %v2740
        %v2792 = vadd.f32 %v2698, %v2742
        %v2793 = vadd.f32 %v2699, %v2783
        %v2794 = vadd.f32 %v2700, %v2785
        %v2795 = vadd.f32 %v2701, %v2744
        %v2796 = vadd.f32 %v2702, %v2746
        %v2797 = vadd.f32 %v2703, %v2787
        %v2798 = vadd.f32 %v2704, %v2789
        %v2799 = vmul.f32 %v2791, 0.5
        %v2800 = vmul.f32 %v2795, 0.5
        %v2801 = vtanh.pop %v2799
        %v2802 = vtanh.pop %v2800
        %v2803 = vmul.f32 %v2801, 0.5
        %v2804 = vmul.f32 %v2802, 0.5
        %v2805 = vadd.f32 %v2803, 0.5
        %v2806 = vadd.f32 %v2804, 0.5
        %v2807 = vmul.f32 %v2792, 0.5
        %v2808 = vmul.f32 %v2796, 0.5
        %v2809 = vtanh.pop %v2807
        %v2810 = vtanh.pop %v2808
        %v2811 = vmul.f32 %v2809, 0.5
        %v2812 = vmul.f32 %v2810, 0.5
        %v2813 = vadd.f32 %v2811, 0.5
        %v2814 = vadd.f32 %v2812, 0.5
        %v2815 = vtanh.pop %v2793
        %v2816 = vtanh.pop %v2797
        %v2817 = vmul.f32 %v2794, 0.5
        %v2818 = vmul.f32 %v2798, 0.5
        %v2819 = vtanh.pop %v2817
        %v2820 = vtanh.pop %v2818
        %v2821 = vmul.f32 %v2819, 0.5
        %v2822 = vmul.f32 %v2820, 0.5
        %v2823 = vadd.f32 %v2821, 0.5
        %v2824 = vadd.f32 %v2822, 0.5
        %v2825 = vmul.f32 %v2813, %v2694
        %v2826 = vmul.f32 %v2814, %v2695
        %v2827 = vmul.f32 %v2805, %v2815
        %v2828 = vmul.f32 %v2806, %v2816
        %v2829 = vadd.f32 %v2825, %v2827
        %v2830 = vadd.f32 %v2826, %v2828
        %v2831 = vtanh.pop %v2829
        %v2832 = vtanh.pop %v2830
        %v2833 = vmul.f32 %v2823, %v2831
        %v2834 = vmul.f32 %v2824, %v2832
        %v2835 = vsel %vm1429, %v2833, %v2692
        %v2836 = vsel %vm1430, %v2834, %v2693
        %v2837 = vsel %vm1429, %v2829, %v2694
        %v2838 = vsel %vm1430, %v2830, %v2695
        %v2839 = vpack.c.bf16 %v2836, %v2835
        %v2840 = vld [vmem:[%s1603] sm:$0xff]
        %v2841 = vld [vmem:[%s1603 + $0x8] sm:$0xff]
        %v2842 = vld [vmem:[%s1603 + $0x10] sm:$0xff]
        %v2843 = vld [vmem:[%s1603 + $0x18] sm:$0xff]
        %v2844 = vld [vmem:[%s1603 + $0x20] sm:$0xff]
        %v2845 = vld [vmem:[%s1603 + $0x28] sm:$0xff]
        %v2846 = vld [vmem:[%s1603 + $0x30] sm:$0xff]
        %v2847 = vld [vmem:[%s1603 + $0x38] sm:$0xff]
        %2848 = vmatprep.subr.bf16.mxu0 %v2527
        %2849 = vmatpush1.bf16.msra.mxu0 %v2526
        %2850 = vmatprep.subr.bf16.mxu0 %v2523
        %2851 = vmatpush1.bf16.msra.mxu0 %v2522
        %2852 = vmatprep.subr.bf16.mxu0 %v2519
        %2853 = vmatpush1.bf16.msra.mxu0 %v2518
        %2854 = vmatprep.subr.bf16.mxu0 %v2515
        %2855 = vmatpush1.bf16.msra.mxu0 %v2514
        %2856 = vmatprep.subr.bf16.mxu0 %v2511
        %2857 = vmatpush1.bf16.msra.mxu0 %v2510
        %2858 = vmatprep.subr.bf16.mxu0 %v2507
        %2859 = vmatpush1.bf16.msra.mxu0 %v2506
        %2860 = vmatprep.subr.bf16.mxu0 %v2503
        %2861 = vmatpush1.bf16.msra.mxu0 %v2502
        %2862 = vmatprep.subr.bf16.mxu0 %v2499
        %2863 = vmatpush1.bf16.msra.mxu0 %v2498
        %2864 = vmatprep.subr.bf16.mxu0 0
        %2865 = vmatpush2.bf16.msra.mxu0 0
        %2866 = vmatprep.subr.bf16.mxu0 0
        %2867 = vmatpush2.bf16.msra.mxu0 0
        %2868 = vmatprep.subr.bf16.mxu0 0
        %2869 = vmatpush2.bf16.msra.mxu0 0
        %2870 = vmatprep.subr.bf16.mxu0 0
        %2871 = vmatpush2.bf16.msra.mxu0 0
        %2872 = vmatprep.subr.bf16.mxu0 0
        %2873 = vmatpush2.bf16.msra.mxu0 0
        %2874 = vmatprep.subr.bf16.mxu0 0
        %2875 = vmatpush2.bf16.msra.mxu0 0
        %2876 = vmatprep.subr.bf16.mxu0 0
        %2877 = vmatpush2.bf16.msra.mxu0 0
        %2878 = vmatprep.subr.bf16.mxu0 0
        %2879 = vmatpush2.bf16.msra.mxu0 0
        %2880 = vmatprep.mubr.bf16.mxu0 0
        %2881 = vmatmul.mubr.bf16.gmra.mxu0 %v2839
        %v2882 = vpop.f32.mrf.mxu0
        %v2883 = vadd.f32 0.0, %v2882
        %v2884 = vpop.f32.mrf.mxu0
        %v2885 = vadd.f32 0.0, %v2884
        %v2886 = vpop.f32.mrf.mxu0
        %v2887 = vadd.f32 0.0, %v2886
        %v2888 = vpop.f32.mrf.mxu0
        %v2889 = vadd.f32 0.0, %v2888
        %2890 = vdwg.mxu0
        %2891 = vmatprep.subr.bf16.mxu0 %v2529
        %2892 = vmatpush1.bf16.msra.mxu0 %v2528
        %2893 = vmatprep.subr.bf16.mxu0 %v2525
        %2894 = vmatpush1.bf16.msra.mxu0 %v2524
        %2895 = vmatprep.subr.bf16.mxu0 %v2521
        %2896 = vmatpush1.bf16.msra.mxu0 %v2520
        %2897 = vmatprep.subr.bf16.mxu0 %v2517
        %2898 = vmatpush1.bf16.msra.mxu0 %v2516
        %2899 = vmatprep.subr.bf16.mxu0 %v2513
        %2900 = vmatpush1.bf16.msra.mxu0 %v2512
        %2901 = vmatprep.subr.bf16.mxu0 %v2509
        %2902 = vmatpush1.bf16.msra.mxu0 %v2508
        %2903 = vmatprep.subr.bf16.mxu0 %v2505
        %2904 = vmatpush1.bf16.msra.mxu0 %v2504
        %2905 = vmatprep.subr.bf16.mxu0 %v2501
        %2906 = vmatpush1.bf16.msra.mxu0 %v2500
        %2907 = vmatprep.subr.bf16.mxu0 0
        %2908 = vmatpush2.bf16.msra.mxu0 0
        %2909 = vmatprep.subr.bf16.mxu0 0
        %2910 = vmatpush2.bf16.msra.mxu0 0
        %2911 = vmatprep.subr.bf16.mxu0 0
        %2912 = vmatpush2.bf16.msra.mxu0 0
        %2913 = vmatprep.subr.bf16.mxu0 0
        %2914 = vmatpush2.bf16.msra.mxu0 0
        %2915 = vmatprep.subr.bf16.mxu0 0
        %2916 = vmatpush2.bf16.msra.mxu0 0
        %2917 = vmatprep.subr.bf16.mxu0 0
        %2918 = vmatpush2.bf16.msra.mxu0 0
        %2919 = vmatprep.subr.bf16.mxu0 0
        %2920 = vmatpush2.bf16.msra.mxu0 0
        %2921 = vmatprep.subr.bf16.mxu0 0
        %2922 = vmatpush2.bf16.msra.mxu0 0
        %2923 = vmatprep.mubr.bf16.mxu0 0
        %2924 = vmatmul.mubr.bf16.gmra.mxu0 %v2839
        %v2925 = vpop.f32.mrf.mxu0
        %v2926 = vadd.f32 0.0, %v2925
        %v2927 = vpop.f32.mrf.mxu0
        %v2928 = vadd.f32 0.0, %v2927
        %v2929 = vpop.f32.mrf.mxu0
        %v2930 = vadd.f32 0.0, %v2929
        %v2931 = vpop.f32.mrf.mxu0
        %v2932 = vadd.f32 0.0, %v2931
        %2933 = vdwg.mxu0
        %v2934 = vadd.f32 %v2840, %v2883
        %v2935 = vadd.f32 %v2841, %v2885
        %v2936 = vadd.f32 %v2842, %v2926
        %v2937 = vadd.f32 %v2843, %v2928
        %v2938 = vadd.f32 %v2844, %v2887
        %v2939 = vadd.f32 %v2845, %v2889
        %v2940 = vadd.f32 %v2846, %v2930
        %v2941 = vadd.f32 %v2847, %v2932
        %v2942 = vmul.f32 %v2934, 0.5
        %v2943 = vmul.f32 %v2938, 0.5
        %v2944 = vtanh.pop %v2942
        %v2945 = vtanh.pop %v2943
        %v2946 = vmul.f32 %v2944, 0.5
        %v2947 = vmul.f32 %v2945, 0.5
        %v2948 = vadd.f32 %v2946, 0.5
        %v2949 = vadd.f32 %v2947, 0.5
        %v2950 = vmul.f32 %v2935, 0.5
        %v2951 = vmul.f32 %v2939, 0.5
        %v2952 = vtanh.pop %v2950
        %v2953 = vtanh.pop %v2951
        %v2954 = vmul.f32 %v2952, 0.5
        %v2955 = vmul.f32 %v2953, 0.5
        %v2956 = vadd.f32 %v2954, 0.5
        %v2957 = vadd.f32 %v2955, 0.5
        %v2958 = vtanh.pop %v2936
        %v2959 = vtanh.pop %v2940
        %v2960 = vmul.f32 %v2937, 0.5
        %v2961 = vmul.f32 %v2941, 0.5
        %v2962 = vtanh.pop %v2960
        %v2963 = vtanh.pop %v2961
        %v2964 = vmul.f32 %v2962, 0.5
        %v2965 = vmul.f32 %v2963, 0.5
        %v2966 = vadd.f32 %v2964, 0.5
        %v2967 = vadd.f32 %v2965, 0.5
        %v2968 = vmul.f32 %v2956, %v2837
        %v2969 = vmul.f32 %v2957, %v2838
        %v2970 = vmul.f32 %v2948, %v2958
        %v2971 = vmul.f32 %v2949, %v2959
        %v2972 = vadd.f32 %v2968, %v2970
        %v2973 = vadd.f32 %v2969, %v2971
        %v2974 = vtanh.pop %v2972
        %v2975 = vtanh.pop %v2973
        %v2976 = vmul.f32 %v2966, %v2974
        %v2977 = vmul.f32 %v2967, %v2975
        %v2978 = vsel %vm1599, %v2976, %v2835
        %v2979 = vsel %vm1600, %v2977, %v2836
        %v2980 = vsel %vm1599, %v2972, %v2837
        %v2981 = vsel %vm1600, %v2973, %v2838
        %v2982 = vpack.c.bf16 %v2979, %v2978
        %v2983 = vld [vmem:[%s1773] sm:$0xff]
        %v2984 = vld [vmem:[%s1773 + $0x8] sm:$0xff]
        %v2985 = vld [vmem:[%s1773 + $0x10] sm:$0xff]
        %v2986 = vld [vmem:[%s1773 + $0x18] sm:$0xff]
        %v2987 = vld [vmem:[%s1773 + $0x20] sm:$0xff]
        %v2988 = vld [vmem:[%s1773 + $0x28] sm:$0xff]
        %v2989 = vld [vmem:[%s1773 + $0x30] sm:$0xff]
        %v2990 = vld [vmem:[%s1773 + $0x38] sm:$0xff]
        %2991 = vmatprep.subr.bf16.mxu0 %v2527
        %2992 = vmatpush1.bf16.msra.mxu0 %v2526
        %2993 = vmatprep.subr.bf16.mxu0 %v2523
        %2994 = vmatpush1.bf16.msra.mxu0 %v2522
        %2995 = vmatprep.subr.bf16.mxu0 %v2519
        %2996 = vmatpush1.bf16.msra.mxu0 %v2518
        %2997 = vmatprep.subr.bf16.mxu0 %v2515
        %2998 = vmatpush1.bf16.msra.mxu0 %v2514
        %2999 = vmatprep.subr.bf16.mxu0 %v2511
        %3000 = vmatpush1.bf16.msra.mxu0 %v2510
        %3001 = vmatprep.subr.bf16.mxu0 %v2507
        %3002 = vmatpush1.bf16.msra.mxu0 %v2506
        %3003 = vmatprep.subr.bf16.mxu0 %v2503
        %3004 = vmatpush1.bf16.msra.mxu0 %v2502
        %3005 = vmatprep.subr.bf16.mxu0 %v2499
        %3006 = vmatpush1.bf16.msra.mxu0 %v2498
        %3007 = vmatprep.subr.bf16.mxu0 0
        %3008 = vmatpush2.bf16.msra.mxu0 0
        %3009 = vmatprep.subr.bf16.mxu0 0
        %3010 = vmatpush2.bf16.msra.mxu0 0
        %3011 = vmatprep.subr.bf16.mxu0 0
        %3012 = vmatpush2.bf16.msra.mxu0 0
        %3013 = vmatprep.subr.bf16.mxu0 0
        %3014 = vmatpush2.bf16.msra.mxu0 0
        %3015 = vmatprep.subr.bf16.mxu0 0
        %3016 = vmatpush2.bf16.msra.mxu0 0
        %3017 = vmatprep.subr.bf16.mxu0 0
        %3018 = vmatpush2.bf16.msra.mxu0 0
        %3019 = vmatprep.subr.bf16.mxu0 0
        %3020 = vmatpush2.bf16.msra.mxu0 0
        %3021 = vmatprep.subr.bf16.mxu0 0
        %3022 = vmatpush2.bf16.msra.mxu0 0
        %3023 = vmatprep.mubr.bf16.mxu0 0
        %3024 = vmatmul.mubr.bf16.gmra.mxu0 %v2982
        %v3025 = vpop.f32.mrf.mxu0
        %v3026 = vadd.f32 0.0, %v3025
        %v3027 = vpop.f32.mrf.mxu0
        %v3028 = vadd.f32 0.0, %v3027
        %v3029 = vpop.f32.mrf.mxu0
        %v3030 = vadd.f32 0.0, %v3029
        %v3031 = vpop.f32.mrf.mxu0
        %v3032 = vadd.f32 0.0, %v3031
        %3033 = vdwg.mxu0
        %3034 = vmatprep.subr.bf16.mxu0 %v2529
        %3035 = vmatpush1.bf16.msra.mxu0 %v2528
        %3036 = vmatprep.subr.bf16.mxu0 %v2525
        %3037 = vmatpush1.bf16.msra.mxu0 %v2524
        %3038 = vmatprep.subr.bf16.mxu0 %v2521
        %3039 = vmatpush1.bf16.msra.mxu0 %v2520
        %3040 = vmatprep.subr.bf16.mxu0 %v2517
        %3041 = vmatpush1.bf16.msra.mxu0 %v2516
        %3042 = vmatprep.subr.bf16.mxu0 %v2513
        %3043 = vmatpush1.bf16.msra.mxu0 %v2512
        %3044 = vmatprep.subr.bf16.mxu0 %v2509
        %3045 = vmatpush1.bf16.msra.mxu0 %v2508
        %3046 = vmatprep.subr.bf16.mxu0 %v2505
        %3047 = vmatpush1.bf16.msra.mxu0 %v2504
        %3048 = vmatprep.subr.bf16.mxu0 %v2501
        %3049 = vmatpush1.bf16.msra.mxu0 %v2500
        %3050 = vmatprep.subr.bf16.mxu0 0
        %3051 = vmatpush2.bf16.msra.mxu0 0
        %3052 = vmatprep.subr.bf16.mxu0 0
        %3053 = vmatpush2.bf16.msra.mxu0 0
        %3054 = vmatprep.subr.bf16.mxu0 0
        %3055 = vmatpush2.bf16.msra.mxu0 0
        %3056 = vmatprep.subr.bf16.mxu0 0
        %3057 = vmatpush2.bf16.msra.mxu0 0
        %3058 = vmatprep.subr.bf16.mxu0 0
        %3059 = vmatpush2.bf16.msra.mxu0 0
        %3060 = vmatprep.subr.bf16.mxu0 0
        %3061 = vmatpush2.bf16.msra.mxu0 0
        %3062 = vmatprep.subr.bf16.mxu0 0
        %3063 = vmatpush2.bf16.msra.mxu0 0
        %3064 = vmatprep.subr.bf16.mxu0 0
        %3065 = vmatpush2.bf16.msra.mxu0 0
        %3066 = vmatprep.mubr.bf16.mxu0 0
        %3067 = vmatmul.mubr.bf16.gmra.mxu0 %v2982
        %v3068 = vpop.f32.mrf.mxu0
        %v3069 = vadd.f32 0.0, %v3068
        %v3070 = vpop.f32.mrf.mxu0
        %v3071 = vadd.f32 0.0, %v3070
        %v3072 = vpop.f32.mrf.mxu0
        %v3073 = vadd.f32 0.0, %v3072
        %v3074 = vpop.f32.mrf.mxu0
        %v3075 = vadd.f32 0.0, %v3074
        %3076 = vdwg.mxu0
        %v3077 = vadd.f32 %v2983, %v3026
        %v3078 = vadd.f32 %v2984, %v3028
        %v3079 = vadd.f32 %v2985, %v3069
        %v3080 = vadd.f32 %v2986, %v3071
        %v3081 = vadd.f32 %v2987, %v3030
        %v3082 = vadd.f32 %v2988, %v3032
        %v3083 = vadd.f32 %v2989, %v3073
        %v3084 = vadd.f32 %v2990, %v3075
        %v3085 = vmul.f32 %v3077, 0.5
        %v3086 = vmul.f32 %v3081, 0.5
        %v3087 = vtanh.pop %v3085
        %v3088 = vtanh.pop %v3086
        %v3089 = vmul.f32 %v3087, 0.5
        %v3090 = vmul.f32 %v3088, 0.5
        %v3091 = vadd.f32 %v3089, 0.5
        %v3092 = vadd.f32 %v3090, 0.5
        %v3093 = vmul.f32 %v3078, 0.5
        %v3094 = vmul.f32 %v3082, 0.5
        %v3095 = vtanh.pop %v3093
        %v3096 = vtanh.pop %v3094
        %v3097 = vmul.f32 %v3095, 0.5
        %v3098 = vmul.f32 %v3096, 0.5
        %v3099 = vadd.f32 %v3097, 0.5
        %v3100 = vadd.f32 %v3098, 0.5
        %v3101 = vtanh.pop %v3079
        %v3102 = vtanh.pop %v3083
        %v3103 = vmul.f32 %v3080, 0.5
        %v3104 = vmul.f32 %v3084, 0.5
        %v3105 = vtanh.pop %v3103
        %v3106 = vtanh.pop %v3104
        %v3107 = vmul.f32 %v3105, 0.5
        %v3108 = vmul.f32 %v3106, 0.5
        %v3109 = vadd.f32 %v3107, 0.5
        %v3110 = vadd.f32 %v3108, 0.5
        %v3111 = vmul.f32 %v3099, %v2980
        %v3112 = vmul.f32 %v3100, %v2981
        %v3113 = vmul.f32 %v3091, %v3101
        %v3114 = vmul.f32 %v3092, %v3102
        %v3115 = vadd.f32 %v3111, %v3113
        %v3116 = vadd.f32 %v3112, %v3114
        %v3117 = vtanh.pop %v3115
        %v3118 = vtanh.pop %v3116
        %v3119 = vmul.f32 %v3109, %v3117
        %v3120 = vmul.f32 %v3110, %v3118
        %v3121 = vsel %vm1769, %v3119, %v2978
        %v3122 = vsel %vm1770, %v3120, %v2979
        %v3123 = vsel %vm1769, %v3115, %v2980
        %v3124 = vsel %vm1770, %v3116, %v2981
        %3125 = vst [vmem:[%s2387] sm:$0xff] %v3121
        %3126 = vst [vmem:[%s2387 + $0x8] sm:$0xff] %v3122
        %3127 = vst [vmem:[%s2390] sm:$0xff] %v3123
        %3128 = vst [vmem:[%s2390 + $0x8] sm:$0xff] %v3124
      $region76: #{lstm_forward.1} parent=67 // pred_fallthru
        _
      %p3129 = scmp.eq.s32.totalorder %s35, 1
      // Predicated region
      $region77: #{lstm_forward.1} parent=67 // pred_check
        %p3130 = pneg %p3129
      $region78: #{lstm_forward.1} parent=67 // pred_check_branch
        %3132 = sbr.rel (%p3130) target = $region80
      $region79: #{lstm_forward.1} parent=67 // pred_region
        %s3133 = scalar_lea.vmem %s585, 16
        %v3134 = vld [vmem:[%s3133] sm:$0xff]
        %v3135 = vld [vmem:[%s3133 + $0x8] sm:$0xff]
        %v3136 = vpack.c.bf16 %v3135, %v3134
        %v3137 = vld [vmem:[%s11] sm:$0xf]
        %v3138 = vld [vmem:[%s11 + $0x4] sm:$0xf]
        %v3139 = vld [vmem:[%s11 + $0x8] sm:$0xf]
        %v3140 = vld [vmem:[%s11 + $0xc] sm:$0xf]
        %v3141 = vld [vmem:[%s11 + $0x10] sm:$0xf]
        %v3142 = vld [vmem:[%s11 + $0x14] sm:$0xf]
        %v3143 = vld [vmem:[%s11 + $0x18] sm:$0xf]
        %v3144 = vld [vmem:[%s11 + $0x1c] sm:$0xf]
        %v3145 = vld [vmem:[%s11 + $0x20] sm:$0xf]
        %v3146 = vld [vmem:[%s11 + $0x24] sm:$0xf]
        %v3147 = vld [vmem:[%s11 + $0x28] sm:$0xf]
        %v3148 = vld [vmem:[%s11 + $0x2c] sm:$0xf]
        %v3149 = vld [vmem:[%s11 + $0x30] sm:$0xf]
        %v3150 = vld [vmem:[%s11 + $0x34] sm:$0xf]
        %v3151 = vld [vmem:[%s11 + $0x38] sm:$0xf]
        %v3152 = vld [vmem:[%s11 + $0x3c] sm:$0xf]
        %v3153 = vld [vmem:[#allocation6] sm:$0x1]
        %v3155 = vlaneseq
        %v3156 = vshrl.u32 %v3155, 7
        %v3157 = vsub.s32 0, %v3156
        %v3158 = vrot.slane %v3153, %v3157
        %v3176 = vunpack.c.l.b16 %v3137
        %v3177 = vunpack.c.l.b16 %v3138
        %v3178 = vunpack.c.l.b16 %v3139
        %v3179 = vunpack.c.l.b16 %v3140
        %v3180 = vunpack.c.l.b16 %v3141
        %v3181 = vunpack.c.l.b16 %v3142
        %v3182 = vunpack.c.l.b16 %v3143
        %v3183 = vunpack.c.l.b16 %v3144
        %v3184 = vunpack.c.l.b16 %v3145
        %v3185 = vunpack.c.l.b16 %v3146
        %v3186 = vunpack.c.l.b16 %v3147
        %v3187 = vunpack.c.l.b16 %v3148
        %v3188 = vunpack.c.l.b16 %v3149
        %v3189 = vunpack.c.l.b16 %v3150
        %v3190 = vunpack.c.l.b16 %v3151
        %v3191 = vunpack.c.l.b16 %v3152
        %v3192 = vpack.c.b16 %v3177, %v3176
        %v3193 = vpack.c.b16 %v3179, %v3178
        %v3194 = vpack.c.b16 %v3181, %v3180
        %v3195 = vpack.c.b16 %v3183, %v3182
        %v3196 = vpack.c.b16 %v3185, %v3184
        %v3197 = vpack.c.b16 %v3187, %v3186
        %v3198 = vpack.c.b16 %v3189, %v3188
        %v3199 = vpack.c.b16 %v3191, %v3190
        %3208 = vmatprep.subr.bf16.mxu0 0
        %3209 = vmatpush1.bf16.msra.mxu0 %v3199
        %3210 = vmatprep.subr.bf16.mxu0 0
        %3211 = vmatpush1.bf16.msra.mxu0 %v3198
        %3212 = vmatprep.subr.bf16.mxu0 0
        %3213 = vmatpush1.bf16.msra.mxu0 %v3197
        %3214 = vmatprep.subr.bf16.mxu0 0
        %3215 = vmatpush1.bf16.msra.mxu0 %v3196
        %3216 = vmatprep.subr.bf16.mxu0 0
        %3217 = vmatpush1.bf16.msra.mxu0 %v3195
        %3218 = vmatprep.subr.bf16.mxu0 0
        %3219 = vmatpush1.bf16.msra.mxu0 %v3194
        %3220 = vmatprep.subr.bf16.mxu0 0
        %3221 = vmatpush1.bf16.msra.mxu0 %v3193
        %3222 = vmatprep.subr.bf16.mxu0 0
        %3223 = vmatpush1.bf16.msra.mxu0 %v3192
        %3224 = vmatprep.subr.bf16.mxu0 0
        %3225 = vmatpush2.bf16.msra.mxu0 0
        %3226 = vmatprep.subr.bf16.mxu0 0
        %3227 = vmatpush2.bf16.msra.mxu0 0
        %3228 = vmatprep.subr.bf16.mxu0 0
        %3229 = vmatpush2.bf16.msra.mxu0 0
        %3230 = vmatprep.subr.bf16.mxu0 0
        %3231 = vmatpush2.bf16.msra.mxu0 0
        %3232 = vmatprep.subr.bf16.mxu0 0
        %3233 = vmatpush2.bf16.msra.mxu0 0
        %3234 = vmatprep.subr.bf16.mxu0 0
        %3235 = vmatpush2.bf16.msra.mxu0 0
        %3236 = vmatprep.subr.bf16.mxu0 0
        %3237 = vmatpush2.bf16.msra.mxu0 0
        %3238 = vmatprep.subr.bf16.mxu0 0
        %3239 = vmatpush2.bf16.msra.mxu0 0
        %3240 = vmatprep.mubr.bf16.mxu0 0
        %3241 = vmatmul.mubr.bf16.gmra.mxu0 %v3136
        %v3242 = vpop.f32.mrf.mxu0
        %v3243 = vadd.f32 %v3158, %v3242
        %v3244 = vpop.f32.mrf.mxu0
        %v3245 = vpop.f32.mrf.mxu0
        %v3246 = vadd.f32 %v3158, %v3245
        %v3247 = vpop.f32.mrf.mxu0
        %3248 = vdwg.mxu0
        %v3249 = vmul.f32 %v3243, 0.5
        %v3250 = vmul.f32 %v3246, 0.5
        %v3251 = vtanh.pop %v3249
        %v3252 = vtanh.pop %v3250
        %v3253 = vmul.f32 %v3251, 0.5
        %v3254 = vmul.f32 %v3252, 0.5
        %v3255 = vadd.f32 %v3253, 0.5
        %v3256 = vadd.f32 %v3254, 0.5
        %vm3257 = vcmask 7168
        %3258 = vst.msk [vmem:[%s597] sm:$0xff] %vm3257, %v3255
        %3259 = vst.msk [vmem:[%s597 + $0x8] sm:$0xff] %vm3257, %v3256
      $region80: #{lstm_forward.1} parent=67 // pred_fallthru
        _
      %s3260 = smul.u32 2, %s34
      %p3261 = scmp.lt.s32.totalorder %s3260, 1
      %s3262 = scalar_select %p3261, %s3260, 1
      %s3263 = smul.addr %s3262, 8
      %s3264 = scalar_lea.vmem %s13, %s3263
      %s3265 = smul.u32 2, %s34
      %p3266 = scmp.lt.s32.totalorder %s3265, 1
      %s3267 = scalar_select %p3266, %s3265, 1
      %s3268 = smul.addr %s3267, 8
      %s3269 = scalar_lea.vmem %s14, %s3268
      %s3270 = smul.u32 2, %s34
      %p3271 = scmp.lt.s32.totalorder %s3270, 1
      %s3272 = scalar_select %p3271, %s3270, 1
      %s3273 = smul.addr %s3272, 8
      %s3274 = scalar_lea.vmem %s15, %s3273
      // Predicated region
      $region81: #{lstm_forward.1} parent=67 // pred_check
        %p3275 = pneg %p334
      $region82: #{lstm_forward.1} parent=67 // pred_check_branch
        %3277 = sbr.rel (%p3275) target = $region84
      $region83: #{lstm_forward.1} parent=67 // pred_region
        %s3278 = smul.u32 2, %s34
      $region84: #{lstm_forward.1} parent=67 // pred_fallthru
        _
      // Predicated region
      $region85: #{lstm_forward.1} parent=67 // pred_check
        %p3279 = pneg %p360
      $region86: #{lstm_forward.1} parent=67 // pred_check_branch
        %3281 = sbr.rel (%p3279) target = $region88
      $region87: #{lstm_forward.1} parent=67 // pred_region
        %s3282 = smul.u32 2, %s34
      $region88: #{lstm_forward.1} parent=67 // pred_fallthru
        _
      // Predicated region
      $region89: #{lstm_forward.1} parent=67 // pred_check
        %p3283 = pneg %p386
      $region90: #{lstm_forward.1} parent=67 // pred_check_branch
        %3285 = sbr.rel (%p3283) target = $region92
      $region91: #{lstm_forward.1} parent=67 // pred_region
        %s3286 = smul.u32 2, %s34
      $region92: #{lstm_forward.1} parent=67 // pred_fallthru
        _
      // Predicated region
      $region93: #{lstm_forward.1} parent=67 // pred_check
        %p3287 = pneg %p334
      $region94: #{lstm_forward.1} parent=67 // pred_check_branch
        %3289 = sbr.rel (%p3287) target = $region96
      $region95: #{lstm_forward.1} parent=67 // pred_region
        %s3290 = smul.u32 2, %s34
        %p3291 = scmp.lt.s32.totalorder %s3290, 1
        %s3292 = scalar_select %p3291, %s3290, 1
        %s3293 = smul.addr %s3292, 8
        %s3294 = scalar_lea.vmem %s13, %s3293
      $region96: #{lstm_forward.1} parent=67 // pred_fallthru
        _
      // Predicated region
      $region97: #{lstm_forward.1} parent=67 // pred_check
        %p3295 = pneg %p360
      $region98: #{lstm_forward.1} parent=67 // pred_check_branch
        %3297 = sbr.rel (%p3295) target = $region100
      $region99: #{lstm_forward.1} parent=67 // pred_region
        %s3298 = smul.u32 2, %s34
        %p3299 = scmp.lt.s32.totalorder %s3298, 1
        %s3300 = scalar_select %p3299, %s3298, 1
        %s3301 = smul.addr %s3300, 8
        %s3302 = scalar_lea.vmem %s14, %s3301
      $region100: #{lstm_forward.1} parent=67 // pred_fallthru
        _
      // Predicated region
      $region101: #{lstm_forward.1} parent=67 // pred_check
        %p3303 = pneg %p386
      $region102: #{lstm_forward.1} parent=67 // pred_check_branch
        %3305 = sbr.rel (%p3303) target = $region104
      $region103: #{lstm_forward.1} parent=67 // pred_region
        %s3306 = smul.u32 2, %s34
        %p3307 = scmp.lt.s32.totalorder %s3306, 1
        %s3308 = scalar_select %p3307, %s3306, 1
        %s3309 = smul.addr %s3308, 8
        %s3310 = scalar_lea.vmem %s15, %s3309
      $region104: #{lstm_forward.1} parent=67 // pred_fallthru
        _
    $region68: #{lstm_forward.1} parent=5 // pred_fallthru
      _
    %p3311 = scmp.le.s32.totalorder 2, %s25
    // Predicated region
    $region105: #{lstm_forward.1} parent=5 // pred_check
      %p3312 = pneg %p3311
    $region106: #{lstm_forward.1} parent=5 // pred_check_branch
      %3314 = sbr.rel (%p3312) target = $region108
    $region107: #{lstm_forward.1} parent=5 // pred_region
      %s3315 = ssub.s32 %s25, 2
    $region108: #{lstm_forward.1} parent=5 // pred_fallthru
      _
  $region6: #{lstm_forward.1} parent=0 // loop_footer
    %s29 = sadd.s32 1, %s25
  $region7: #{lstm_forward.1} parent=0 // loop_footer_branch
    %24 = sbr.rel target = $region3
  $region8: #{lstm_forward.1} parent=0 // loop_exit
    _

</llo_original>
